<compile_context>
chip_gen: v6e
topology: v6e:2x2x1
jax: 0.10.0
libtpu: 0.0.40
codegen_flags: <defaults>
</compile_context>

<pallas_src>
import jax
import jax.numpy as jnp
from jax import lax
from jax.experimental import pallas as pl
from jax.experimental.pallas import tpu as pltpu

# ------------------------------------------------------------------
# Config (the `args` of PhaseUPDeT2)
# ------------------------------------------------------------------
B = 2                  # batch (number of agents)
TOKEN_DIM = 16         # args.token_dim
EMB = 32               # args.emb
HEADS = 2              # args.heads
DEPTH = 2              # args.depth
PHASE_NUM = 4          # args.phase_num
PHASE_HIDDEN = 16      # args.phase_hidden
TEMPERATURE = 1.0      # args.temperature
DIVIDE_Q = True        # args.divide_Q
TASK_ENEMY_NUM = 3
TASK_ALLY_NUM = 2
N_ENTITY_TOKENS = 1 + TASK_ENEMY_NUM + TASK_ALLY_NUM   # 6 observation tokens
T = N_ENTITY_TOKENS + 1                                # + appended hidden token
FF_HIDDEN = 4 * EMB
HE = HEADS * EMB
LN_EPS = 1e-5
N_Q = 6 + TASK_ENEMY_NUM                               # q_self(6) + one q per enemy
XAUG_W = TOKEN_DIM + 1 + EMB                           # [obs | 1 | hidden] augmented row


def _r8(n):
    return (n + 7) // 8 * 8


# ------------------------------------------------------------------
# Packed-parameter slab layouts (static row offsets; weights pre-transposed
# to [in_features, out_features] so the kernel always computes x @ W)
# ------------------------------------------------------------------
# Slab A: lane width 3*HE = 192  (fused QKV per block + FF1 per block)
_PA_W = 3 * HE
_FF1_OFF = DEPTH * EMB                 # 64
_FF1_BLK = _r8(EMB + 1)                # 40 rows per block (ff1_w 32 rows + ff1_b 1 row)
PA_ROWS = _FF1_OFF + DEPTH * _FF1_BLK  # 144

# Slab B: lane width EMB = 32  (everything <= 32 lanes wide)
_UNI_OFF = 0                           # per-block: HEADS x (EMB, EMB) unify weights
_FF2_OFF = HE                          # per-block: (FF_HIDDEN, EMB) ff2 weight
_VEC_OFF = HE + FF_HIDDEN              # per-block: 6 rows [uni_b, g1, b1, ff2_b, g2, b2]
_BLK_ROWS = _r8(_VEC_OFF + 6)          # 200
_EMBW_OFF = DEPTH * _BLK_ROWS          # 400: augmented token embedding [tok_w; tok_b; I]
_TOPW_OFF = _r8(_EMBW_OFF + XAUG_W)    # 456: toprobs weight
_TOPB_OFF = _TOPW_OFF + EMB            # 488: toprobs bias
_QSF_OFF = _r8(_TOPB_OFF + 1)          # 496: q_self feature weight (32, 6)
_QSS_OFF = _QSF_OFF + EMB              # 528: q_self skill weight   (4, 6)
_QSB_OFF = _QSS_OFF + PHASE_NUM        # 532: q_self bias
_QIF_OFF = _QSB_OFF + 1                # 533: q_interaction feature row (1, 32)
_QIS_OFF = _QIF_OFF + 1                # 534: q_interaction skill row   (1, 4)
_QIB_OFF = _QIS_OFF + 1                # 535: q_interaction bias
_P1F_OFF = _r8(_QIB_OFF + 1)           # 536: GumbelMLP fc1 feature weight (32, 16)
_P1P_OFF = _P1F_OFF + EMB              # 568: GumbelMLP fc1 phase weight   (4, 16)
_P1B_OFF = _P1P_OFF + PHASE_NUM        # 572: GumbelMLP fc1 bias
_P2W_OFF = _P1B_OFF + 1                # 573: GumbelMLP fc2 weight (16, 4)
_P2B_OFF = _P2W_OFF + PHASE_HIDDEN     # 589: GumbelMLP fc2 bias
PB_ROWS = _r8(_P2B_OFF + 1)            # 592

# Single lane-dense output slab per batch row: [h | q | skill | dist | zero pad]
OUT_W = 128
_H_OFF = 0
_Q_OFF = EMB                           # 32
_SK_OFF = _Q_OFF + N_Q                 # 41
_DS_OFF = _SK_OFF + PHASE_NUM          # 45
_OUT_USED = _DS_OFF + PHASE_NUM        # 49


# ------------------------------------------------------------------
# Kernel
# ------------------------------------------------------------------
def _phase_updet2_kernel(xaug_ref, aux_ref, pa_ref, pb_ref, out_ref):
    f32 = jnp.float32

    def mm(a, w):
        return jnp.dot(a, w, preferred_element_type=f32)

    def layernorm(v, g, beta):
        mu = jnp.mean(v, axis=-1, keepdims=True)
        vc = v - mu
        var = jnp.mean(vc * vc, axis=-1, keepdims=True)
        return vc * lax.rsqrt(var + LN_EPS) * g + beta

    def softmax_last(z, approx):
        m = jnp.max(z, axis=-1, keepdims=True)
        ez = jnp.exp(z - m)
        s = jnp.sum(ez, axis=-1, keepdims=True)
        if approx:
            return ez * pl.reciprocal(s, approx=True)   # EUP slot, ~free
        return ez / s

    aux = aux_ref[...]                                   # (B, 2*PHASE_NUM)
    phase = aux[:, :PHASE_NUM]
    gexp = aux[:, PHASE_NUM:]

    # ---- token embedding + appended hidden token as ONE augmented matmul:
    # [obs | 1 | 0] @ [tok_w; tok_b; I] = embed(obs);  [0 | 0 | hid] @ ... = hid
    w_emb = pb_ref[_EMBW_OFF:_EMBW_OFF + XAUG_W, :]      # (49, EMB)
    x2d = mm(xaug_ref[...], w_emb)                       # (B*T, EMB) residual stream

    for d in range(DEPTH):                               # static unroll over blocks
        base = d * _BLK_ROWS
        wqkv_d = pa_ref[d * EMB:(d + 1) * EMB, :]        # (EMB, 3*HE), scale in Q cols
        r = _FF1_OFF + d * _FF1_BLK
        ff1_blk = pa_ref[r:r + EMB + 1, :]               # (33, 192)
        ff1_w = ff1_blk[:EMB, :FF_HIDDEN]                # (EMB, FF_HIDDEN)
        ff1_b = ff1_blk[EMB:, :FF_HIDDEN]                # (1, FF_HIDDEN)
        ff2_w = pb_ref[base + _FF2_OFF:base + _FF2_OFF + FF_HIDDEN, :]   # (128, EMB)
        vec = pb_ref[base + _VEC_OFF:base + _VEC_OFF + 6, :]             # (6, EMB)

        qkv = mm(x2d, wqkv_d)                            # fused Q/K/V projection
        attended = vec[0:1]                              # unifyheads bias (broadcast)
        for hh in range(HEADS):
            q_h = qkv[:, hh * EMB:(hh + 1) * EMB].reshape(B, T, EMB)
            k_h = qkv[:, HE + hh * EMB:HE + (hh + 1) * EMB].reshape(B, T, EMB)
            v_h = qkv[:, 2 * HE + hh * EMB:2 * HE + (hh + 1) * EMB].reshape(B, T, EMB)
            dot = jnp.einsum('bte,bse->bts', q_h, k_h,
                             preferred_element_type=f32)                 # (B, T, T)
            att = softmax_last(dot, approx=True)                         # over keys
            o_h = jnp.einsum('bts,bse->bte', att, v_h,
                             preferred_element_type=f32)
            uni_h = pb_ref[base + _UNI_OFF + hh * EMB:
                           base + _UNI_OFF + (hh + 1) * EMB, :]          # (EMB, EMB)
            # per-head unify accumulation instead of lane concat + one big matmul
            attended = attended + mm(o_h.reshape(B * T, EMB), uni_h)
        y = layernorm(attended + x2d, vec[1:2], vec[2:3])                # norm1
        ff = mm(jnp.maximum(mm(y, ff1_w) + ff1_b, 0.0), ff2_w) + vec[3:4]
        x2d = layernorm(ff + y, vec[4:5], vec[5:6])                      # norm2

    toprobs_w = pb_ref[_TOPW_OFF:_TOPW_OFF + EMB, :]
    toprobs_b = pb_ref[_TOPB_OFF:_TOPB_OFF + 1, :]
    outputs = (mm(x2d, toprobs_w) + toprobs_b).reshape(B, T, EMB)

    # ---- PhaseUPDeT2 heads ----
    h_tok = outputs[:, T - 1, :]                         # h = outputs[:, -1, :]  (B, EMB)

    # GumbelMLP (skill_one_hot) on cat(h, phase): split-weight form, no concat
    w1f = pb_ref[_P1F_OFF:_P1F_OFF + EMB, :][:, :PHASE_HIDDEN]
    w1p = pb_ref[_P1P_OFF:_P1P_OFF + PHASE_NUM, :][:, :PHASE_HIDDEN]
    b1 = pb_ref[_P1B_OFF:_P1B_OFF + 1, :][:, :PHASE_HIDDEN]
    w2 = pb_ref[_P2W_OFF:_P2W_OFF + PHASE_HIDDEN, :][:, :PHASE_NUM]
    b2 = pb_ref[_P2B_OFF:_P2B_OFF + 1, :][:, :PHASE_NUM]
    hdn = jnp.maximum(mm(h_tok, w1f) + mm(phase, w1p) + b1, 0.0)
    logits = mm(hdn, w2) + b2                            # (B, PHASE_NUM)
    # Exp(1) samples -> Gumbel(0,1) noise; clamp so -log never produces inf/NaN
    gumbels = -jnp.log(jnp.maximum(gexp, 1e-30))
    skill = softmax_last((logits + gumbels) * (1.0 / TEMPERATURE), approx=False)

    # dist_skill = eye(P)[argmax(skill)]  (first max index on ties, like torch.max)
    iota = lax.broadcasted_iota(jnp.int32, (B, PHASE_NUM), 1)
    mx = jnp.max(skill, axis=-1, keepdims=True)
    first = jnp.min(jnp.where(skill >= mx, iota, PHASE_NUM), axis=-1, keepdims=True)
    dist = (iota == first).astype(f32)

    # q_self on cat(outputs[:, 0, :], skill): split-weight form
    wsf = pb_ref[_QSF_OFF:_QSF_OFF + EMB, :][:, :6]
    wss = pb_ref[_QSS_OFF:_QSS_OFF + PHASE_NUM, :][:, :6]
    bs = pb_ref[_QSB_OFF:_QSB_OFF + 1, :][:, :6]
    q_basic = mm(outputs[:, 0, :], wsf) + mm(skill, wss) + bs            # (B, 6)

    # q_interaction (divide_Q=True): width-1 head as VPU broadcast-multiply + reduce
    wif = pb_ref[_QIF_OFF:_QIF_OFF + 1, :]                               # (1, EMB)
    wis = pb_ref[_QIS_OFF:_QIS_OFF + 1, :][:, :PHASE_NUM]                # (1, PHASE_NUM)
    bi = pb_ref[_QIB_OFF:_QIB_OFF + 1, :][:, :1]                         # (1, 1)
    enemy = outputs[:, 1:1 + TASK_ENEMY_NUM, :]                          # (B, NE, EMB)
    q_en = (jnp.sum(enemy * wif.reshape(1, 1, EMB), axis=-1)
            + jnp.sum(skill * wis, axis=-1, keepdims=True)
            + bi)                                                        # (B, NE)

    # ---- single lane-dense output slab, one store, one writeback DMA ----
    q = jnp.concatenate([q_basic, q_en], axis=-1)                        # (B, N_Q)
    pad = jnp.zeros((B, OUT_W - _OUT_USED), f32)
    out_ref[...] = jnp.concatenate([h_tok, q, skill, dist, pad], axis=-1)


# ------------------------------------------------------------------
# Parameters (deterministic init, packed host-side into 2 slabs) and wrapper
# ------------------------------------------------------------------
def make_params(key):
    ks = jax.random.split(key, 12)

    def w(k, shape):
        return 0.1 * jax.random.normal(k, shape, jnp.float32)

    # raw per-block projection weights, fused host-side; torch scales q and k each by
    # emb**-0.25 -> total 1/sqrt(emb), baked into the Q columns
    wq = w(ks[0], (DEPTH, EMB, HE))
    wk = w(ks[1], (DEPTH, EMB, HE))
    wv = w(ks[2], (DEPTH, EMB, HE))
    wqkv = jnp.concatenate([wq * (EMB ** -0.5), wk, wv], axis=-1)        # (D, EMB, 3*HE)

    tok_w = w(ks[3], (TOKEN_DIM, EMB))
    tok_b = jnp.zeros((1, EMB), jnp.float32)
    uni_w = w(ks[4], (DEPTH, HE, EMB))
    ff1_w = w(ks[5], (DEPTH, EMB, FF_HIDDEN))
    ff1_b = jnp.zeros((DEPTH, 1, FF_HIDDEN), jnp.float32)
    ff2_w = w(ks[6], (DEPTH, FF_HIDDEN, EMB))
    toprobs_w = w(ks[7], (EMB, EMB))
    toprobs_b = jnp.zeros((1, EMB), jnp.float32)
    qself_w = w(ks[8], (EMB + PHASE_NUM, 6))
    qself_b = jnp.zeros((1, 6), jnp.float32)
    qint_w = w(ks[9], (1, EMB + PHASE_NUM))
    qint_b = jnp.zeros((1, 1), jnp.float32)
    pfc1_w = w(ks[10], (EMB + PHASE_NUM, PHASE_HIDDEN))
    pfc1_b = jnp.zeros((1, PHASE_HIDDEN), jnp.float32)
    pfc2_w = w(ks[11], (PHASE_HIDDEN, PHASE_NUM))
    pfc2_b = jnp.zeros((1, PHASE_NUM), jnp.float32)

    ones_e = jnp.ones((EMB,), jnp.float32)
    zeros_e = jnp.zeros((EMB,), jnp.float32)
    # per-block vectors: [uni_b, ln1_gamma, ln1_beta, ff2_b, ln2_gamma, ln2_beta]
    blk_vec = jnp.stack([zeros_e, ones_e, zeros_e, zeros_e, ones_e, zeros_e])

    # ---- slab A (lane 192): fused QKV + FF1 ----
    pa = jnp.zeros((PA_ROWS, _PA_W), jnp.float32)
    for d in range(DEPTH):
        pa = pa.at[d * EMB:(d + 1) * EMB, :].set(wqkv[d])
        r = _FF1_OFF + d * _FF1_BLK
        pa = pa.at[r:r + EMB, :FF_HIDDEN].set(ff1_w[d])
        pa = pa.at[r + EMB:r + EMB + 1, :FF_HIDDEN].set(ff1_b[d])

    # ---- slab B (lane 32): everything else ----
    pb = jnp.zeros((PB_ROWS, EMB), jnp.float32)
    for d in range(DEPTH):
        base = d * _BLK_ROWS
        for hh in range(HEADS):
            pb = pb.at[base + _UNI_OFF + hh * EMB:
                       base + _UNI_OFF + (hh + 1) * EMB, :].set(
                           uni_w[d, hh * EMB:(hh + 1) * EMB, :])
        pb = pb.at[base + _FF2_OFF:base + _FF2_OFF + FF_HIDDEN, :].set(ff2_w[d])
        pb = pb.at[base + _VEC_OFF:base + _VEC_OFF + 6, :].set(blk_vec)
    # augmented token-embedding matrix: [tok_w ; tok_b ; I]
    w_aug = jnp.concatenate([tok_w, tok_b, jnp.eye(EMB, dtype=jnp.float32)], axis=0)
    pb = pb.at[_EMBW_OFF:_EMBW_OFF + XAUG_W, :].set(w_aug)
    pb = pb.at[_TOPW_OFF:_TOPW_OFF + EMB, :].set(toprobs_w)
    pb = pb.at[_TOPB_OFF:_TOPB_OFF + 1, :].set(toprobs_b)
    pb = pb.at[_QSF_OFF:_QSF_OFF + EMB, :6].set(qself_w[:EMB])
    pb = pb.at[_QSS_OFF:_QSS_OFF + PHASE_NUM, :6].set(qself_w[EMB:])
    pb = pb.at[_QSB_OFF:_QSB_OFF + 1, :6].set(qself_b)
    pb = pb.at[_QIF_OFF:_QIF_OFF + 1, :].set(qint_w[:, :EMB])
    pb = pb.at[_QIS_OFF:_QIS_OFF + 1, :PHASE_NUM].set(qint_w[:, EMB:])
    pb = pb.at[_QIB_OFF:_QIB_OFF + 1, :1].set(qint_b)
    pb = pb.at[_P1F_OFF:_P1F_OFF + EMB, :PHASE_HIDDEN].set(pfc1_w[:EMB])
    pb = pb.at[_P1P_OFF:_P1P_OFF + PHASE_NUM, :PHASE_HIDDEN].set(pfc1_w[EMB:])
    pb = pb.at[_P1B_OFF:_P1B_OFF + 1, :PHASE_HIDDEN].set(pfc1_b)
    pb = pb.at[_P2W_OFF:_P2W_OFF + PHASE_HIDDEN, :PHASE_NUM].set(pfc2_w)
    pb = pb.at[_P2B_OFF:_P2B_OFF + 1, :PHASE_NUM].set(pfc2_b)

    return {"pA": pa, "pB": pb}


def phase_updet2_forward(inputs, hidden_state, phase_state, gumbel_exp, params):
    f32 = jnp.float32
    # Augmented token rows (layout plumbing only, no compute hoisted):
    #   observation rows: [obs | 1 | 0_EMB]   hidden row: [0_TOKEN_DIM | 0 | hidden]
    obs = jnp.concatenate(
        [inputs.astype(f32),
         jnp.ones((B, N_ENTITY_TOKENS, 1), f32),
         jnp.zeros((B, N_ENTITY_TOKENS, EMB), f32)], axis=-1)
    hid = jnp.concatenate(
        [jnp.zeros((B, 1, TOKEN_DIM + 1), f32),
         hidden_state.reshape(B, 1, EMB).astype(f32)], axis=-1)
    xaug = jnp.concatenate([obs, hid], axis=1).reshape(B * T, XAUG_W)
    aux = jnp.concatenate([phase_state.reshape(B, PHASE_NUM).astype(f32),
                           gumbel_exp.reshape(B, PHASE_NUM).astype(f32)], axis=-1)

    vmem = pl.BlockSpec(memory_space=pltpu.MemorySpace.VMEM)
    out = pl.pallas_call(
        _phase_updet2_kernel,
        out_shape=jax.ShapeDtypeStruct((B, OUT_W), jnp.float32),
        in_specs=[vmem, vmem, vmem, vmem],
        out_specs=vmem,
    )(xaug, aux, params["pA"], params["pB"])

    h = out[:, _H_OFF:_H_OFF + EMB].reshape(B, 1, EMB)
    q = out[:, _Q_OFF:_Q_OFF + N_Q]
    skill = out[:, _SK_OFF:_SK_OFF + PHASE_NUM]
    dist_skill = out[:, _DS_OFF:_DS_OFF + PHASE_NUM]
    return q, h, dist_skill, skill


if __name__ == "__main__":
    key = jax.random.PRNGKey(0)
    k_param, k_in, k_g = jax.random.split(key, 3)
    params = make_params(k_param)

    # inputs: (B, 1 + enemies + allies, token_dim) observation tokens
    inputs = jax.random.normal(k_in, (B, N_ENTITY_TOKENS, TOKEN_DIM), jnp.float32)
    # hidden_state: init_hidden() -> zeros(1, emb), batched
    hidden_state = jnp.zeros((B, 1, EMB), jnp.float32)
    # phase_state: init_phase() -> one-hot on phase 0, batched
    phase_state = jnp.zeros((B, 1, PHASE_NUM), jnp.float32).at[:, 0, 0].set(1.0)
    # Exp(1) samples for Gumbel noise (glue: RNG done in JAX, consumed in-kernel)
    gumbel_exp = jax.random.exponential(k_g, (B, PHASE_NUM), dtype=jnp.float32)

    q, h, dist_skill, skill = phase_updet2_forward(inputs, hidden_state, phase_state,
                                                   gumbel_exp, params)
    jax.block_until_ready((q, h, dist_skill, skill))

    assert q.shape == (B, N_Q)
    assert h.shape == (B, 1, EMB)
    assert dist_skill.shape == (B, PHASE_NUM)
    assert skill.shape == (B, PHASE_NUM)
    assert bool(jnp.all(jnp.isfinite(q))) and bool(jnp.all(jnp.isfinite(h)))
    assert bool(jnp.allclose(jnp.sum(skill, axis=-1), 1.0, atol=1e-5))
    assert bool(jnp.allclose(jnp.sum(dist_skill, axis=-1), 1.0, atol=1e-6))
    print("KERNEL_OK")
</pallas_src>

<mosaic_0001>
module attributes {stable_mosaic.version = 11 : i64} {
  func.func @_phase_updet2_kernel(%arg0: memref<14x49xf32, #tpu.memory_space<vmem>>, %arg1: memref<2x8xf32, #tpu.memory_space<vmem>>, %arg2: memref<144x192xf32, #tpu.memory_space<vmem>>, %arg3: memref<592x32xf32, #tpu.memory_space<vmem>>, %arg4: memref<2x128xf32, #tpu.memory_space<vmem>>) attributes {dimension_semantics = [], scalar_prefetch = 0 : i64, scratch_operands = 0 : i64, tpu.core_type = #tpu.core_type<tc>} {
    %c0 = arith.constant 0 : index
    %c0_0 = arith.constant 0 : index
    %0 = vector.load %arg1[%c0, %c0_0] : memref<2x8xf32, #tpu.memory_space<vmem>>, vector<2x8xf32>
    %1 = vector.extract_strided_slice %0 {offsets = [0, 0], sizes = [2, 4], strides = [1, 1]} : vector<2x8xf32> to vector<2x4xf32>
    %2 = vector.extract_strided_slice %0 {offsets = [0, 4], sizes = [2, 4], strides = [1, 1]} : vector<2x8xf32> to vector<2x4xf32>
    %c400 = arith.constant 400 : index
    %c0_1 = arith.constant 0 : index
    %3 = vector.load %arg3[%c400, %c0_1] : memref<592x32xf32, #tpu.memory_space<vmem>>, vector<49x32xf32>
    %c0_2 = arith.constant 0 : index
    %c0_3 = arith.constant 0 : index
    %4 = vector.load %arg0[%c0_2, %c0_3] : memref<14x49xf32, #tpu.memory_space<vmem>>, vector<14x49xf32>
    %cst = arith.constant dense<0.000000e+00> : vector<14x32xf32>
    %5 = tpu.matmul %4, %3, %cst {dimension_numbers = #tpu.dot_dimension_numbers<[1], [0], [0], [1], [0, 0, 1, 1], [], []>} : vector<14x49xf32>, vector<49x32xf32>, vector<14x32xf32> -> vector<14x32xf32>
    %c0_4 = arith.constant 0 : index
    %c0_5 = arith.constant 0 : index
    %6 = vector.load %arg2[%c0_4, %c0_5] : memref<144x192xf32, #tpu.memory_space<vmem>>, vector<32x192xf32>
    %c64 = arith.constant 64 : index
    %c0_6 = arith.constant 0 : index
    %7 = vector.load %arg2[%c64, %c0_6] : memref<144x192xf32, #tpu.memory_space<vmem>>, vector<33x192xf32>
    %8 = vector.extract_strided_slice %7 {offsets = [0, 0], sizes = [32, 128], strides = [1, 1]} : vector<33x192xf32> to vector<32x128xf32>
    %9 = vector.extract_strided_slice %7 {offsets = [32, 0], sizes = [1, 128], strides = [1, 1]} : vector<33x192xf32> to vector<1x128xf32>
    %c64_7 = arith.constant 64 : index
    %c0_8 = arith.constant 0 : index
    %10 = vector.load %arg3[%c64_7, %c0_8] : memref<592x32xf32, #tpu.memory_space<vmem>>, vector<128x32xf32>
    %c192 = arith.constant 192 : index
    %c0_9 = arith.constant 0 : index
    %11 = vector.load %arg3[%c192, %c0_9] : memref<592x32xf32, #tpu.memory_space<vmem>>, vector<6x32xf32>
    %cst_10 = arith.constant dense<0.000000e+00> : vector<14x192xf32>
    %12 = tpu.matmul %5, %6, %cst_10 {dimension_numbers = #tpu.dot_dimension_numbers<[1], [0], [0], [1], [0, 0, 1, 1], [], []>} : vector<14x32xf32>, vector<32x192xf32>, vector<14x192xf32> -> vector<14x192xf32>
    %13 = vector.extract_strided_slice %11 {offsets = [0, 0], sizes = [1, 32], strides = [1, 1]} : vector<6x32xf32> to vector<1x32xf32>
    %14 = vector.extract_strided_slice %12 {offsets = [0, 0], sizes = [14, 32], strides = [1, 1]} : vector<14x192xf32> to vector<14x32xf32>
    %15 = vector.shape_cast %14 : vector<14x32xf32> to vector<2x7x32xf32>
    %16 = vector.extract_strided_slice %12 {offsets = [0, 64], sizes = [14, 32], strides = [1, 1]} : vector<14x192xf32> to vector<14x32xf32>
    %17 = vector.shape_cast %16 : vector<14x32xf32> to vector<2x7x32xf32>
    %18 = vector.extract_strided_slice %12 {offsets = [0, 128], sizes = [14, 32], strides = [1, 1]} : vector<14x192xf32> to vector<14x32xf32>
    %19 = vector.shape_cast %18 : vector<14x32xf32> to vector<2x7x32xf32>
    "tpu.trace_start"() <{level = 10 : i32, message = "bte,bse->bts"}> : () -> ()
    %cst_11 = arith.constant dense<0.000000e+00> : vector<2x7x7xf32>
    %20 = tpu.matmul %15, %17, %cst_11 {dimension_numbers = #tpu.dot_dimension_numbers<[2], [2], [1], [1], [0, 0, 0, 1, 1, 1], [0], [0]>} : vector<2x7x32xf32>, vector<2x7x32xf32>, vector<2x7x7xf32> -> vector<2x7x7xf32>
    "tpu.trace_stop"() : () -> ()
    %cst_12 = arith.constant dense<0xFF800000> : vector<2x7xf32>
    %21 = vector.multi_reduction <maximumf>, %20, %cst_12 [2] : vector<2x7x7xf32> to vector<2x7xf32>
    %22 = vector.shape_cast %21 : vector<2x7xf32> to vector<2x7x1xf32>
    %23 = vector.broadcast %22 : vector<2x7x1xf32> to vector<2x7x7xf32>
    %24 = arith.subf %20, %23 : vector<2x7x7xf32>
    %25 = math.exp %24 : vector<2x7x7xf32>
    %cst_13 = arith.constant dense<0.000000e+00> : vector<2x7xf32>
    %26 = vector.multi_reduction <add>, %25, %cst_13 [2] : vector<2x7x7xf32> to vector<2x7xf32>
    %27 = vector.shape_cast %26 : vector<2x7xf32> to vector<2x7x1xf32>
    %28 = tpu.reciprocal %27 {approx = true} : vector<2x7x1xf32> -> vector<2x7x1xf32>
    %29 = vector.broadcast %28 : vector<2x7x1xf32> to vector<2x7x7xf32>
    %30 = arith.mulf %25, %29 : vector<2x7x7xf32>
    "tpu.trace_start"() <{level = 10 : i32, message = "bts,bse->bte"}> : () -> ()
    %cst_14 = arith.constant dense<0.000000e+00> : vector<2x7x32xf32>
    %31 = tpu.matmul %30, %19, %cst_14 {dimension_numbers = #tpu.dot_dimension_numbers<[2], [1], [1], [2], [0, 0, 0, 1, 1, 2], [0], [0]>} : vector<2x7x7xf32>, vector<2x7x32xf32>, vector<2x7x32xf32> -> vector<2x7x32xf32>
    "tpu.trace_stop"() : () -> ()
    %c0_15 = arith.constant 0 : index
    %c0_16 = arith.constant 0 : index
    %32 = vector.load %arg3[%c0_15, %c0_16] : memref<592x32xf32, #tpu.memory_space<vmem>>, vector<32x32xf32>
    %33 = vector.shape_cast %31 : vector<2x7x32xf32> to vector<14x32xf32>
    %cst_17 = arith.constant dense<0.000000e+00> : vector<14x32xf32>
    %34 = tpu.matmul %33, %32, %cst_17 {dimension_numbers = #tpu.dot_dimension_numbers<[1], [0], [0], [1], [0, 0, 1, 1], [], []>} : vector<14x32xf32>, vector<32x32xf32>, vector<14x32xf32> -> vector<14x32xf32>
    %35 = vector.broadcast %13 : vector<1x32xf32> to vector<14x32xf32>
    %36 = arith.addf %35, %34 : vector<14x32xf32>
    %37 = vector.extract_strided_slice %12 {offsets = [0, 32], sizes = [14, 32], strides = [1, 1]} : vector<14x192xf32> to vector<14x32xf32>
    %38 = vector.shape_cast %37 : vector<14x32xf32> to vector<2x7x32xf32>
    %39 = vector.extract_strided_slice %12 {offsets = [0, 96], sizes = [14, 32], strides = [1, 1]} : vector<14x192xf32> to vector<14x32xf32>
    %40 = vector.shape_cast %39 : vector<14x32xf32> to vector<2x7x32xf32>
    %41 = vector.extract_strided_slice %12 {offsets = [0, 160], sizes = [14, 32], strides = [1, 1]} : vector<14x192xf32> to vector<14x32xf32>
    %42 = vector.shape_cast %41 : vector<14x32xf32> to vector<2x7x32xf32>
    "tpu.trace_start"() <{level = 10 : i32, message = "bte,bse->bts"}> : () -> ()
    %cst_18 = arith.constant dense<0.000000e+00> : vector<2x7x7xf32>
    %43 = tpu.matmul %38, %40, %cst_18 {dimension_numbers = #tpu.dot_dimension_numbers<[2], [2], [1], [1], [0, 0, 0, 1, 1, 1], [0], [0]>} : vector<2x7x32xf32>, vector<2x7x32xf32>, vector<2x7x7xf32> -> vector<2x7x7xf32>
    "tpu.trace_stop"() : () -> ()
    %cst_19 = arith.constant dense<0xFF800000> : vector<2x7xf32>
    %44 = vector.multi_reduction <maximumf>, %43, %cst_19 [2] : vector<2x7x7xf32> to vector<2x7xf32>
    %45 = vector.shape_cast %44 : vector<2x7xf32> to vector<2x7x1xf32>
    %46 = vector.broadcast %45 : vector<2x7x1xf32> to vector<2x7x7xf32>
    %47 = arith.subf %43, %46 : vector<2x7x7xf32>
    %48 = math.exp %47 : vector<2x7x7xf32>
    %cst_20 = arith.constant dense<0.000000e+00> : vector<2x7xf32>
    %49 = vector.multi_reduction <add>, %48, %cst_20 [2] : vector<2x7x7xf32> to vector<2x7xf32>
    %50 = vector.shape_cast %49 : vector<2x7xf32> to vector<2x7x1xf32>
    %51 = tpu.reciprocal %50 {approx = true} : vector<2x7x1xf32> -> vector<2x7x1xf32>
    %52 = vector.broadcast %51 : vector<2x7x1xf32> to vector<2x7x7xf32>
    %53 = arith.mulf %48, %52 : vector<2x7x7xf32>
    "tpu.trace_start"() <{level = 10 : i32, message = "bts,bse->bte"}> : () -> ()
    %cst_21 = arith.constant dense<0.000000e+00> : vector<2x7x32xf32>
    %54 = tpu.matmul %53, %42, %cst_21 {dimension_numbers = #tpu.dot_dimension_numbers<[2], [1], [1], [2], [0, 0, 0, 1, 1, 2], [0], [0]>} : vector<2x7x7xf32>, vector<2x7x32xf32>, vector<2x7x32xf32> -> vector<2x7x32xf32>
    "tpu.trace_stop"() : () -> ()
    %c32 = arith.constant 32 : index
    %c0_22 = arith.constant 0 : index
    %55 = vector.load %arg3[%c32, %c0_22] : memref<592x32xf32, #tpu.memory_space<vmem>>, vector<32x32xf32>
    %56 = vector.shape_cast %54 : vector<2x7x32xf32> to vector<14x32xf32>
    %cst_23 = arith.constant dense<0.000000e+00> : vector<14x32xf32>
    %57 = tpu.matmul %56, %55, %cst_23 {dimension_numbers = #tpu.dot_dimension_numbers<[1], [0], [0], [1], [0, 0, 1, 1], [], []>} : vector<14x32xf32>, vector<32x32xf32>, vector<14x32xf32> -> vector<14x32xf32>
    %58 = arith.addf %36, %57 : vector<14x32xf32>
    %59 = arith.addf %58, %5 : vector<14x32xf32>
    %60 = vector.extract_strided_slice %11 {offsets = [1, 0], sizes = [1, 32], strides = [1, 1]} : vector<6x32xf32> to vector<1x32xf32>
    %61 = vector.extract_strided_slice %11 {offsets = [2, 0], sizes = [1, 32], strides = [1, 1]} : vector<6x32xf32> to vector<1x32xf32>
    %cst_24 = arith.constant dense<0.000000e+00> : vector<14xf32>
    %62 = vector.multi_reduction <add>, %59, %cst_24 [1] : vector<14x32xf32> to vector<14xf32>
    %63 = vector.shape_cast %62 : vector<14xf32> to vector<14x1xf32>
    %cst_25 = arith.constant 3.200000e+01 : f32
    %64 = vector.broadcast %cst_25 : f32 to vector<14x1xf32>
    %65 = arith.divf %63, %64 : vector<14x1xf32>
    %66 = vector.broadcast %65 : vector<14x1xf32> to vector<14x32xf32>
    %67 = arith.subf %59, %66 : vector<14x32xf32>
    %68 = arith.mulf %67, %67 : vector<14x32xf32>
    %cst_26 = arith.constant dense<0.000000e+00> : vector<14xf32>
    %69 = vector.multi_reduction <add>, %68, %cst_26 [1] : vector<14x32xf32> to vector<14xf32>
    %70 = vector.shape_cast %69 : vector<14xf32> to vector<14x1xf32>
    %cst_27 = arith.constant 3.200000e+01 : f32
    %71 = vector.broadcast %cst_27 : f32 to vector<14x1xf32>
    %72 = arith.divf %70, %71 : vector<14x1xf32>
    %cst_28 = arith.constant 9.99999974E-6 : f32
    %73 = vector.broadcast %cst_28 : f32 to vector<14x1xf32>
    %74 = arith.addf %72, %73 : vector<14x1xf32>
    %75 = math.rsqrt %74 : vector<14x1xf32>
    %76 = vector.broadcast %75 : vector<14x1xf32> to vector<14x32xf32>
    %77 = arith.mulf %67, %76 : vector<14x32xf32>
    %78 = vector.broadcast %60 : vector<1x32xf32> to vector<14x32xf32>
    %79 = arith.mulf %77, %78 : vector<14x32xf32>
    %80 = vector.broadcast %61 : vector<1x32xf32> to vector<14x32xf32>
    %81 = arith.addf %79, %80 : vector<14x32xf32>
    %cst_29 = arith.constant dense<0.000000e+00> : vector<14x128xf32>
    %82 = tpu.matmul %81, %8, %cst_29 {dimension_numbers = #tpu.dot_dimension_numbers<[1], [0], [0], [1], [0, 0, 1, 1], [], []>} : vector<14x32xf32>, vector<32x128xf32>, vector<14x128xf32> -> vector<14x128xf32>
    %83 = vector.broadcast %9 : vector<1x128xf32> to vector<14x128xf32>
    %84 = arith.addf %82, %83 : vector<14x128xf32>
    %cst_30 = arith.constant 0.000000e+00 : f32
    %85 = vector.broadcast %cst_30 : f32 to vector<14x128xf32>
    %86 = arith.maximumf %84, %85 : vector<14x128xf32>
    %cst_31 = arith.constant dense<0.000000e+00> : vector<14x32xf32>
    %87 = tpu.matmul %86, %10, %cst_31 {dimension_numbers = #tpu.dot_dimension_numbers<[1], [0], [0], [1], [0, 0, 1, 1], [], []>} : vector<14x128xf32>, vector<128x32xf32>, vector<14x32xf32> -> vector<14x32xf32>
    %88 = vector.extract_strided_slice %11 {offsets = [3, 0], sizes = [1, 32], strides = [1, 1]} : vector<6x32xf32> to vector<1x32xf32>
    %89 = vector.broadcast %88 : vector<1x32xf32> to vector<14x32xf32>
    %90 = arith.addf %87, %89 : vector<14x32xf32>
    %91 = arith.addf %90, %81 : vector<14x32xf32>
    %92 = vector.extract_strided_slice %11 {offsets = [4, 0], sizes = [1, 32], strides = [1, 1]} : vector<6x32xf32> to vector<1x32xf32>
    %93 = vector.extract_strided_slice %11 {offsets = [5, 0], sizes = [1, 32], strides = [1, 1]} : vector<6x32xf32> to vector<1x32xf32>
    %cst_32 = arith.constant dense<0.000000e+00> : vector<14xf32>
    %94 = vector.multi_reduction <add>, %91, %cst_32 [1] : vector<14x32xf32> to vector<14xf32>
    %95 = vector.shape_cast %94 : vector<14xf32> to vector<14x1xf32>
    %cst_33 = arith.constant 3.200000e+01 : f32
    %96 = vector.broadcast %cst_33 : f32 to vector<14x1xf32>
    %97 = arith.divf %95, %96 : vector<14x1xf32>
    %98 = vector.broadcast %97 : vector<14x1xf32> to vector<14x32xf32>
    %99 = arith.subf %91, %98 : vector<14x32xf32>
    %100 = arith.mulf %99, %99 : vector<14x32xf32>
    %cst_34 = arith.constant dense<0.000000e+00> : vector<14xf32>
    %101 = vector.multi_reduction <add>, %100, %cst_34 [1] : vector<14x32xf32> to vector<14xf32>
    %102 = vector.shape_cast %101 : vector<14xf32> to vector<14x1xf32>
    %cst_35 = arith.constant 3.200000e+01 : f32
    %103 = vector.broadcast %cst_35 : f32 to vector<14x1xf32>
    %104 = arith.divf %102, %103 : vector<14x1xf32>
    %cst_36 = arith.constant 9.99999974E-6 : f32
    %105 = vector.broadcast %cst_36 : f32 to vector<14x1xf32>
    %106 = arith.addf %104, %105 : vector<14x1xf32>
    %107 = math.rsqrt %106 : vector<14x1xf32>
    %108 = vector.broadcast %107 : vector<14x1xf32> to vector<14x32xf32>
    %109 = arith.mulf %99, %108 : vector<14x32xf32>
    %110 = vector.broadcast %92 : vector<1x32xf32> to vector<14x32xf32>
    %111 = arith.mulf %109, %110 : vector<14x32xf32>
    %112 = vector.broadcast %93 : vector<1x32xf32> to vector<14x32xf32>
    %113 = arith.addf %111, %112 : vector<14x32xf32>
    %c32_37 = arith.constant 32 : index
    %c0_38 = arith.constant 0 : index
    %114 = vector.load %arg2[%c32_37, %c0_38] : memref<144x192xf32, #tpu.memory_space<vmem>>, vector<32x192xf32>
    %c104 = arith.constant 104 : index
    %c0_39 = arith.constant 0 : index
    %115 = vector.load %arg2[%c104, %c0_39] : memref<144x192xf32, #tpu.memory_space<vmem>>, vector<33x192xf32>
    %116 = vector.extract_strided_slice %115 {offsets = [0, 0], sizes = [32, 128], strides = [1, 1]} : vector<33x192xf32> to vector<32x128xf32>
    %117 = vector.extract_strided_slice %115 {offsets = [32, 0], sizes = [1, 128], strides = [1, 1]} : vector<33x192xf32> to vector<1x128xf32>
    %c264 = arith.constant 264 : index
    %c0_40 = arith.constant 0 : index
    %118 = vector.load %arg3[%c264, %c0_40] : memref<592x32xf32, #tpu.memory_space<vmem>>, vector<128x32xf32>
    %c392 = arith.constant 392 : index
    %c0_41 = arith.constant 0 : index
    %119 = vector.load %arg3[%c392, %c0_41] : memref<592x32xf32, #tpu.memory_space<vmem>>, vector<6x32xf32>
    %cst_42 = arith.constant dense<0.000000e+00> : vector<14x192xf32>
    %120 = tpu.matmul %113, %114, %cst_42 {dimension_numbers = #tpu.dot_dimension_numbers<[1], [0], [0], [1], [0, 0, 1, 1], [], []>} : vector<14x32xf32>, vector<32x192xf32>, vector<14x192xf32> -> vector<14x192xf32>
    %121 = vector.extract_strided_slice %119 {offsets = [0, 0], sizes = [1, 32], strides = [1, 1]} : vector<6x32xf32> to vector<1x32xf32>
    %122 = vector.extract_strided_slice %120 {offsets = [0, 0], sizes = [14, 32], strides = [1, 1]} : vector<14x192xf32> to vector<14x32xf32>
    %123 = vector.shape_cast %122 : vector<14x32xf32> to vector<2x7x32xf32>
    %124 = vector.extract_strided_slice %120 {offsets = [0, 64], sizes = [14, 32], strides = [1, 1]} : vector<14x192xf32> to vector<14x32xf32>
    %125 = vector.shape_cast %124 : vector<14x32xf32> to vector<2x7x32xf32>
    %126 = vector.extract_strided_slice %120 {offsets = [0, 128], sizes = [14, 32], strides = [1, 1]} : vector<14x192xf32> to vector<14x32xf32>
    %127 = vector.shape_cast %126 : vector<14x32xf32> to vector<2x7x32xf32>
    "tpu.trace_start"() <{level = 10 : i32, message = "bte,bse->bts"}> : () -> ()
    %cst_43 = arith.constant dense<0.000000e+00> : vector<2x7x7xf32>
    %128 = tpu.matmul %123, %125, %cst_43 {dimension_numbers = #tpu.dot_dimension_numbers<[2], [2], [1], [1], [0, 0, 0, 1, 1, 1], [0], [0]>} : vector<2x7x32xf32>, vector<2x7x32xf32>, vector<2x7x7xf32> -> vector<2x7x7xf32>
    "tpu.trace_stop"() : () -> ()
    %cst_44 = arith.constant dense<0xFF800000> : vector<2x7xf32>
    %129 = vector.multi_reduction <maximumf>, %128, %cst_44 [2] : vector<2x7x7xf32> to vector<2x7xf32>
    %130 = vector.shape_cast %129 : vector<2x7xf32> to vector<2x7x1xf32>
    %131 = vector.broadcast %130 : vector<2x7x1xf32> to vector<2x7x7xf32>
    %132 = arith.subf %128, %131 : vector<2x7x7xf32>
    %133 = math.exp %132 : vector<2x7x7xf32>
    %cst_45 = arith.constant dense<0.000000e+00> : vector<2x7xf32>
    %134 = vector.multi_reduction <add>, %133, %cst_45 [2] : vector<2x7x7xf32> to vector<2x7xf32>
    %135 = vector.shape_cast %134 : vector<2x7xf32> to vector<2x7x1xf32>
    %136 = tpu.reciprocal %135 {approx = true} : vector<2x7x1xf32> -> vector<2x7x1xf32>
    %137 = vector.broadcast %136 : vector<2x7x1xf32> to vector<2x7x7xf32>
    %138 = arith.mulf %133, %137 : vector<2x7x7xf32>
    "tpu.trace_start"() <{level = 10 : i32, message = "bts,bse->bte"}> : () -> ()
    %cst_46 = arith.constant dense<0.000000e+00> : vector<2x7x32xf32>
    %139 = tpu.matmul %138, %127, %cst_46 {dimension_numbers = #tpu.dot_dimension_numbers<[2], [1], [1], [2], [0, 0, 0, 1, 1, 2], [0], [0]>} : vector<2x7x7xf32>, vector<2x7x32xf32>, vector<2x7x32xf32> -> vector<2x7x32xf32>
    "tpu.trace_stop"() : () -> ()
    %c200 = arith.constant 200 : index
    %c0_47 = arith.constant 0 : index
    %140 = vector.load %arg3[%c200, %c0_47] : memref<592x32xf32, #tpu.memory_space<vmem>>, vector<32x32xf32>
    %141 = vector.shape_cast %139 : vector<2x7x32xf32> to vector<14x32xf32>
    %cst_48 = arith.constant dense<0.000000e+00> : vector<14x32xf32>
    %142 = tpu.matmul %141, %140, %cst_48 {dimension_numbers = #tpu.dot_dimension_numbers<[1], [0], [0], [1], [0, 0, 1, 1], [], []>} : vector<14x32xf32>, vector<32x32xf32>, vector<14x32xf32> -> vector<14x32xf32>
    %143 = vector.broadcast %121 : vector<1x32xf32> to vector<14x32xf32>
    %144 = arith.addf %143, %142 : vector<14x32xf32>
    %145 = vector.extract_strided_slice %120 {offsets = [0, 32], sizes = [14, 32], strides = [1, 1]} : vector<14x192xf32> to vector<14x32xf32>
    %146 = vector.shape_cast %145 : vector<14x32xf32> to vector<2x7x32xf32>
    %147 = vector.extract_strided_slice %120 {offsets = [0, 96], sizes = [14, 32], strides = [1, 1]} : vector<14x192xf32> to vector<14x32xf32>
    %148 = vector.shape_cast %147 : vector<14x32xf32> to vector<2x7x32xf32>
    %149 = vector.extract_strided_slice %120 {offsets = [0, 160], sizes = [14, 32], strides = [1, 1]} : vector<14x192xf32> to vector<14x32xf32>
    %150 = vector.shape_cast %149 : vector<14x32xf32> to vector<2x7x32xf32>
    "tpu.trace_start"() <{level = 10 : i32, message = "bte,bse->bts"}> : () -> ()
    %cst_49 = arith.constant dense<0.000000e+00> : vector<2x7x7xf32>
    %151 = tpu.matmul %146, %148, %cst_49 {dimension_numbers = #tpu.dot_dimension_numbers<[2], [2], [1], [1], [0, 0, 0, 1, 1, 1], [0], [0]>} : vector<2x7x32xf32>, vector<2x7x32xf32>, vector<2x7x7xf32> -> vector<2x7x7xf32>
    "tpu.trace_stop"() : () -> ()
    %cst_50 = arith.constant dense<0xFF800000> : vector<2x7xf32>
    %152 = vector.multi_reduction <maximumf>, %151, %cst_50 [2] : vector<2x7x7xf32> to vector<2x7xf32>
    %153 = vector.shape_cast %152 : vector<2x7xf32> to vector<2x7x1xf32>
    %154 = vector.broadcast %153 : vector<2x7x1xf32> to vector<2x7x7xf32>
    %155 = arith.subf %151, %154 : vector<2x7x7xf32>
    %156 = math.exp %155 : vector<2x7x7xf32>
    %cst_51 = arith.constant dense<0.000000e+00> : vector<2x7xf32>
    %157 = vector.multi_reduction <add>, %156, %cst_51 [2] : vector<2x7x7xf32> to vector<2x7xf32>
    %158 = vector.shape_cast %157 : vector<2x7xf32> to vector<2x7x1xf32>
    %159 = tpu.reciprocal %158 {approx = true} : vector<2x7x1xf32> -> vector<2x7x1xf32>
    %160 = vector.broadcast %159 : vector<2x7x1xf32> to vector<2x7x7xf32>
    %161 = arith.mulf %156, %160 : vector<2x7x7xf32>
    "tpu.trace_start"() <{level = 10 : i32, message = "bts,bse->bte"}> : () -> ()
    %cst_52 = arith.constant dense<0.000000e+00> : vector<2x7x32xf32>
    %162 = tpu.matmul %161, %150, %cst_52 {dimension_numbers = #tpu.dot_dimension_numbers<[2], [1], [1], [2], [0, 0, 0, 1, 1, 2], [0], [0]>} : vector<2x7x7xf32>, vector<2x7x32xf32>, vector<2x7x32xf32> -> vector<2x7x32xf32>
    "tpu.trace_stop"() : () -> ()
    %c232 = arith.constant 232 : index
    %c0_53 = arith.constant 0 : index
    %163 = vector.load %arg3[%c232, %c0_53] : memref<592x32xf32, #tpu.memory_space<vmem>>, vector<32x32xf32>
    %164 = vector.shape_cast %162 : vector<2x7x32xf32> to vector<14x32xf32>
    %cst_54 = arith.constant dense<0.000000e+00> : vector<14x32xf32>
    %165 = tpu.matmul %164, %163, %cst_54 {dimension_numbers = #tpu.dot_dimension_numbers<[1], [0], [0], [1], [0, 0, 1, 1], [], []>} : vector<14x32xf32>, vector<32x32xf32>, vector<14x32xf32> -> vector<14x32xf32>
    %166 = arith.addf %144, %165 : vector<14x32xf32>
    %167 = arith.addf %166, %113 : vector<14x32xf32>
    %168 = vector.extract_strided_slice %119 {offsets = [1, 0], sizes = [1, 32], strides = [1, 1]} : vector<6x32xf32> to vector<1x32xf32>
    %169 = vector.extract_strided_slice %119 {offsets = [2, 0], sizes = [1, 32], strides = [1, 1]} : vector<6x32xf32> to vector<1x32xf32>
    %cst_55 = arith.constant dense<0.000000e+00> : vector<14xf32>
    %170 = vector.multi_reduction <add>, %167, %cst_55 [1] : vector<14x32xf32> to vector<14xf32>
    %171 = vector.shape_cast %170 : vector<14xf32> to vector<14x1xf32>
    %cst_56 = arith.constant 3.200000e+01 : f32
    %172 = vector.broadcast %cst_56 : f32 to vector<14x1xf32>
    %173 = arith.divf %171, %172 : vector<14x1xf32>
    %174 = vector.broadcast %173 : vector<14x1xf32> to vector<14x32xf32>
    %175 = arith.subf %167, %174 : vector<14x32xf32>
    %176 = arith.mulf %175, %175 : vector<14x32xf32>
    %cst_57 = arith.constant dense<0.000000e+00> : vector<14xf32>
    %177 = vector.multi_reduction <add>, %176, %cst_57 [1] : vector<14x32xf32> to vector<14xf32>
    %178 = vector.shape_cast %177 : vector<14xf32> to vector<14x1xf32>
    %cst_58 = arith.constant 3.200000e+01 : f32
    %179 = vector.broadcast %cst_58 : f32 to vector<14x1xf32>
    %180 = arith.divf %178, %179 : vector<14x1xf32>
    %cst_59 = arith.constant 9.99999974E-6 : f32
    %181 = vector.broadcast %cst_59 : f32 to vector<14x1xf32>
    %182 = arith.addf %180, %181 : vector<14x1xf32>
    %183 = math.rsqrt %182 : vector<14x1xf32>
    %184 = vector.broadcast %183 : vector<14x1xf32> to vector<14x32xf32>
    %185 = arith.mulf %175, %184 : vector<14x32xf32>
    %186 = vector.broadcast %168 : vector<1x32xf32> to vector<14x32xf32>
    %187 = arith.mulf %185, %186 : vector<14x32xf32>
    %188 = vector.broadcast %169 : vector<1x32xf32> to vector<14x32xf32>
    %189 = arith.addf %187, %188 : vector<14x32xf32>
    %cst_60 = arith.constant dense<0.000000e+00> : vector<14x128xf32>
    %190 = tpu.matmul %189, %116, %cst_60 {dimension_numbers = #tpu.dot_dimension_numbers<[1], [0], [0], [1], [0, 0, 1, 1], [], []>} : vector<14x32xf32>, vector<32x128xf32>, vector<14x128xf32> -> vector<14x128xf32>
    %191 = vector.broadcast %117 : vector<1x128xf32> to vector<14x128xf32>
    %192 = arith.addf %190, %191 : vector<14x128xf32>
    %cst_61 = arith.constant 0.000000e+00 : f32
    %193 = vector.broadcast %cst_61 : f32 to vector<14x128xf32>
    %194 = arith.maximumf %192, %193 : vector<14x128xf32>
    %cst_62 = arith.constant dense<0.000000e+00> : vector<14x32xf32>
    %195 = tpu.matmul %194, %118, %cst_62 {dimension_numbers = #tpu.dot_dimension_numbers<[1], [0], [0], [1], [0, 0, 1, 1], [], []>} : vector<14x128xf32>, vector<128x32xf32>, vector<14x32xf32> -> vector<14x32xf32>
    %196 = vector.extract_strided_slice %119 {offsets = [3, 0], sizes = [1, 32], strides = [1, 1]} : vector<6x32xf32> to vector<1x32xf32>
    %197 = vector.broadcast %196 : vector<1x32xf32> to vector<14x32xf32>
    %198 = arith.addf %195, %197 : vector<14x32xf32>
    %199 = arith.addf %198, %189 : vector<14x32xf32>
    %200 = vector.extract_strided_slice %119 {offsets = [4, 0], sizes = [1, 32], strides = [1, 1]} : vector<6x32xf32> to vector<1x32xf32>
    %201 = vector.extract_strided_slice %119 {offsets = [5, 0], sizes = [1, 32], strides = [1, 1]} : vector<6x32xf32> to vector<1x32xf32>
    %cst_63 = arith.constant dense<0.000000e+00> : vector<14xf32>
    %202 = vector.multi_reduction <add>, %199, %cst_63 [1] : vector<14x32xf32> to vector<14xf32>
    %203 = vector.shape_cast %202 : vector<14xf32> to vector<14x1xf32>
    %cst_64 = arith.constant 3.200000e+01 : f32
    %204 = vector.broadcast %cst_64 : f32 to vector<14x1xf32>
    %205 = arith.divf %203, %204 : vector<14x1xf32>
    %206 = vector.broadcast %205 : vector<14x1xf32> to vector<14x32xf32>
    %207 = arith.subf %199, %206 : vector<14x32xf32>
    %208 = arith.mulf %207, %207 : vector<14x32xf32>
    %cst_65 = arith.constant dense<0.000000e+00> : vector<14xf32>
    %209 = vector.multi_reduction <add>, %208, %cst_65 [1] : vector<14x32xf32> to vector<14xf32>
    %210 = vector.shape_cast %209 : vector<14xf32> to vector<14x1xf32>
    %cst_66 = arith.constant 3.200000e+01 : f32
    %211 = vector.broadcast %cst_66 : f32 to vector<14x1xf32>
    %212 = arith.divf %210, %211 : vector<14x1xf32>
    %cst_67 = arith.constant 9.99999974E-6 : f32
    %213 = vector.broadcast %cst_67 : f32 to vector<14x1xf32>
    %214 = arith.addf %212, %213 : vector<14x1xf32>
    %215 = math.rsqrt %214 : vector<14x1xf32>
    %216 = vector.broadcast %215 : vector<14x1xf32> to vector<14x32xf32>
    %217 = arith.mulf %207, %216 : vector<14x32xf32>
    %218 = vector.broadcast %200 : vector<1x32xf32> to vector<14x32xf32>
    %219 = arith.mulf %217, %218 : vector<14x32xf32>
    %220 = vector.broadcast %201 : vector<1x32xf32> to vector<14x32xf32>
    %221 = arith.addf %219, %220 : vector<14x32xf32>
    %c456 = arith.constant 456 : index
    %c0_68 = arith.constant 0 : index
    %222 = vector.load %arg3[%c456, %c0_68] : memref<592x32xf32, #tpu.memory_space<vmem>>, vector<32x32xf32>
    %c488 = arith.constant 488 : index
    %c0_69 = arith.constant 0 : index
    %223 = vector.load %arg3[%c488, %c0_69] : memref<592x32xf32, #tpu.memory_space<vmem>>, vector<1x32xf32>
    %cst_70 = arith.constant dense<0.000000e+00> : vector<14x32xf32>
    %224 = tpu.matmul %221, %222, %cst_70 {dimension_numbers = #tpu.dot_dimension_numbers<[1], [0], [0], [1], [0, 0, 1, 1], [], []>} : vector<14x32xf32>, vector<32x32xf32>, vector<14x32xf32> -> vector<14x32xf32>
    %225 = vector.broadcast %223 : vector<1x32xf32> to vector<14x32xf32>
    %226 = arith.addf %224, %225 : vector<14x32xf32>
    %227 = vector.shape_cast %226 : vector<14x32xf32> to vector<2x7x32xf32>
    %228 = vector.extract_strided_slice %227 {offsets = [0, 6, 0], sizes = [2, 1, 32], strides = [1, 1, 1]} : vector<2x7x32xf32> to vector<2x1x32xf32>
    %229 = vector.shape_cast %228 : vector<2x1x32xf32> to vector<2x32xf32>
    %c536 = arith.constant 536 : index
    %c0_71 = arith.constant 0 : index
    %230 = vector.load %arg3[%c536, %c0_71] : memref<592x32xf32, #tpu.memory_space<vmem>>, vector<32x32xf32>
    %231 = vector.extract_strided_slice %230 {offsets = [0, 0], sizes = [32, 16], strides = [1, 1]} : vector<32x32xf32> to vector<32x16xf32>
    %c568 = arith.constant 568 : index
    %c0_72 = arith.constant 0 : index
    %232 = vector.load %arg3[%c568, %c0_72] : memref<592x32xf32, #tpu.memory_space<vmem>>, vector<4x32xf32>
    %233 = vector.extract_strided_slice %232 {offsets = [0, 0], sizes = [4, 16], strides = [1, 1]} : vector<4x32xf32> to vector<4x16xf32>
    %c572 = arith.constant 572 : index
    %c0_73 = arith.constant 0 : index
    %234 = vector.load %arg3[%c572, %c0_73] : memref<592x32xf32, #tpu.memory_space<vmem>>, vector<1x32xf32>
    %235 = vector.extract_strided_slice %234 {offsets = [0, 0], sizes = [1, 16], strides = [1, 1]} : vector<1x32xf32> to vector<1x16xf32>
    %c573 = arith.constant 573 : index
    %c0_74 = arith.constant 0 : index
    %236 = vector.load %arg3[%c573, %c0_74] : memref<592x32xf32, #tpu.memory_space<vmem>>, vector<16x32xf32>
    %237 = vector.extract_strided_slice %236 {offsets = [0, 0], sizes = [16, 4], strides = [1, 1]} : vector<16x32xf32> to vector<16x4xf32>
    %c589 = arith.constant 589 : index
    %c0_75 = arith.constant 0 : index
    %238 = vector.load %arg3[%c589, %c0_75] : memref<592x32xf32, #tpu.memory_space<vmem>>, vector<1x32xf32>
    %239 = vector.extract_strided_slice %238 {offsets = [0, 0], sizes = [1, 4], strides = [1, 1]} : vector<1x32xf32> to vector<1x4xf32>
    %cst_76 = arith.constant dense<0.000000e+00> : vector<2x16xf32>
    %240 = tpu.matmul %229, %231, %cst_76 {dimension_numbers = #tpu.dot_dimension_numbers<[1], [0], [0], [1], [0, 0, 1, 1], [], []>} : vector<2x32xf32>, vector<32x16xf32>, vector<2x16xf32> -> vector<2x16xf32>
    %cst_77 = arith.constant dense<0.000000e+00> : vector<2x16xf32>
    %241 = tpu.matmul %1, %233, %cst_77 {dimension_numbers = #tpu.dot_dimension_numbers<[1], [0], [0], [1], [0, 0, 1, 1], [], []>} : vector<2x4xf32>, vector<4x16xf32>, vector<2x16xf32> -> vector<2x16xf32>
    %242 = arith.addf %240, %241 : vector<2x16xf32>
    %243 = vector.broadcast %235 : vector<1x16xf32> to vector<2x16xf32>
    %244 = arith.addf %242, %243 : vector<2x16xf32>
    %cst_78 = arith.constant 0.000000e+00 : f32
    %245 = vector.broadcast %cst_78 : f32 to vector<2x16xf32>
    %246 = arith.maximumf %244, %245 : vector<2x16xf32>
    %cst_79 = arith.constant dense<0.000000e+00> : vector<2x4xf32>
    %247 = tpu.matmul %246, %237, %cst_79 {dimension_numbers = #tpu.dot_dimension_numbers<[1], [0], [0], [1], [0, 0, 1, 1], [], []>} : vector<2x16xf32>, vector<16x4xf32>, vector<2x4xf32> -> vector<2x4xf32>
    %248 = vector.broadcast %239 : vector<1x4xf32> to vector<2x4xf32>
    %249 = arith.addf %247, %248 : vector<2x4xf32>
    %cst_80 = arith.constant 1.000000e-30 : f32
    %250 = vector.broadcast %cst_80 : f32 to vector<2x4xf32>
    %251 = arith.maximumf %2, %250 : vector<2x4xf32>
    %252 = math.log %251 : vector<2x4xf32>
    %cst_81 = arith.constant 0.000000e+00 : f32
    %253 = vector.broadcast %cst_81 : f32 to vector<2x4xf32>
    %254 = arith.subf %253, %252 : vector<2x4xf32>
    %255 = arith.addf %249, %254 : vector<2x4xf32>
    %cst_82 = arith.constant 1.000000e+00 : f32
    %256 = vector.broadcast %cst_82 : f32 to vector<2x4xf32>
    %257 = arith.mulf %255, %256 : vector<2x4xf32>
    %cst_83 = arith.constant dense<0xFF800000> : vector<2xf32>
    %258 = vector.multi_reduction <maximumf>, %257, %cst_83 [1] : vector<2x4xf32> to vector<2xf32>
    %259 = vector.shape_cast %258 : vector<2xf32> to vector<2x1xf32>
    %260 = vector.broadcast %259 : vector<2x1xf32> to vector<2x4xf32>
    %261 = arith.subf %257, %260 : vector<2x4xf32>
    %262 = math.exp %261 : vector<2x4xf32>
    %cst_84 = arith.constant dense<0.000000e+00> : vector<2xf32>
    %263 = vector.multi_reduction <add>, %262, %cst_84 [1] : vector<2x4xf32> to vector<2xf32>
    %264 = vector.shape_cast %263 : vector<2xf32> to vector<2x1xf32>
    %265 = vector.broadcast %264 : vector<2x1xf32> to vector<2x4xf32>
    %266 = arith.divf %262, %265 : vector<2x4xf32>
    %267 = tpu.iota {dimensions = array<i32: 1>} : vector<2x4xi32>
    %cst_85 = arith.constant dense<0xFF800000> : vector<2xf32>
    %268 = vector.multi_reduction <maximumf>, %266, %cst_85 [1] : vector<2x4xf32> to vector<2xf32>
    %269 = vector.shape_cast %268 : vector<2xf32> to vector<2x1xf32>
    %270 = vector.broadcast %269 : vector<2x1xf32> to vector<2x4xf32>
    %271 = arith.cmpf oge, %266, %270 : vector<2x4xf32>
    %c4_i32 = arith.constant 4 : i32
    %272 = vector.broadcast %c4_i32 : i32 to vector<2x4xi32>
    %273 = arith.select %271, %267, %272 : vector<2x4xi1>, vector<2x4xi32>
    %cst_86 = arith.constant dense<2147483647> : vector<2xi32>
    %274 = vector.multi_reduction <minsi>, %273, %cst_86 [1] : vector<2x4xi32> to vector<2xi32>
    %275 = vector.shape_cast %274 : vector<2xi32> to vector<2x1xi32>
    %276 = vector.broadcast %275 : vector<2x1xi32> to vector<2x4xi32>
    %277 = arith.cmpi eq, %267, %276 : vector<2x4xi32>
    %278 = arith.extui %277 : vector<2x4xi1> to vector<2x4xi32>
    %279 = arith.sitofp %278 : vector<2x4xi32> to vector<2x4xf32>
    %c496 = arith.constant 496 : index
    %c0_87 = arith.constant 0 : index
    %280 = vector.load %arg3[%c496, %c0_87] : memref<592x32xf32, #tpu.memory_space<vmem>>, vector<32x32xf32>
    %281 = vector.extract_strided_slice %280 {offsets = [0, 0], sizes = [32, 6], strides = [1, 1]} : vector<32x32xf32> to vector<32x6xf32>
    %c528 = arith.constant 528 : index
    %c0_88 = arith.constant 0 : index
    %282 = vector.load %arg3[%c528, %c0_88] : memref<592x32xf32, #tpu.memory_space<vmem>>, vector<4x32xf32>
    %283 = vector.extract_strided_slice %282 {offsets = [0, 0], sizes = [4, 6], strides = [1, 1]} : vector<4x32xf32> to vector<4x6xf32>
    %c532 = arith.constant 532 : index
    %c0_89 = arith.constant 0 : index
    %284 = vector.load %arg3[%c532, %c0_89] : memref<592x32xf32, #tpu.memory_space<vmem>>, vector<1x32xf32>
    %285 = vector.extract_strided_slice %284 {offsets = [0, 0], sizes = [1, 6], strides = [1, 1]} : vector<1x32xf32> to vector<1x6xf32>
    %286 = vector.extract_strided_slice %227 {offsets = [0, 0, 0], sizes = [2, 1, 32], strides = [1, 1, 1]} : vector<2x7x32xf32> to vector<2x1x32xf32>
    %287 = vector.shape_cast %286 : vector<2x1x32xf32> to vector<2x32xf32>
    %cst_90 = arith.constant dense<0.000000e+00> : vector<2x6xf32>
    %288 = tpu.matmul %287, %281, %cst_90 {dimension_numbers = #tpu.dot_dimension_numbers<[1], [0], [0], [1], [0, 0, 1, 1], [], []>} : vector<2x32xf32>, vector<32x6xf32>, vector<2x6xf32> -> vector<2x6xf32>
    %cst_91 = arith.constant dense<0.000000e+00> : vector<2x6xf32>
    %289 = tpu.matmul %266, %283, %cst_91 {dimension_numbers = #tpu.dot_dimension_numbers<[1], [0], [0], [1], [0, 0, 1, 1], [], []>} : vector<2x4xf32>, vector<4x6xf32>, vector<2x6xf32> -> vector<2x6xf32>
    %290 = arith.addf %288, %289 : vector<2x6xf32>
    %291 = vector.broadcast %285 : vector<1x6xf32> to vector<2x6xf32>
    %292 = arith.addf %290, %291 : vector<2x6xf32>
    %c533 = arith.constant 533 : index
    %c0_92 = arith.constant 0 : index
    %293 = vector.load %arg3[%c533, %c0_92] : memref<592x32xf32, #tpu.memory_space<vmem>>, vector<1x32xf32>
    %c534 = arith.constant 534 : index
    %c0_93 = arith.constant 0 : index
    %294 = vector.load %arg3[%c534, %c0_93] : memref<592x32xf32, #tpu.memory_space<vmem>>, vector<1x32xf32>
    %295 = vector.extract_strided_slice %294 {offsets = [0, 0], sizes = [1, 4], strides = [1, 1]} : vector<1x32xf32> to vector<1x4xf32>
    %c535 = arith.constant 535 : index
    %c0_94 = arith.constant 0 : index
    %296 = vector.load %arg3[%c535, %c0_94] : memref<592x32xf32, #tpu.memory_space<vmem>>, vector<1x32xf32>
    %297 = vector.extract_strided_slice %296 {offsets = [0, 0], sizes = [1, 1], strides = [1, 1]} : vector<1x32xf32> to vector<1x1xf32>
    %298 = vector.extract_strided_slice %227 {offsets = [0, 1, 0], sizes = [2, 3, 32], strides = [1, 1, 1]} : vector<2x7x32xf32> to vector<2x3x32xf32>
    %299 = vector.shape_cast %293 : vector<1x32xf32> to vector<1x1x32xf32>
    %300 = vector.broadcast %299 : vector<1x1x32xf32> to vector<2x3x32xf32>
    %301 = arith.mulf %298, %300 : vector<2x3x32xf32>
    %cst_95 = arith.constant dense<0.000000e+00> : vector<2x3xf32>
    %302 = vector.multi_reduction <add>, %301, %cst_95 [2] : vector<2x3x32xf32> to vector<2x3xf32>
    %303 = vector.broadcast %295 : vector<1x4xf32> to vector<2x4xf32>
    %304 = arith.mulf %266, %303 : vector<2x4xf32>
    %cst_96 = arith.constant dense<0.000000e+00> : vector<2xf32>
    %305 = vector.multi_reduction <add>, %304, %cst_96 [1] : vector<2x4xf32> to vector<2xf32>
    %306 = vector.shape_cast %305 : vector<2xf32> to vector<2x1xf32>
    %307 = vector.broadcast %306 : vector<2x1xf32> to vector<2x3xf32>
    %308 = arith.addf %302, %307 : vector<2x3xf32>
    %309 = vector.broadcast %297 : vector<1x1xf32> to vector<2x3xf32>
    %310 = arith.addf %308, %309 : vector<2x3xf32>
    %311 = tpu.concatenate %292, %310 in 1 : vector<2x6xf32>, vector<2x3xf32> -> vector<2x9xf32>
    %cst_97 = arith.constant 0.000000e+00 : f32
    %312 = vector.broadcast %cst_97 : f32 to vector<2x79xf32>
    %313 = tpu.concatenate %229, %311, %266, %279, %312 in 1 : vector<2x32xf32>, vector<2x9xf32>, vector<2x4xf32>, vector<2x4xf32>, vector<2x79xf32> -> vector<2x128xf32>
    %c0_98 = arith.constant 0 : index
    %c0_99 = arith.constant 0 : index
    %314 = vector.load %arg4[%c0_98, %c0_99] : memref<2x128xf32, #tpu.memory_space<vmem>>, vector<2x128xf32>
    tpu.vector_store %arg4[%c0_98, %c0_99], %313 {strides = array<i32>} : memref<2x128xf32, #tpu.memory_space<vmem>>, vector<2x128xf32>,
    return
  }
}

</mosaic_0001>

<llo_original>
// kernel: tpu_custom_call.1
$region0: #{tpu_custom_call.1}
  #allocation0 [shape = 'u32[]', space=smem, size = 0x4, offset = 0x4, fixed_abs, tag = 'smem constant byte address 0x4 - core index']
  #allocation1 [shape = 'u32[144,128]{1,0:T(1,128)}', space=vmem, size = 0x12000, scoped, tag = 'internal scratch']
  %s0 = inlined_call_operand.vmem [shape: f32[14,49], index: 0, kind: input, shape index: {}]
  %s1 = inlined_call_operand.vmem [shape: f32[2,8], index: 1, kind: input, shape index: {}]
  %s2 = inlined_call_operand.vmem [shape: f32[144,192], index: 2, kind: input, shape index: {}]
  %s3 = inlined_call_operand.vmem [shape: f32[592,32], index: 3, kind: input, shape index: {}]
  %s4 = inlined_call_operand.hbm [shape: f32[2,128], index: 4, kind: output, shape index: {}]
  %s5 = sld [smem:[#allocation0]]
  $region26: #{tpu_custom_call.1} parent=0
    _
  %s7 = ssub.s32 1, %s5
  %s8 = scalar_select 0, %s7, %s5
  $region1: #{tpu_custom_call.1} parent=0
    #allocation2 [shape = 'u8[1024]{0}', space=vmem, size = 0x400, scoped, tag = 'output window, operand 0, single buffered']
    #allocation3 [shape = 's32[1]{0}', space=sflag, size = 0x4, scoped, tag = 'scoped memory for tpu_custom_call.1']
    %9 = vsyncpa [#allocation3], 0
    // Predicated region
    $region2: #{tpu_custom_call.1} parent=1 // pred_check
      _
    $region3: #{tpu_custom_call.1} parent=1 // pred_check_branch
      %11 = sbr.rel (0) target = $region5
    $region4: #{tpu_custom_call.1} parent=1 // pred_region
      _
    $region5: #{tpu_custom_call.1} parent=1 // pred_fallthru
      _
    // Predicated region
    $region6: #{tpu_custom_call.1} parent=1 // pred_check
      _
    $region7: #{tpu_custom_call.1} parent=1 // pred_check_branch
      %13 = sbr.rel (0) target = $region9
    $region8: #{tpu_custom_call.1} parent=1 // pred_region
      _
    $region9: #{tpu_custom_call.1} parent=1 // pred_fallthru
      _
    // Predicated region
    $region10: #{tpu_custom_call.1} parent=1 // pred_check
      _
    $region11: #{tpu_custom_call.1} parent=1 // pred_check_branch
      %15 = sbr.rel (0) target = $region13
    $region12: #{tpu_custom_call.1} parent=1 // pred_region
      _
    $region13: #{tpu_custom_call.1} parent=1 // pred_fallthru
      _
    // Predicated region
    $region14: #{tpu_custom_call.1} parent=1 // pred_check
      _
    $region15: #{tpu_custom_call.1} parent=1 // pred_check_branch
      %17 = sbr.rel (0) target = $region17
    $region16: #{tpu_custom_call.1} parent=1 // pred_region
      _
    $region17: #{tpu_custom_call.1} parent=1 // pred_fallthru
      _
    %v18 = vld [vmem:[%s1] sm:$0x3]
    %v19 = vld [vmem:[%s3 + $0x190] sm:$0xff]
    %v20 = vld [vmem:[%s3 + $0x198] sm:$0xff]
    %v21 = vld [vmem:[%s3 + $0x1a0] sm:$0xff]
    %v22 = vld [vmem:[%s3 + $0x1a8] sm:$0xff]
    %v23 = vld [vmem:[%s3 + $0x1b0] sm:$0xff]
    %v24 = vld [vmem:[%s3 + $0x1b8] sm:$0xff]
    %v25 = vld [vmem:[%s3 + $0x1c0] sm:$0x1]
    %v26 = vld [vmem:[%s0] sm:$0xff]
    %v27 = vld [vmem:[%s0 + $0x8] sm:$0x3f]
    %vm28 = vcmask 400384
    %v30 = vsel %vm28, %v26, 0
    %v33 = vsel %vm28, %v27, 0
    %vm35 = vcmask 1040384
    %v37 = vsel %vm35, %v25, 0
    %39 = vmatprep.subr.mxu0 0.0
    %40 = vmatpush1.msra.mxu0 0.0
    %41 = vmatprep.subr.mxu0 0.0
    %42 = vmatpush1.msra.mxu0 0.0
    %43 = vmatprep.subr.mxu0 0.0
    %44 = vmatpush1.msra.mxu0 0.0
    %45 = vmatprep.subr.mxu0 0.0
    %46 = vmatpush1.msra.mxu0 0.0
    %47 = vmatprep.subr.mxu0 0.0
    %48 = vmatpush1.msra.mxu0 0.0
    %49 = vmatprep.subr.mxu0 0.0
    %50 = vmatpush1.msra.mxu0 0.0
    %51 = vmatprep.subr.mxu0 0.0
    %52 = vmatpush1.msra.mxu0 0.0
    %53 = vmatprep.subr.mxu0 0.0
    %54 = vmatpush1.msra.mxu0 0.0
    %55 = vmatprep.subr.mxu0 0.0
    %56 = vmatpush1.msra.mxu0 0.0
    %57 = vmatprep.subr.mxu0 0.0
    %58 = vmatpush1.msra.mxu0 %v37
    %59 = vmatprep.subr.mxu0 0.0
    %60 = vmatpush1.msra.mxu0 %v24
    %61 = vmatprep.subr.mxu0 0.0
    %62 = vmatpush1.msra.mxu0 %v23
    %63 = vmatprep.subr.mxu0 0.0
    %64 = vmatpush1.msra.mxu0 %v22
    %65 = vmatprep.subr.mxu0 0.0
    %66 = vmatpush1.msra.mxu0 %v21
    %67 = vmatprep.subr.mxu0 0.0
    %68 = vmatpush1.msra.mxu0 %v20
    %69 = vmatprep.subr.mxu0 0.0
    %70 = vmatpush1.msra.mxu0 %v19
    %71 = vmatprep.subr.mxu0 0.0
    %72 = vmatpush2.msra.mxu0 0.0
    %73 = vmatprep.subr.mxu0 0.0
    %74 = vmatpush2.msra.mxu0 0.0
    %75 = vmatprep.subr.mxu0 0.0
    %76 = vmatpush2.msra.mxu0 0.0
    %77 = vmatprep.subr.mxu0 0.0
    %78 = vmatpush2.msra.mxu0 0.0
    %79 = vmatprep.subr.mxu0 0.0
    %80 = vmatpush2.msra.mxu0 0.0
    %81 = vmatprep.subr.mxu0 0.0
    %82 = vmatpush2.msra.mxu0 0.0
    %83 = vmatprep.subr.mxu0 0.0
    %84 = vmatpush2.msra.mxu0 0.0
    %85 = vmatprep.subr.mxu0 0.0
    %86 = vmatpush2.msra.mxu0 0.0
    %87 = vmatprep.subr.mxu0 0.0
    %88 = vmatpush2.msra.mxu0 0.0
    %89 = vmatprep.subr.mxu0 0.0
    %90 = vmatpush2.msra.mxu0 0.0
    %91 = vmatprep.subr.mxu0 0.0
    %92 = vmatpush2.msra.mxu0 0.0
    %93 = vmatprep.subr.mxu0 0.0
    %94 = vmatpush2.msra.mxu0 0.0
    %95 = vmatprep.subr.mxu0 0.0
    %96 = vmatpush2.msra.mxu0 0.0
    %97 = vmatprep.subr.mxu0 0.0
    %98 = vmatpush2.msra.mxu0 0.0
    %99 = vmatprep.subr.mxu0 0.0
    %100 = vmatpush2.msra.mxu0 0.0
    %101 = vmatprep.subr.mxu0 0.0
    %102 = vmatpush2.msra.mxu0 0.0
    %103 = vmatprep.mubr.f32.mxu0 0.0
    %104 = vmatmul.mubr.f32.gmra.mxu0 %v30
    %v105 = vpop.f32.mrf.mxu0
    %v106 = vadd.f32 0.0, %v105
    %v107 = vpop.f32.mrf.mxu0
    %108 = vmatprep.mubr.f32.mxu0 0.0
    %109 = vmatmul.mubr.f32.gmra.mxu0 %v33
    %v110 = vpop.f32.mrf.mxu0
    %v111 = vadd.f32 0.0, %v110
    %v112 = vpop.f32.mrf.mxu0
    %113 = vdwg.mxu0
    %v114 = vld [vmem:[%s2] sm:$0xff]
    %v115 = vld [vmem:[%s2 + $0x8] sm:$0xff]
    %v116 = vld [vmem:[%s2 + $0x10] sm:$0xff]
    %v117 = vld [vmem:[%s2 + $0x18] sm:$0xff]
    %v118 = vld [vmem:[%s2 + $0x20] sm:$0xff]
    %v119 = vld [vmem:[%s2 + $0x28] sm:$0xff]
    %v120 = vld [vmem:[%s2 + $0x30] sm:$0xff]
    %v121 = vld [vmem:[%s2 + $0x38] sm:$0xff]
    %v122 = vld [vmem:[%s2 + $0x80] sm:$0xff]
    %v123 = vld [vmem:[%s2 + $0x90] sm:$0xff]
    %v124 = vld [vmem:[%s2 + $0xa0] sm:$0xff]
    %v125 = vld [vmem:[%s2 + $0xb0] sm:$0xff]
    %v126 = vld [vmem:[%s2 + $0xc0] sm:$0x1]
    %v127 = vld [vmem:[%s3 + $0x40] sm:$0xff]
    %v128 = vld [vmem:[%s3 + $0x48] sm:$0xff]
    %v129 = vld [vmem:[%s3 + $0x50] sm:$0xff]
    %v130 = vld [vmem:[%s3 + $0x58] sm:$0xff]
    %v131 = vld [vmem:[%s3 + $0x60] sm:$0xff]
    %v132 = vld [vmem:[%s3 + $0x68] sm:$0xff]
    %v133 = vld [vmem:[%s3 + $0x70] sm:$0xff]
    %v134 = vld [vmem:[%s3 + $0x78] sm:$0xff]
    %v135 = vld [vmem:[%s3 + $0x80] sm:$0xff]
    %v136 = vld [vmem:[%s3 + $0x88] sm:$0xff]
    %v137 = vld [vmem:[%s3 + $0x90] sm:$0xff]
    %v138 = vld [vmem:[%s3 + $0x98] sm:$0xff]
    %v139 = vld [vmem:[%s3 + $0xa0] sm:$0xff]
    %v140 = vld [vmem:[%s3 + $0xa8] sm:$0xff]
    %v141 = vld [vmem:[%s3 + $0xb0] sm:$0xff]
    %v142 = vld [vmem:[%s3 + $0xb8] sm:$0xff]
    %v143 = vld [vmem:[%s3 + $0xc0] sm:$0x3f]
    %vm144 = vcmask 261120
    %v146 = vsel %vm144, %v106, 0
    %v149 = vsel %vm144, %v111, 0
    %151 = vmatprep.subr.mxu0 0.0
    %152 = vmatpush1.msra.mxu0 0.0
    %153 = vmatprep.subr.mxu0 0.0
    %154 = vmatpush1.msra.mxu0 0.0
    %155 = vmatprep.subr.mxu0 0.0
    %156 = vmatpush1.msra.mxu0 0.0
    %157 = vmatprep.subr.mxu0 0.0
    %158 = vmatpush1.msra.mxu0 0.0
    %159 = vmatprep.subr.mxu0 0.0
    %160 = vmatpush1.msra.mxu0 0.0
    %161 = vmatprep.subr.mxu0 0.0
    %162 = vmatpush1.msra.mxu0 0.0
    %163 = vmatprep.subr.mxu0 0.0
    %164 = vmatpush1.msra.mxu0 0.0
    %165 = vmatprep.subr.mxu0 0.0
    %166 = vmatpush1.msra.mxu0 0.0
    %167 = vmatprep.subr.mxu0 0.0
    %168 = vmatpush1.msra.mxu0 0.0
    %169 = vmatprep.subr.mxu0 0.0
    %170 = vmatpush1.msra.mxu0 0.0
    %171 = vmatprep.subr.mxu0 0.0
    %172 = vmatpush1.msra.mxu0 0.0
    %173 = vmatprep.subr.mxu0 0.0
    %174 = vmatpush1.msra.mxu0 0.0
    %175 = vmatprep.subr.mxu0 %v121
    %176 = vmatpush1.msra.mxu0 %v120
    %177 = vmatprep.subr.mxu0 %v119
    %178 = vmatpush1.msra.mxu0 %v118
    %179 = vmatprep.subr.mxu0 %v117
    %180 = vmatpush1.msra.mxu0 %v116
    %181 = vmatprep.subr.mxu0 %v115
    %182 = vmatpush1.msra.mxu0 %v114
    %183 = vmatprep.subr.mxu0 0.0
    %184 = vmatpush2.msra.mxu0 0.0
    %185 = vmatprep.subr.mxu0 0.0
    %186 = vmatpush2.msra.mxu0 0.0
    %187 = vmatprep.subr.mxu0 0.0
    %188 = vmatpush2.msra.mxu0 0.0
    %189 = vmatprep.subr.mxu0 0.0
    %190 = vmatpush2.msra.mxu0 0.0
    %191 = vmatprep.subr.mxu0 0.0
    %192 = vmatpush2.msra.mxu0 0.0
    %193 = vmatprep.subr.mxu0 0.0
    %194 = vmatpush2.msra.mxu0 0.0
    %195 = vmatprep.subr.mxu0 0.0
    %196 = vmatpush2.msra.mxu0 0.0
    %197 = vmatprep.subr.mxu0 0.0
    %198 = vmatpush2.msra.mxu0 0.0
    %199 = vmatprep.subr.mxu0 0.0
    %200 = vmatpush2.msra.mxu0 0.0
    %201 = vmatprep.subr.mxu0 0.0
    %202 = vmatpush2.msra.mxu0 0.0
    %203 = vmatprep.subr.mxu0 0.0
    %204 = vmatpush2.msra.mxu0 0.0
    %205 = vmatprep.subr.mxu0 0.0
    %206 = vmatpush2.msra.mxu0 0.0
    %207 = vmatprep.subr.mxu0 0.0
    %208 = vmatpush2.msra.mxu0 0.0
    %209 = vmatprep.subr.mxu0 0.0
    %210 = vmatpush2.msra.mxu0 0.0
    %211 = vmatprep.subr.mxu0 0.0
    %212 = vmatpush2.msra.mxu0 0.0
    %213 = vmatprep.subr.mxu0 0.0
    %214 = vmatpush2.msra.mxu0 0.0
    %215 = vmatprep.mubr.f32.mxu0 0.0
    %216 = vmatmul.mubr.f32.gmra.mxu0 %v146
    %v217 = vpop.f32.mrf.mxu0
    %v218 = vadd.f32 0.0, %v217
    %v219 = vpop.f32.mrf.mxu0
    %v220 = vadd.f32 0.0, %v219
    %221 = vmatprep.mubr.f32.mxu0 0.0
    %222 = vmatmul.mubr.f32.gmra.mxu0 %v149
    %v223 = vpop.f32.mrf.mxu0
    %v224 = vadd.f32 0.0, %v223
    %v225 = vpop.f32.mrf.mxu0
    %v226 = vadd.f32 0.0, %v225
    %227 = vdwg.mxu0
    %v230 = vcombine.high %v218, %v218
    %v232 = vunpack.c.l.s4 1966171168
    %v233 = vunpack.c.0.s8 %v232
    %v234 = vlaneseq
    %v235 = vshrl.u32 %v234, 7
    %v236 = vsub.s32 %v233, %v235
    %v237 = vrot.slane %v218, %v236
    %v239 = vunpack.c.l.s4 1966171168
    %v240 = vunpack.c.0.s8 %v239
    %v241 = vlaneseq
    %v242 = vshrl.u32 %v241, 7
    %v243 = vsub.s32 %v240, %v242
    %v244 = vrot.slane %v230, %v243
    %v245 = vcombine.high %v237, %v237
    %v246 = vcombine.high %v244, %v244
    %v248 = vunpack.c.l.s4 1966171168
    %v249 = vunpack.c.0.s8 %v248
    %v250 = vlaneseq
    %v251 = vshrl.u32 %v250, 7
    %v252 = vsub.s32 %v249, %v251
    %v253 = vrot.slane %v237, %v252
    %v255 = vunpack.c.l.s4 1966171168
    %v256 = vunpack.c.0.s8 %v255
    %v257 = vlaneseq
    %v258 = vshrl.u32 %v257, 7
    %v259 = vsub.s32 %v256, %v258
    %v260 = vrot.slane %v244, %v259
    %v262 = vunpack.c.l.s4 1966171168
    %v263 = vunpack.c.0.s8 %v262
    %v264 = vlaneseq
    %v265 = vshrl.u32 %v264, 7
    %v266 = vsub.s32 %v263, %v265
    %v267 = vrot.slane %v245, %v266
    %v269 = vunpack.c.l.s4 1966171168
    %v270 = vunpack.c.0.s8 %v269
    %v271 = vlaneseq
    %v272 = vshrl.u32 %v271, 7
    %v273 = vsub.s32 %v270, %v272
    %v274 = vrot.slane %v246, %v273
    %v275 = vcombine.high %v253, %v253
    %v276 = vcombine.high %v260, %v260
    %v277 = vcombine.high %v267, %v267
    %v278 = vcombine.high %v274, %v274
    %v279 = vcombine.high %v224, %v224
    %v281 = vunpack.c.l.s4 1966171168
    %v282 = vunpack.c.0.s8 %v281
    %v283 = vlaneseq
    %v284 = vshrl.u32 %v283, 7
    %v285 = vsub.s32 %v282, %v284
    %v286 = vrot.slane %v224, %v285
    %v288 = vunpack.c.l.s4 1966171168
    %v289 = vunpack.c.0.s8 %v288
    %v290 = vlaneseq
    %v291 = vshrl.u32 %v290, 7
    %v292 = vsub.s32 %v289, %v291
    %v293 = vrot.slane %v279, %v292
    %v294 = vcombine.high %v286, %v286
    %v295 = vcombine.high %v293, %v293
    %v297 = vunpack.c.l.s4 1966171168
    %v298 = vunpack.c.0.s8 %v297
    %v299 = vlaneseq
    %v300 = vshrl.u32 %v299, 7
    %v301 = vsub.s32 %v298, %v300
    %v302 = vrot.slane %v286, %v301
    %v304 = vunpack.c.l.s4 1966171168
    %v305 = vunpack.c.0.s8 %v304
    %v306 = vlaneseq
    %v307 = vshrl.u32 %v306, 7
    %v308 = vsub.s32 %v305, %v307
    %v309 = vrot.slane %v293, %v308
    %v311 = vunpack.c.l.s4 1966171168
    %v312 = vunpack.c.0.s8 %v311
    %v313 = vlaneseq
    %v314 = vshrl.u32 %v313, 7
    %v315 = vsub.s32 %v312, %v314
    %v316 = vrot.slane %v294, %v315
    %v318 = vunpack.c.l.s4 1966171168
    %v319 = vunpack.c.0.s8 %v318
    %v320 = vlaneseq
    %v321 = vshrl.u32 %v320, 7
    %v322 = vsub.s32 %v319, %v321
    %v323 = vrot.slane %v295, %v322
    %v324 = vcombine.high %v302, %v302
    %v325 = vcombine.high %v316, %v316
    %v328 = vcombine.high %v220, %v220
    %v330 = vunpack.c.l.s4 1966171168
    %v331 = vunpack.c.0.s8 %v330
    %v332 = vlaneseq
    %v333 = vshrl.u32 %v332, 7
    %v334 = vsub.s32 %v331, %v333
    %v335 = vrot.slane %v220, %v334
    %v337 = vunpack.c.l.s4 1966171168
    %v338 = vunpack.c.0.s8 %v337
    %v339 = vlaneseq
    %v340 = vshrl.u32 %v339, 7
    %v341 = vsub.s32 %v338, %v340
    %v342 = vrot.slane %v328, %v341
    %v343 = vcombine.high %v335, %v335
    %v344 = vcombine.high %v342, %v342
    %v346 = vunpack.c.l.s4 1966171168
    %v347 = vunpack.c.0.s8 %v346
    %v348 = vlaneseq
    %v349 = vshrl.u32 %v348, 7
    %v350 = vsub.s32 %v347, %v349
    %v351 = vrot.slane %v335, %v350
    %v353 = vunpack.c.l.s4 1966171168
    %v354 = vunpack.c.0.s8 %v353
    %v355 = vlaneseq
    %v356 = vshrl.u32 %v355, 7
    %v357 = vsub.s32 %v354, %v356
    %v358 = vrot.slane %v342, %v357
    %v360 = vunpack.c.l.s4 1966171168
    %v361 = vunpack.c.0.s8 %v360
    %v362 = vlaneseq
    %v363 = vshrl.u32 %v362, 7
    %v364 = vsub.s32 %v361, %v363
    %v365 = vrot.slane %v343, %v364
    %v367 = vunpack.c.l.s4 1966171168
    %v368 = vunpack.c.0.s8 %v367
    %v369 = vlaneseq
    %v370 = vshrl.u32 %v369, 7
    %v371 = vsub.s32 %v368, %v370
    %v372 = vrot.slane %v344, %v371
    %v373 = vcombine.high %v351, %v351
    %v374 = vcombine.high %v358, %v358
    %v375 = vcombine.high %v365, %v365
    %v376 = vcombine.high %v372, %v372
    %v377 = vcombine.high %v226, %v226
    %v379 = vunpack.c.l.s4 1966171168
    %v380 = vunpack.c.0.s8 %v379
    %v381 = vlaneseq
    %v382 = vshrl.u32 %v381, 7
    %v383 = vsub.s32 %v380, %v382
    %v384 = vrot.slane %v226, %v383
    %v386 = vunpack.c.l.s4 1966171168
    %v387 = vunpack.c.0.s8 %v386
    %v388 = vlaneseq
    %v389 = vshrl.u32 %v388, 7
    %v390 = vsub.s32 %v387, %v389
    %v391 = vrot.slane %v377, %v390
    %v392 = vcombine.high %v384, %v384
    %v393 = vcombine.high %v391, %v391
    %v395 = vunpack.c.l.s4 1966171168
    %v396 = vunpack.c.0.s8 %v395
    %v397 = vlaneseq
    %v398 = vshrl.u32 %v397, 7
    %v399 = vsub.s32 %v396, %v398
    %v400 = vrot.slane %v384, %v399
    %v402 = vunpack.c.l.s4 1966171168
    %v403 = vunpack.c.0.s8 %v402
    %v404 = vlaneseq
    %v405 = vshrl.u32 %v404, 7
    %v406 = vsub.s32 %v403, %v405
    %v407 = vrot.slane %v391, %v406
    %v409 = vunpack.c.l.s4 1966171168
    %v410 = vunpack.c.0.s8 %v409
    %v411 = vlaneseq
    %v412 = vshrl.u32 %v411, 7
    %v413 = vsub.s32 %v410, %v412
    %v414 = vrot.slane %v392, %v413
    %v416 = vunpack.c.l.s4 1966171168
    %v417 = vunpack.c.0.s8 %v416
    %v418 = vlaneseq
    %v419 = vshrl.u32 %v418, 7
    %v420 = vsub.s32 %v417, %v419
    %v421 = vrot.slane %v393, %v420
    %v422 = vcombine.high %v400, %v400
    %v423 = vcombine.high %v414, %v414
    %v424 = vcombine.low %v253, %v267
    %v425 = vcombine.low %v275, %v277
    %v426 = vcombine.low %v260, %v274
    %v428 = vunpack.c.l.s4 1966171168
    %v429 = vunpack.c.0.s8 %v428
    %v430 = vlaneseq
    %v431 = vshrl.u32 %v430, 7
    %v432 = vsub.s32 %v429, %v431
    %v433 = vrot.slane %v424, %v432
    %v435 = vunpack.c.l.s4 1966171168
    %v436 = vunpack.c.0.s8 %v435
    %v437 = vlaneseq
    %v438 = vshrl.u32 %v437, 7
    %v439 = vsub.s32 %v436, %v438
    %v440 = vrot.slane %v425, %v439
    %v442 = vunpack.c.l.s4 1966171168
    %v443 = vunpack.c.0.s8 %v442
    %v444 = vlaneseq
    %v445 = vshrl.u32 %v444, 7
    %v446 = vsub.s32 %v443, %v445
    %v447 = vrot.slane %v426, %v446
    %v449 = vunpack.c.l.s4 1966171168
    %v450 = vunpack.c.0.s8 %v449
    %v451 = vlaneseq
    %v452 = vshrl.u32 %v451, 7
    %v453 = vsub.s32 %v450, %v452
    %v454 = vrot.slane %v276, %v453
    %v455 = vcombine.low %v433, %v440
    %v456 = vcombine.low %v447, %v454
    %v458 = vunpack.c.l.s4 1966171168
    %v459 = vunpack.c.0.s8 %v458
    %v460 = vlaneseq
    %v461 = vshrl.u32 %v460, 7
    %v462 = vsub.s32 %v459, %v461
    %v463 = vrot.slane %v455, %v462
    %v465 = vunpack.c.l.s4 1966171168
    %v466 = vunpack.c.0.s8 %v465
    %v467 = vlaneseq
    %v468 = vshrl.u32 %v467, 7
    %v469 = vsub.s32 %v466, %v468
    %v470 = vrot.slane %v456, %v469
    %v471 = vcombine.low %v463, %v470
    %472 = vrot.lane.b32.xlu0 %v471, 64
    %v473 = vpop.permute.xlu0 %472
    %v474 = vsel %vm144, %v471, 0
    %v476 = vsel %vm144, %v473, 0
    %478 = vmatprep.subr.mxu0 0.0
    %479 = vmatpush1.xpose.msra.mxu0 0.0
    %480 = vmatprep.subr.mxu0 0.0
    %481 = vmatpush1.xpose.msra.mxu0 0.0
    %482 = vmatprep.subr.mxu0 0.0
    %483 = vmatpush1.xpose.msra.mxu0 0.0
    %484 = vmatprep.subr.mxu0 0.0
    %485 = vmatpush1.xpose.msra.mxu0 0.0
    %486 = vmatprep.subr.mxu0 0.0
    %487 = vmatpush1.xpose.msra.mxu0 0.0
    %488 = vmatprep.subr.mxu0 0.0
    %489 = vmatpush1.xpose.msra.mxu0 0.0
    %490 = vmatprep.subr.mxu0 0.0
    %491 = vmatpush1.xpose.msra.mxu0 0.0
    %492 = vmatprep.subr.mxu0 0.0
    %493 = vmatpush1.xpose.msra.mxu0 0.0
    %494 = vmatprep.subr.mxu0 0.0
    %495 = vmatpush1.xpose.msra.mxu0 0.0
    %496 = vmatprep.subr.mxu0 0.0
    %497 = vmatpush1.xpose.msra.mxu0 0.0
    %498 = vmatprep.subr.mxu0 0.0
    %499 = vmatpush1.xpose.msra.mxu0 0.0
    %500 = vmatprep.subr.mxu0 0.0
    %501 = vmatpush1.xpose.msra.mxu0 0.0
    %502 = vmatprep.subr.mxu0 0.0
    %503 = vmatpush1.xpose.msra.mxu0 0.0
    %504 = vmatprep.subr.mxu0 0.0
    %505 = vmatpush1.xpose.msra.mxu0 0.0
    %506 = vmatprep.subr.mxu0 0.0
    %507 = vmatpush1.xpose.msra.mxu0 0.0
    %508 = vmatprep.subr.mxu0 0.0
    %509 = vmatpush1.xpose.msra.mxu0 %v476
    %510 = vmatprep.subr.mxu0 0.0
    %511 = vmatpush2.xpose.msra.mxu0 0.0
    %512 = vmatprep.subr.mxu0 0.0
    %513 = vmatpush2.xpose.msra.mxu0 0.0
    %514 = vmatprep.subr.mxu0 0.0
    %515 = vmatpush2.xpose.msra.mxu0 0.0
    %516 = vmatprep.subr.mxu0 0.0
    %517 = vmatpush2.xpose.msra.mxu0 0.0
    %518 = vmatprep.subr.mxu0 0.0
    %519 = vmatpush2.xpose.msra.mxu0 0.0
    %520 = vmatprep.subr.mxu0 0.0
    %521 = vmatpush2.xpose.msra.mxu0 0.0
    %522 = vmatprep.subr.mxu0 0.0
    %523 = vmatpush2.xpose.msra.mxu0 0.0
    %524 = vmatprep.subr.mxu0 0.0
    %525 = vmatpush2.xpose.msra.mxu0 0.0
    %526 = vmatprep.subr.mxu0 0.0
    %527 = vmatpush2.xpose.msra.mxu0 0.0
    %528 = vmatprep.subr.mxu0 0.0
    %529 = vmatpush2.xpose.msra.mxu0 0.0
    %530 = vmatprep.subr.mxu0 0.0
    %531 = vmatpush2.xpose.msra.mxu0 0.0
    %532 = vmatprep.subr.mxu0 0.0
    %533 = vmatpush2.xpose.msra.mxu0 0.0
    %534 = vmatprep.subr.mxu0 0.0
    %535 = vmatpush2.xpose.msra.mxu0 0.0
    %536 = vmatprep.subr.mxu0 0.0
    %537 = vmatpush2.xpose.msra.mxu0 0.0
    %538 = vmatprep.subr.mxu0 0.0
    %539 = vmatpush2.xpose.msra.mxu0 0.0
    %540 = vmatprep.subr.mxu0 0.0
    %541 = vmatpush2.xpose.msra.mxu0 0.0
    %542 = vmatprep.mubr.f32.mxu0 0.0
    %543 = vmatmul.mubr.f32.gmra.mxu0 %v474
    %v544 = vpop.f32.mrf.mxu0
    %v545 = vadd.f32 0.0, %v544
    %v546 = vpop.f32.mrf.mxu0
    %547 = vdwg.mxu0
    %v548 = vcombine.low %v278, %v302
    %v549 = vcombine.low %v316, %v324
    %v550 = vcombine.low %v325, %v309
    %v552 = vunpack.c.l.s4 1966171168
    %v553 = vunpack.c.0.s8 %v552
    %v554 = vlaneseq
    %v555 = vshrl.u32 %v554, 7
    %v556 = vsub.s32 %v553, %v555
    %v557 = vrot.slane %v548, %v556
    %v559 = vunpack.c.l.s4 1966171168
    %v560 = vunpack.c.0.s8 %v559
    %v561 = vlaneseq
    %v562 = vshrl.u32 %v561, 7
    %v563 = vsub.s32 %v560, %v562
    %v564 = vrot.slane %v549, %v563
    %v566 = vunpack.c.l.s4 1966171168
    %v567 = vunpack.c.0.s8 %v566
    %v568 = vlaneseq
    %v569 = vshrl.u32 %v568, 7
    %v570 = vsub.s32 %v567, %v569
    %v571 = vrot.slane %v550, %v570
    %v573 = vunpack.c.l.s4 1966171168
    %v574 = vunpack.c.0.s8 %v573
    %v575 = vlaneseq
    %v576 = vshrl.u32 %v575, 7
    %v577 = vsub.s32 %v574, %v576
    %v578 = vrot.slane %v323, %v577
    %v579 = vcombine.low %v557, %v564
    %v580 = vcombine.low %v571, %v578
    %v582 = vunpack.c.l.s4 1966171168
    %v583 = vunpack.c.0.s8 %v582
    %v584 = vlaneseq
    %v585 = vshrl.u32 %v584, 7
    %v586 = vsub.s32 %v583, %v585
    %v587 = vrot.slane %v579, %v586
    %v589 = vunpack.c.l.s4 1966171168
    %v590 = vunpack.c.0.s8 %v589
    %v591 = vlaneseq
    %v592 = vshrl.u32 %v591, 7
    %v593 = vsub.s32 %v590, %v592
    %v594 = vrot.slane %v580, %v593
    %v595 = vcombine.low %v587, %v594
    %596 = vrot.lane.b32.xlu0 %v595, 64
    %v597 = vpop.permute.xlu0 %596
    %v598 = vsel %vm144, %v595, 0
    %v600 = vsel %vm144, %v597, 0
    %602 = vmatprep.subr.mxu0 0.0
    %603 = vmatpush1.xpose.msra.mxu0 0.0
    %604 = vmatprep.subr.mxu0 0.0
    %605 = vmatpush1.xpose.msra.mxu0 0.0
    %606 = vmatprep.subr.mxu0 0.0
    %607 = vmatpush1.xpose.msra.mxu0 0.0
    %608 = vmatprep.subr.mxu0 0.0
    %609 = vmatpush1.xpose.msra.mxu0 0.0
    %610 = vmatprep.subr.mxu0 0.0
    %611 = vmatpush1.xpose.msra.mxu0 0.0
    %612 = vmatprep.subr.mxu0 0.0
    %613 = vmatpush1.xpose.msra.mxu0 0.0
    %614 = vmatprep.subr.mxu0 0.0
    %615 = vmatpush1.xpose.msra.mxu0 0.0
    %616 = vmatprep.subr.mxu0 0.0
    %617 = vmatpush1.xpose.msra.mxu0 0.0
    %618 = vmatprep.subr.mxu0 0.0
    %619 = vmatpush1.xpose.msra.mxu0 0.0
    %620 = vmatprep.subr.mxu0 0.0
    %621 = vmatpush1.xpose.msra.mxu0 0.0
    %622 = vmatprep.subr.mxu0 0.0
    %623 = vmatpush1.xpose.msra.mxu0 0.0
    %624 = vmatprep.subr.mxu0 0.0
    %625 = vmatpush1.xpose.msra.mxu0 0.0
    %626 = vmatprep.subr.mxu0 0.0
    %627 = vmatpush1.xpose.msra.mxu0 0.0
    %628 = vmatprep.subr.mxu0 0.0
    %629 = vmatpush1.xpose.msra.mxu0 0.0
    %630 = vmatprep.subr.mxu0 0.0
    %631 = vmatpush1.xpose.msra.mxu0 0.0
    %632 = vmatprep.subr.mxu0 0.0
    %633 = vmatpush1.xpose.msra.mxu0 %v600
    %634 = vmatprep.subr.mxu0 0.0
    %635 = vmatpush2.xpose.msra.mxu0 0.0
    %636 = vmatprep.subr.mxu0 0.0
    %637 = vmatpush2.xpose.msra.mxu0 0.0
    %638 = vmatprep.subr.mxu0 0.0
    %639 = vmatpush2.xpose.msra.mxu0 0.0
    %640 = vmatprep.subr.mxu0 0.0
    %641 = vmatpush2.xpose.msra.mxu0 0.0
    %642 = vmatprep.subr.mxu0 0.0
    %643 = vmatpush2.xpose.msra.mxu0 0.0
    %644 = vmatprep.subr.mxu0 0.0
    %645 = vmatpush2.xpose.msra.mxu0 0.0
    %646 = vmatprep.subr.mxu0 0.0
    %647 = vmatpush2.xpose.msra.mxu0 0.0
    %648 = vmatprep.subr.mxu0 0.0
    %649 = vmatpush2.xpose.msra.mxu0 0.0
    %650 = vmatprep.subr.mxu0 0.0
    %651 = vmatpush2.xpose.msra.mxu0 0.0
    %652 = vmatprep.subr.mxu0 0.0
    %653 = vmatpush2.xpose.msra.mxu0 0.0
    %654 = vmatprep.subr.mxu0 0.0
    %655 = vmatpush2.xpose.msra.mxu0 0.0
    %656 = vmatprep.subr.mxu0 0.0
    %657 = vmatpush2.xpose.msra.mxu0 0.0
    %658 = vmatprep.subr.mxu0 0.0
    %659 = vmatpush2.xpose.msra.mxu0 0.0
    %660 = vmatprep.subr.mxu0 0.0
    %661 = vmatpush2.xpose.msra.mxu0 0.0
    %662 = vmatprep.subr.mxu0 0.0
    %663 = vmatpush2.xpose.msra.mxu0 0.0
    %664 = vmatprep.subr.mxu0 0.0
    %665 = vmatpush2.xpose.msra.mxu0 0.0
    %666 = vmatprep.mubr.f32.mxu0 0.0
    %667 = vmatmul.mubr.f32.gmra.mxu0 %v598
    %v668 = vpop.f32.mrf.mxu0
    %v669 = vadd.f32 0.0, %v668
    %v670 = vpop.f32.mrf.mxu0
    %671 = vdwg.mxu0
    %vm672 = vcmask 55296
    %v673 = vsel %vm672, %v545, -inf
    %674 = vmax.xlane.f32.xlu0 %v673
    %v675 = vpop.xlane.xlu0 %674
    %v676 = vsel %vm672, %v669, -inf
    %677 = vmax.xlane.f32.xlu0 %v676
    %v678 = vpop.xlane.xlu0 %677
    %v679 = vsub.f32 %v545, %v675
    %v680 = vsub.f32 %v669, %v678
    %v681 = vmul.f32 %v679, 1.442695
    %v682 = vpow.pop %v681
    %v683 = vmul.f32 %v680, 1.442695
    %v684 = vpow.pop %v683
    %v685 = vsel %vm672, %v682, 0.0
    %686 = vadd.xlane.f32.xlu0 %v685
    %v687 = vpop.xlane.xlu0 %686
    %v688 = vsel %vm672, %v684, 0.0
    %689 = vadd.xlane.f32.xlu0 %v688
    %v690 = vpop.xlane.xlu0 %689
    %v691 = vrcp.pop %v687
    %v692 = vrcp.pop %v690
    %v693 = vmul.f32 %v682, %v691
    %v694 = vmul.f32 %v684, %v692
    %v695 = vcombine.low %v351, %v365
    %v696 = vcombine.low %v373, %v375
    %v697 = vcombine.low %v358, %v372
    %v699 = vunpack.c.l.s4 1966171168
    %v700 = vunpack.c.0.s8 %v699
    %v701 = vlaneseq
    %v702 = vshrl.u32 %v701, 7
    %v703 = vsub.s32 %v700, %v702
    %v704 = vrot.slane %v695, %v703
    %v706 = vunpack.c.l.s4 1966171168
    %v707 = vunpack.c.0.s8 %v706
    %v708 = vlaneseq
    %v709 = vshrl.u32 %v708, 7
    %v710 = vsub.s32 %v707, %v709
    %v711 = vrot.slane %v696, %v710
    %v713 = vunpack.c.l.s4 1966171168
    %v714 = vunpack.c.0.s8 %v713
    %v715 = vlaneseq
    %v716 = vshrl.u32 %v715, 7
    %v717 = vsub.s32 %v714, %v716
    %v718 = vrot.slane %v697, %v717
    %v720 = vunpack.c.l.s4 1966171168
    %v721 = vunpack.c.0.s8 %v720
    %v722 = vlaneseq
    %v723 = vshrl.u32 %v722, 7
    %v724 = vsub.s32 %v721, %v723
    %v725 = vrot.slane %v374, %v724
    %v726 = vcombine.low %v704, %v711
    %v727 = vcombine.low %v718, %v725
    %v729 = vunpack.c.l.s4 1966171168
    %v730 = vunpack.c.0.s8 %v729
    %v731 = vlaneseq
    %v732 = vshrl.u32 %v731, 7
    %v733 = vsub.s32 %v730, %v732
    %v734 = vrot.slane %v726, %v733
    %v736 = vunpack.c.l.s4 1966171168
    %v737 = vunpack.c.0.s8 %v736
    %v738 = vlaneseq
    %v739 = vshrl.u32 %v738, 7
    %v740 = vsub.s32 %v737, %v739
    %v741 = vrot.slane %v727, %v740
    %v742 = vcombine.low %v734, %v741
    %vm743 = vcmask 56320
    %v745 = vsel %vm743, %v693, 0
    %vm747 = vcmask 1046528
    %v748 = vsel %vm747, %v742, 0
    %750 = vmatprep.subr.mxu0 0.0
    %751 = vmatpush1.msra.mxu0 0.0
    %752 = vmatprep.subr.mxu0 0.0
    %753 = vmatpush1.msra.mxu0 0.0
    %754 = vmatprep.subr.mxu0 0.0
    %755 = vmatpush1.msra.mxu0 0.0
    %756 = vmatprep.subr.mxu0 0.0
    %757 = vmatpush1.msra.mxu0 0.0
    %758 = vmatprep.subr.mxu0 0.0
    %759 = vmatpush1.msra.mxu0 0.0
    %760 = vmatprep.subr.mxu0 0.0
    %761 = vmatpush1.msra.mxu0 0.0
    %762 = vmatprep.subr.mxu0 0.0
    %763 = vmatpush1.msra.mxu0 0.0
    %764 = vmatprep.subr.mxu0 0.0
    %765 = vmatpush1.msra.mxu0 0.0
    %766 = vmatprep.subr.mxu0 0.0
    %767 = vmatpush1.msra.mxu0 0.0
    %768 = vmatprep.subr.mxu0 0.0
    %769 = vmatpush1.msra.mxu0 0.0
    %770 = vmatprep.subr.mxu0 0.0
    %771 = vmatpush1.msra.mxu0 0.0
    %772 = vmatprep.subr.mxu0 0.0
    %773 = vmatpush1.msra.mxu0 0.0
    %774 = vmatprep.subr.mxu0 0.0
    %775 = vmatpush1.msra.mxu0 0.0
    %776 = vmatprep.subr.mxu0 0.0
    %777 = vmatpush1.msra.mxu0 0.0
    %778 = vmatprep.subr.mxu0 0.0
    %779 = vmatpush1.msra.mxu0 0.0
    %780 = vmatprep.subr.mxu0 0.0
    %781 = vmatpush1.msra.mxu0 %v748
    %782 = vmatprep.subr.mxu0 0.0
    %783 = vmatpush2.msra.mxu0 0.0
    %784 = vmatprep.subr.mxu0 0.0
    %785 = vmatpush2.msra.mxu0 0.0
    %786 = vmatprep.subr.mxu0 0.0
    %787 = vmatpush2.msra.mxu0 0.0
    %788 = vmatprep.subr.mxu0 0.0
    %789 = vmatpush2.msra.mxu0 0.0
    %790 = vmatprep.subr.mxu0 0.0
    %791 = vmatpush2.msra.mxu0 0.0
    %792 = vmatprep.subr.mxu0 0.0
    %793 = vmatpush2.msra.mxu0 0.0
    %794 = vmatprep.subr.mxu0 0.0
    %795 = vmatpush2.msra.mxu0 0.0
    %796 = vmatprep.subr.mxu0 0.0
    %797 = vmatpush2.msra.mxu0 0.0
    %798 = vmatprep.subr.mxu0 0.0
    %799 = vmatpush2.msra.mxu0 0.0
    %800 = vmatprep.subr.mxu0 0.0
    %801 = vmatpush2.msra.mxu0 0.0
    %802 = vmatprep.subr.mxu0 0.0
    %803 = vmatpush2.msra.mxu0 0.0
    %804 = vmatprep.subr.mxu0 0.0
    %805 = vmatpush2.msra.mxu0 0.0
    %806 = vmatprep.subr.mxu0 0.0
    %807 = vmatpush2.msra.mxu0 0.0
    %808 = vmatprep.subr.mxu0 0.0
    %809 = vmatpush2.msra.mxu0 0.0
    %810 = vmatprep.subr.mxu0 0.0
    %811 = vmatpush2.msra.mxu0 0.0
    %812 = vmatprep.subr.mxu0 0.0
    %813 = vmatpush2.msra.mxu0 0.0
    %814 = vmatprep.mubr.f32.mxu0 0.0
    %815 = vmatmul.mubr.f32.gmra.mxu0 %v745
    %v816 = vpop.f32.mrf.mxu0
    %v817 = vadd.f32 0.0, %v816
    %v818 = vpop.f32.mrf.mxu0
    %819 = vdwg.mxu0
    %v820 = vcombine.low %v376, %v400
    %v821 = vcombine.low %v414, %v422
    %v822 = vcombine.low %v423, %v407
    %v824 = vunpack.c.l.s4 1966171168
    %v825 = vunpack.c.0.s8 %v824
    %v826 = vlaneseq
    %v827 = vshrl.u32 %v826, 7
    %v828 = vsub.s32 %v825, %v827
    %v829 = vrot.slane %v820, %v828
    %v831 = vunpack.c.l.s4 1966171168
    %v832 = vunpack.c.0.s8 %v831
    %v833 = vlaneseq
    %v834 = vshrl.u32 %v833, 7
    %v835 = vsub.s32 %v832, %v834
    %v836 = vrot.slane %v821, %v835
    %v838 = vunpack.c.l.s4 1966171168
    %v839 = vunpack.c.0.s8 %v838
    %v840 = vlaneseq
    %v841 = vshrl.u32 %v840, 7
    %v842 = vsub.s32 %v839, %v841
    %v843 = vrot.slane %v822, %v842
    %v845 = vunpack.c.l.s4 1966171168
    %v846 = vunpack.c.0.s8 %v845
    %v847 = vlaneseq
    %v848 = vshrl.u32 %v847, 7
    %v849 = vsub.s32 %v846, %v848
    %v850 = vrot.slane %v421, %v849
    %v851 = vcombine.low %v829, %v836
    %v852 = vcombine.low %v843, %v850
    %v854 = vunpack.c.l.s4 1966171168
    %v855 = vunpack.c.0.s8 %v854
    %v856 = vlaneseq
    %v857 = vshrl.u32 %v856, 7
    %v858 = vsub.s32 %v855, %v857
    %v859 = vrot.slane %v851, %v858
    %v861 = vunpack.c.l.s4 1966171168
    %v862 = vunpack.c.0.s8 %v861
    %v863 = vlaneseq
    %v864 = vshrl.u32 %v863, 7
    %v865 = vsub.s32 %v862, %v864
    %v866 = vrot.slane %v852, %v865
    %v867 = vcombine.low %v859, %v866
    %v869 = vsel %vm743, %v694, 0
    %v871 = vsel %vm747, %v867, 0
    %873 = vmatprep.subr.mxu0 0.0
    %874 = vmatpush1.msra.mxu0 0.0
    %875 = vmatprep.subr.mxu0 0.0
    %876 = vmatpush1.msra.mxu0 0.0
    %877 = vmatprep.subr.mxu0 0.0
    %878 = vmatpush1.msra.mxu0 0.0
    %879 = vmatprep.subr.mxu0 0.0
    %880 = vmatpush1.msra.mxu0 0.0
    %881 = vmatprep.subr.mxu0 0.0
    %882 = vmatpush1.msra.mxu0 0.0
    %883 = vmatprep.subr.mxu0 0.0
    %884 = vmatpush1.msra.mxu0 0.0
    %885 = vmatprep.subr.mxu0 0.0
    %886 = vmatpush1.msra.mxu0 0.0
    %887 = vmatprep.subr.mxu0 0.0
    %888 = vmatpush1.msra.mxu0 0.0
    %889 = vmatprep.subr.mxu0 0.0
    %890 = vmatpush1.msra.mxu0 0.0
    %891 = vmatprep.subr.mxu0 0.0
    %892 = vmatpush1.msra.mxu0 0.0
    %893 = vmatprep.subr.mxu0 0.0
    %894 = vmatpush1.msra.mxu0 0.0
    %895 = vmatprep.subr.mxu0 0.0
    %896 = vmatpush1.msra.mxu0 0.0
    %897 = vmatprep.subr.mxu0 0.0
    %898 = vmatpush1.msra.mxu0 0.0
    %899 = vmatprep.subr.mxu0 0.0
    %900 = vmatpush1.msra.mxu0 0.0
    %901 = vmatprep.subr.mxu0 0.0
    %902 = vmatpush1.msra.mxu0 0.0
    %903 = vmatprep.subr.mxu0 0.0
    %904 = vmatpush1.msra.mxu0 %v871
    %905 = vmatprep.subr.mxu0 0.0
    %906 = vmatpush2.msra.mxu0 0.0
    %907 = vmatprep.subr.mxu0 0.0
    %908 = vmatpush2.msra.mxu0 0.0
    %909 = vmatprep.subr.mxu0 0.0
    %910 = vmatpush2.msra.mxu0 0.0
    %911 = vmatprep.subr.mxu0 0.0
    %912 = vmatpush2.msra.mxu0 0.0
    %913 = vmatprep.subr.mxu0 0.0
    %914 = vmatpush2.msra.mxu0 0.0
    %915 = vmatprep.subr.mxu0 0.0
    %916 = vmatpush2.msra.mxu0 0.0
    %917 = vmatprep.subr.mxu0 0.0
    %918 = vmatpush2.msra.mxu0 0.0
    %919 = vmatprep.subr.mxu0 0.0
    %920 = vmatpush2.msra.mxu0 0.0
    %921 = vmatprep.subr.mxu0 0.0
    %922 = vmatpush2.msra.mxu0 0.0
    %923 = vmatprep.subr.mxu0 0.0
    %924 = vmatpush2.msra.mxu0 0.0
    %925 = vmatprep.subr.mxu0 0.0
    %926 = vmatpush2.msra.mxu0 0.0
    %927 = vmatprep.subr.mxu0 0.0
    %928 = vmatpush2.msra.mxu0 0.0
    %929 = vmatprep.subr.mxu0 0.0
    %930 = vmatpush2.msra.mxu0 0.0
    %931 = vmatprep.subr.mxu0 0.0
    %932 = vmatpush2.msra.mxu0 0.0
    %933 = vmatprep.subr.mxu0 0.0
    %934 = vmatpush2.msra.mxu0 0.0
    %935 = vmatprep.subr.mxu0 0.0
    %936 = vmatpush2.msra.mxu0 0.0
    %937 = vmatprep.mubr.f32.mxu0 0.0
    %938 = vmatmul.mubr.f32.gmra.mxu0 %v869
    %v939 = vpop.f32.mrf.mxu0
    %v940 = vadd.f32 0.0, %v939
    %v941 = vpop.f32.mrf.mxu0
    %942 = vdwg.mxu0
    %v943 = vld [vmem:[%s3] sm:$0xff]
    %v944 = vld [vmem:[%s3 + $0x8] sm:$0xff]
    %v945 = vld [vmem:[%s3 + $0x10] sm:$0xff]
    %v946 = vld [vmem:[%s3 + $0x18] sm:$0xff]
    %v949 = vcombine.high %v817, %v817
    %v951 = vunpack.c.l.s4 1966171168
    %v952 = vunpack.c.0.s8 %v951
    %v953 = vlaneseq
    %v954 = vshrl.u32 %v953, 7
    %v955 = vsub.s32 %v952, %v954
    %v956 = vrot.slane %v817, %v955
    %v958 = vunpack.c.l.s4 1966171168
    %v959 = vunpack.c.0.s8 %v958
    %v960 = vlaneseq
    %v961 = vshrl.u32 %v960, 7
    %v962 = vsub.s32 %v959, %v961
    %v963 = vrot.slane %v949, %v962
    %v964 = vcombine.high %v956, %v956
    %v965 = vcombine.high %v963, %v963
    %v967 = vunpack.c.l.s4 1966171168
    %v968 = vunpack.c.0.s8 %v967
    %v969 = vlaneseq
    %v970 = vshrl.u32 %v969, 7
    %v971 = vsub.s32 %v968, %v970
    %v972 = vrot.slane %v956, %v971
    %v974 = vunpack.c.l.s4 1966171168
    %v975 = vunpack.c.0.s8 %v974
    %v976 = vlaneseq
    %v977 = vshrl.u32 %v976, 7
    %v978 = vsub.s32 %v975, %v977
    %v979 = vrot.slane %v963, %v978
    %v981 = vunpack.c.l.s4 1966171168
    %v982 = vunpack.c.0.s8 %v981
    %v983 = vlaneseq
    %v984 = vshrl.u32 %v983, 7
    %v985 = vsub.s32 %v982, %v984
    %v986 = vrot.slane %v964, %v985
    %v988 = vunpack.c.l.s4 1966171168
    %v989 = vunpack.c.0.s8 %v988
    %v990 = vlaneseq
    %v991 = vshrl.u32 %v990, 7
    %v992 = vsub.s32 %v989, %v991
    %v993 = vrot.slane %v965, %v992
    %v994 = vcombine.high %v972, %v972
    %v995 = vcombine.high %v979, %v979
    %v996 = vcombine.high %v986, %v986
    %v997 = vcombine.high %v940, %v940
    %v999 = vunpack.c.l.s4 1966171168
    %v1000 = vunpack.c.0.s8 %v999
    %v1001 = vlaneseq
    %v1002 = vshrl.u32 %v1001, 7
    %v1003 = vsub.s32 %v1000, %v1002
    %v1004 = vrot.slane %v940, %v1003
    %v1006 = vunpack.c.l.s4 1966171168
    %v1007 = vunpack.c.0.s8 %v1006
    %v1008 = vlaneseq
    %v1009 = vshrl.u32 %v1008, 7
    %v1010 = vsub.s32 %v1007, %v1009
    %v1011 = vrot.slane %v997, %v1010
    %v1012 = vcombine.high %v1004, %v1004
    %v1013 = vcombine.high %v1011, %v1011
    %v1015 = vunpack.c.l.s4 1966171168
    %v1016 = vunpack.c.0.s8 %v1015
    %v1017 = vlaneseq
    %v1018 = vshrl.u32 %v1017, 7
    %v1019 = vsub.s32 %v1016, %v1018
    %v1020 = vrot.slane %v1004, %v1019
    %v1022 = vunpack.c.l.s4 1966171168
    %v1023 = vunpack.c.0.s8 %v1022
    %v1024 = vlaneseq
    %v1025 = vshrl.u32 %v1024, 7
    %v1026 = vsub.s32 %v1023, %v1025
    %v1027 = vrot.slane %v1011, %v1026
    %v1029 = vunpack.c.l.s4 1966171168
    %v1030 = vunpack.c.0.s8 %v1029
    %v1031 = vlaneseq
    %v1032 = vshrl.u32 %v1031, 7
    %v1033 = vsub.s32 %v1030, %v1032
    %v1034 = vrot.slane %v1012, %v1033
    %v1036 = vunpack.c.l.s4 1966171168
    %v1037 = vunpack.c.0.s8 %v1036
    %v1038 = vlaneseq
    %v1039 = vshrl.u32 %v1038, 7
    %v1040 = vsub.s32 %v1037, %v1039
    %v1041 = vrot.slane %v1013, %v1040
    %v1042 = vcombine.high %v1020, %v1020
    %v1043 = vcombine.high %v1027, %v1027
    %v1044 = vcombine.high %v1034, %v1034
    %v1045 = vcombine.low %v972, %v986
    %v1046 = vcombine.low %v994, %v996
    %v1047 = vcombine.low %v979, %v993
    %v1048 = vcombine.low %v995, %v1020
    %v1050 = vunpack.c.l.s4 1966171168
    %v1051 = vunpack.c.0.s8 %v1050
    %v1052 = vlaneseq
    %v1053 = vshrl.u32 %v1052, 7
    %v1054 = vsub.s32 %v1051, %v1053
    %v1055 = vrot.slane %v1045, %v1054
    %v1057 = vunpack.c.l.s4 1966171168
    %v1058 = vunpack.c.0.s8 %v1057
    %v1059 = vlaneseq
    %v1060 = vshrl.u32 %v1059, 7
    %v1061 = vsub.s32 %v1058, %v1060
    %v1062 = vrot.slane %v1046, %v1061
    %v1064 = vunpack.c.l.s4 1966171168
    %v1065 = vunpack.c.0.s8 %v1064
    %v1066 = vlaneseq
    %v1067 = vshrl.u32 %v1066, 7
    %v1068 = vsub.s32 %v1065, %v1067
    %v1069 = vrot.slane %v1047, %v1068
    %v1071 = vunpack.c.l.s4 1966171168
    %v1072 = vunpack.c.0.s8 %v1071
    %v1073 = vlaneseq
    %v1074 = vshrl.u32 %v1073, 7
    %v1075 = vsub.s32 %v1072, %v1074
    %v1076 = vrot.slane %v1048, %v1075
    %v1077 = vcombine.low %v1055, %v1062
    %v1078 = vcombine.low %v1069, %v1076
    %v1080 = vunpack.c.l.s4 1966171168
    %v1081 = vunpack.c.0.s8 %v1080
    %v1082 = vlaneseq
    %v1083 = vshrl.u32 %v1082, 7
    %v1084 = vsub.s32 %v1081, %v1083
    %v1085 = vrot.slane %v1077, %v1084
    %v1087 = vunpack.c.l.s4 1966171168
    %v1088 = vunpack.c.0.s8 %v1087
    %v1089 = vlaneseq
    %v1090 = vshrl.u32 %v1089, 7
    %v1091 = vsub.s32 %v1088, %v1090
    %v1092 = vrot.slane %v1078, %v1091
    %v1093 = vcombine.low %v1085, %v1092
    %v1094 = vcombine.low %v1034, %v1042
    %v1095 = vcombine.low %v1044, %v1027
    %v1096 = vcombine.low %v1041, %v1043
    %v1098 = vunpack.c.l.s4 1966171168
    %v1099 = vunpack.c.0.s8 %v1098
    %v1100 = vlaneseq
    %v1101 = vshrl.u32 %v1100, 7
    %v1102 = vsub.s32 %v1099, %v1101
    %v1103 = vrot.slane %v1094, %v1102
    %v1105 = vunpack.c.l.s4 1966171168
    %v1106 = vunpack.c.0.s8 %v1105
    %v1107 = vlaneseq
    %v1108 = vshrl.u32 %v1107, 7
    %v1109 = vsub.s32 %v1106, %v1108
    %v1110 = vrot.slane %v1095, %v1109
    %v1112 = vunpack.c.l.s4 1966171168
    %v1113 = vunpack.c.0.s8 %v1112
    %v1114 = vlaneseq
    %v1115 = vshrl.u32 %v1114, 7
    %v1116 = vsub.s32 %v1113, %v1115
    %v1117 = vrot.slane %v1096, %v1116
    %v1118 = vcombine.low %v1103, %v1110
    %v1120 = vunpack.c.l.s4 1966171168
    %v1121 = vunpack.c.0.s8 %v1120
    %v1122 = vlaneseq
    %v1123 = vshrl.u32 %v1122, 7
    %v1124 = vsub.s32 %v1121, %v1123
    %v1125 = vrot.slane %v1118, %v1124
    %v1127 = vunpack.c.l.s4 1966171168
    %v1128 = vunpack.c.0.s8 %v1127
    %v1129 = vlaneseq
    %v1130 = vshrl.u32 %v1129, 7
    %v1131 = vsub.s32 %v1128, %v1130
    %v1132 = vrot.slane %v1117, %v1131
    %v1133 = vcombine.low %v1125, %v1132
    %v1134 = vsel %vm144, %v1093, 0
    %v1136 = vsel %vm144, %v1133, 0
    %1138 = vmatprep.subr.mxu0 0.0
    %1139 = vmatpush1.msra.mxu0 0.0
    %1140 = vmatprep.subr.mxu0 0.0
    %1141 = vmatpush1.msra.mxu0 0.0
    %1142 = vmatprep.subr.mxu0 0.0
    %1143 = vmatpush1.msra.mxu0 0.0
    %1144 = vmatprep.subr.mxu0 0.0
    %1145 = vmatpush1.msra.mxu0 0.0
    %1146 = vmatprep.subr.mxu0 0.0
    %1147 = vmatpush1.msra.mxu0 0.0
    %1148 = vmatprep.subr.mxu0 0.0
    %1149 = vmatpush1.msra.mxu0 0.0
    %1150 = vmatprep.subr.mxu0 0.0
    %1151 = vmatpush1.msra.mxu0 0.0
    %1152 = vmatprep.subr.mxu0 0.0
    %1153 = vmatpush1.msra.mxu0 0.0
    %1154 = vmatprep.subr.mxu0 0.0
    %1155 = vmatpush1.msra.mxu0 0.0
    %1156 = vmatprep.subr.mxu0 0.0
    %1157 = vmatpush1.msra.mxu0 0.0
    %1158 = vmatprep.subr.mxu0 0.0
    %1159 = vmatpush1.msra.mxu0 0.0
    %1160 = vmatprep.subr.mxu0 0.0
    %1161 = vmatpush1.msra.mxu0 0.0
    %1162 = vmatprep.subr.mxu0 0.0
    %1163 = vmatpush1.msra.mxu0 %v946
    %1164 = vmatprep.subr.mxu0 0.0
    %1165 = vmatpush1.msra.mxu0 %v945
    %1166 = vmatprep.subr.mxu0 0.0
    %1167 = vmatpush1.msra.mxu0 %v944
    %1168 = vmatprep.subr.mxu0 0.0
    %1169 = vmatpush1.msra.mxu0 %v943
    %1170 = vmatprep.subr.mxu0 0.0
    %1171 = vmatpush2.msra.mxu0 0.0
    %1172 = vmatprep.subr.mxu0 0.0
    %1173 = vmatpush2.msra.mxu0 0.0
    %1174 = vmatprep.subr.mxu0 0.0
    %1175 = vmatpush2.msra.mxu0 0.0
    %1176 = vmatprep.subr.mxu0 0.0
    %1177 = vmatpush2.msra.mxu0 0.0
    %1178 = vmatprep.subr.mxu0 0.0
    %1179 = vmatpush2.msra.mxu0 0.0
    %1180 = vmatprep.subr.mxu0 0.0
    %1181 = vmatpush2.msra.mxu0 0.0
    %1182 = vmatprep.subr.mxu0 0.0
    %1183 = vmatpush2.msra.mxu0 0.0
    %1184 = vmatprep.subr.mxu0 0.0
    %1185 = vmatpush2.msra.mxu0 0.0
    %1186 = vmatprep.subr.mxu0 0.0
    %1187 = vmatpush2.msra.mxu0 0.0
    %1188 = vmatprep.subr.mxu0 0.0
    %1189 = vmatpush2.msra.mxu0 0.0
    %1190 = vmatprep.subr.mxu0 0.0
    %1191 = vmatpush2.msra.mxu0 0.0
    %1192 = vmatprep.subr.mxu0 0.0
    %1193 = vmatpush2.msra.mxu0 0.0
    %1194 = vmatprep.subr.mxu0 0.0
    %1195 = vmatpush2.msra.mxu0 0.0
    %1196 = vmatprep.subr.mxu0 0.0
    %1197 = vmatpush2.msra.mxu0 0.0
    %1198 = vmatprep.subr.mxu0 0.0
    %1199 = vmatpush2.msra.mxu0 0.0
    %1200 = vmatprep.subr.mxu0 0.0
    %1201 = vmatpush2.msra.mxu0 0.0
    %1202 = vmatprep.mubr.f32.mxu0 0.0
    %1203 = vmatmul.mubr.f32.gmra.mxu0 %v1134
    %v1204 = vpop.f32.mrf.mxu0
    %v1205 = vadd.f32 0.0, %v1204
    %v1206 = vpop.f32.mrf.mxu0
    %1207 = vmatprep.mubr.f32.mxu0 0.0
    %1208 = vmatmul.mubr.f32.gmra.mxu0 %v1136
    %v1209 = vpop.f32.mrf.mxu0
    %v1210 = vadd.f32 0.0, %v1209
    %v1211 = vpop.f32.mrf.mxu0
    %1212 = vdwg.mxu0
    %v1213 = vlaneseq
    %v1214 = vshrl.u32 %v1213, 7
    %v1215 = vsub.s32 0, %v1214
    %v1216 = vrot.slane %v143, %v1215
    %v1217 = vadd.f32 %v1216, %v1205
    %v1218 = vadd.f32 %v1216, %v1210
    %1219 = vrot.lane.b32.xlu0 %v471, 96
    %v1220 = vpop.permute.xlu0 %1219
    %1221 = vrot.lane.b32.xlu0 %v471, 32
    %v1222 = vpop.permute.xlu0 %1221
    %v1223 = vsel %vm144, %v1220, 0
    %v1225 = vsel %vm144, %v1222, 0
    %1227 = vmatprep.subr.mxu0 0.0
    %1228 = vmatpush1.xpose.msra.mxu0 0.0
    %1229 = vmatprep.subr.mxu0 0.0
    %1230 = vmatpush1.xpose.msra.mxu0 0.0
    %1231 = vmatprep.subr.mxu0 0.0
    %1232 = vmatpush1.xpose.msra.mxu0 0.0
    %1233 = vmatprep.subr.mxu0 0.0
    %1234 = vmatpush1.xpose.msra.mxu0 0.0
    %1235 = vmatprep.subr.mxu0 0.0
    %1236 = vmatpush1.xpose.msra.mxu0 0.0
    %1237 = vmatprep.subr.mxu0 0.0
    %1238 = vmatpush1.xpose.msra.mxu0 0.0
    %1239 = vmatprep.subr.mxu0 0.0
    %1240 = vmatpush1.xpose.msra.mxu0 0.0
    %1241 = vmatprep.subr.mxu0 0.0
    %1242 = vmatpush1.xpose.msra.mxu0 0.0
    %1243 = vmatprep.subr.mxu0 0.0
    %1244 = vmatpush1.xpose.msra.mxu0 0.0
    %1245 = vmatprep.subr.mxu0 0.0
    %1246 = vmatpush1.xpose.msra.mxu0 0.0
    %1247 = vmatprep.subr.mxu0 0.0
    %1248 = vmatpush1.xpose.msra.mxu0 0.0
    %1249 = vmatprep.subr.mxu0 0.0
    %1250 = vmatpush1.xpose.msra.mxu0 0.0
    %1251 = vmatprep.subr.mxu0 0.0
    %1252 = vmatpush1.xpose.msra.mxu0 0.0
    %1253 = vmatprep.subr.mxu0 0.0
    %1254 = vmatpush1.xpose.msra.mxu0 0.0
    %1255 = vmatprep.subr.mxu0 0.0
    %1256 = vmatpush1.xpose.msra.mxu0 0.0
    %1257 = vmatprep.subr.mxu0 0.0
    %1258 = vmatpush1.xpose.msra.mxu0 %v1225
    %1259 = vmatprep.subr.mxu0 0.0
    %1260 = vmatpush2.xpose.msra.mxu0 0.0
    %1261 = vmatprep.subr.mxu0 0.0
    %1262 = vmatpush2.xpose.msra.mxu0 0.0
    %1263 = vmatprep.subr.mxu0 0.0
    %1264 = vmatpush2.xpose.msra.mxu0 0.0
    %1265 = vmatprep.subr.mxu0 0.0
    %1266 = vmatpush2.xpose.msra.mxu0 0.0
    %1267 = vmatprep.subr.mxu0 0.0
    %1268 = vmatpush2.xpose.msra.mxu0 0.0
    %1269 = vmatprep.subr.mxu0 0.0
    %1270 = vmatpush2.xpose.msra.mxu0 0.0
    %1271 = vmatprep.subr.mxu0 0.0
    %1272 = vmatpush2.xpose.msra.mxu0 0.0
    %1273 = vmatprep.subr.mxu0 0.0
    %1274 = vmatpush2.xpose.msra.mxu0 0.0
    %1275 = vmatprep.subr.mxu0 0.0
    %1276 = vmatpush2.xpose.msra.mxu0 0.0
    %1277 = vmatprep.subr.mxu0 0.0
    %1278 = vmatpush2.xpose.msra.mxu0 0.0
    %1279 = vmatprep.subr.mxu0 0.0
    %1280 = vmatpush2.xpose.msra.mxu0 0.0
    %1281 = vmatprep.subr.mxu0 0.0
    %1282 = vmatpush2.xpose.msra.mxu0 0.0
    %1283 = vmatprep.subr.mxu0 0.0
    %1284 = vmatpush2.xpose.msra.mxu0 0.0
    %1285 = vmatprep.subr.mxu0 0.0
    %1286 = vmatpush2.xpose.msra.mxu0 0.0
    %1287 = vmatprep.subr.mxu0 0.0
    %1288 = vmatpush2.xpose.msra.mxu0 0.0
    %1289 = vmatprep.subr.mxu0 0.0
    %1290 = vmatpush2.xpose.msra.mxu0 0.0
    %1291 = vmatprep.mubr.f32.mxu0 0.0
    %1292 = vmatmul.mubr.f32.gmra.mxu0 %v1223
    %v1293 = vpop.f32.mrf.mxu0
    %v1294 = vadd.f32 0.0, %v1293
    %v1295 = vpop.f32.mrf.mxu0
    %1296 = vdwg.mxu0
    %1297 = vrot.lane.b32.xlu0 %v595, 96
    %v1298 = vpop.permute.xlu0 %1297
    %1299 = vrot.lane.b32.xlu0 %v595, 32
    %v1300 = vpop.permute.xlu0 %1299
    %v1301 = vsel %vm144, %v1298, 0
    %v1303 = vsel %vm144, %v1300, 0
    %1305 = vmatprep.subr.mxu0 0.0
    %1306 = vmatpush1.xpose.msra.mxu0 0.0
    %1307 = vmatprep.subr.mxu0 0.0
    %1308 = vmatpush1.xpose.msra.mxu0 0.0
    %1309 = vmatprep.subr.mxu0 0.0
    %1310 = vmatpush1.xpose.msra.mxu0 0.0
    %1311 = vmatprep.subr.mxu0 0.0
    %1312 = vmatpush1.xpose.msra.mxu0 0.0
    %1313 = vmatprep.subr.mxu0 0.0
    %1314 = vmatpush1.xpose.msra.mxu0 0.0
    %1315 = vmatprep.subr.mxu0 0.0
    %1316 = vmatpush1.xpose.msra.mxu0 0.0
    %1317 = vmatprep.subr.mxu0 0.0
    %1318 = vmatpush1.xpose.msra.mxu0 0.0
    %1319 = vmatprep.subr.mxu0 0.0
    %1320 = vmatpush1.xpose.msra.mxu0 0.0
    %1321 = vmatprep.subr.mxu0 0.0
    %1322 = vmatpush1.xpose.msra.mxu0 0.0
    %1323 = vmatprep.subr.mxu0 0.0
    %1324 = vmatpush1.xpose.msra.mxu0 0.0
    %1325 = vmatprep.subr.mxu0 0.0
    %1326 = vmatpush1.xpose.msra.mxu0 0.0
    %1327 = vmatprep.subr.mxu0 0.0
    %1328 = vmatpush1.xpose.msra.mxu0 0.0
    %1329 = vmatprep.subr.mxu0 0.0
    %1330 = vmatpush1.xpose.msra.mxu0 0.0
    %1331 = vmatprep.subr.mxu0 0.0
    %1332 = vmatpush1.xpose.msra.mxu0 0.0
    %1333 = vmatprep.subr.mxu0 0.0
    %1334 = vmatpush1.xpose.msra.mxu0 0.0
    %1335 = vmatprep.subr.mxu0 0.0
    %1336 = vmatpush1.xpose.msra.mxu0 %v1303
    %1337 = vmatprep.subr.mxu0 0.0
    %1338 = vmatpush2.xpose.msra.mxu0 0.0
    %1339 = vmatprep.subr.mxu0 0.0
    %1340 = vmatpush2.xpose.msra.mxu0 0.0
    %1341 = vmatprep.subr.mxu0 0.0
    %1342 = vmatpush2.xpose.msra.mxu0 0.0
    %1343 = vmatprep.subr.mxu0 0.0
    %1344 = vmatpush2.xpose.msra.mxu0 0.0
    %1345 = vmatprep.subr.mxu0 0.0
    %1346 = vmatpush2.xpose.msra.mxu0 0.0
    %1347 = vmatprep.subr.mxu0 0.0
    %1348 = vmatpush2.xpose.msra.mxu0 0.0
    %1349 = vmatprep.subr.mxu0 0.0
    %1350 = vmatpush2.xpose.msra.mxu0 0.0
    %1351 = vmatprep.subr.mxu0 0.0
    %1352 = vmatpush2.xpose.msra.mxu0 0.0
    %1353 = vmatprep.subr.mxu0 0.0
    %1354 = vmatpush2.xpose.msra.mxu0 0.0
    %1355 = vmatprep.subr.mxu0 0.0
    %1356 = vmatpush2.xpose.msra.mxu0 0.0
    %1357 = vmatprep.subr.mxu0 0.0
    %1358 = vmatpush2.xpose.msra.mxu0 0.0
    %1359 = vmatprep.subr.mxu0 0.0
    %1360 = vmatpush2.xpose.msra.mxu0 0.0
    %1361 = vmatprep.subr.mxu0 0.0
    %1362 = vmatpush2.xpose.msra.mxu0 0.0
    %1363 = vmatprep.subr.mxu0 0.0
    %1364 = vmatpush2.xpose.msra.mxu0 0.0
    %1365 = vmatprep.subr.mxu0 0.0
    %1366 = vmatpush2.xpose.msra.mxu0 0.0
    %1367 = vmatprep.subr.mxu0 0.0
    %1368 = vmatpush2.xpose.msra.mxu0 0.0
    %1369 = vmatprep.mubr.f32.mxu0 0.0
    %1370 = vmatmul.mubr.f32.gmra.mxu0 %v1301
    %v1371 = vpop.f32.mrf.mxu0
    %v1372 = vadd.f32 0.0, %v1371
    %v1373 = vpop.f32.mrf.mxu0
    %1374 = vdwg.mxu0
    %v1375 = vsel %vm672, %v1294, -inf
    %1376 = vmax.xlane.f32.xlu0 %v1375
    %v1377 = vpop.xlane.xlu0 %1376
    %v1378 = vsel %vm672, %v1372, -inf
    %1379 = vmax.xlane.f32.xlu0 %v1378
    %v1380 = vpop.xlane.xlu0 %1379
    %v1381 = vsub.f32 %v1294, %v1377
    %v1382 = vsub.f32 %v1372, %v1380
    %v1383 = vmul.f32 %v1381, 1.442695
    %v1384 = vpow.pop %v1383
    %v1385 = vmul.f32 %v1382, 1.442695
    %v1386 = vpow.pop %v1385
    %v1387 = vsel %vm672, %v1384, 0.0
    %1388 = vadd.xlane.f32.xlu0 %v1387
    %v1389 = vpop.xlane.xlu0 %1388
    %v1390 = vsel %vm672, %v1386, 0.0
    %1391 = vadd.xlane.f32.xlu0 %v1390
    %v1392 = vpop.xlane.xlu0 %1391
    %v1393 = vrcp.pop %v1389
    %v1394 = vrcp.pop %v1392
    %v1395 = vmul.f32 %v1384, %v1393
    %v1396 = vmul.f32 %v1386, %v1394
    %1397 = vrot.lane.b32.xlu0 %v742, 96
    %v1398 = vpop.permute.xlu0 %1397
    %v1400 = vsel %vm743, %v1395, 0
    %v1402 = vsel %vm747, %v1398, 0
    %1404 = vmatprep.subr.mxu0 0.0
    %1405 = vmatpush1.msra.mxu0 0.0
    %1406 = vmatprep.subr.mxu0 0.0
    %1407 = vmatpush1.msra.mxu0 0.0
    %1408 = vmatprep.subr.mxu0 0.0
    %1409 = vmatpush1.msra.mxu0 0.0
    %1410 = vmatprep.subr.mxu0 0.0
    %1411 = vmatpush1.msra.mxu0 0.0
    %1412 = vmatprep.subr.mxu0 0.0
    %1413 = vmatpush1.msra.mxu0 0.0
    %1414 = vmatprep.subr.mxu0 0.0
    %1415 = vmatpush1.msra.mxu0 0.0
    %1416 = vmatprep.subr.mxu0 0.0
    %1417 = vmatpush1.msra.mxu0 0.0
    %1418 = vmatprep.subr.mxu0 0.0
    %1419 = vmatpush1.msra.mxu0 0.0
    %1420 = vmatprep.subr.mxu0 0.0
    %1421 = vmatpush1.msra.mxu0 0.0
    %1422 = vmatprep.subr.mxu0 0.0
    %1423 = vmatpush1.msra.mxu0 0.0
    %1424 = vmatprep.subr.mxu0 0.0
    %1425 = vmatpush1.msra.mxu0 0.0
    %1426 = vmatprep.subr.mxu0 0.0
    %1427 = vmatpush1.msra.mxu0 0.0
    %1428 = vmatprep.subr.mxu0 0.0
    %1429 = vmatpush1.msra.mxu0 0.0
    %1430 = vmatprep.subr.mxu0 0.0
    %1431 = vmatpush1.msra.mxu0 0.0
    %1432 = vmatprep.subr.mxu0 0.0
    %1433 = vmatpush1.msra.mxu0 0.0
    %1434 = vmatprep.subr.mxu0 0.0
    %1435 = vmatpush1.msra.mxu0 %v1402
    %1436 = vmatprep.subr.mxu0 0.0
    %1437 = vmatpush2.msra.mxu0 0.0
    %1438 = vmatprep.subr.mxu0 0.0
    %1439 = vmatpush2.msra.mxu0 0.0
    %1440 = vmatprep.subr.mxu0 0.0
    %1441 = vmatpush2.msra.mxu0 0.0
    %1442 = vmatprep.subr.mxu0 0.0
    %1443 = vmatpush2.msra.mxu0 0.0
    %1444 = vmatprep.subr.mxu0 0.0
    %1445 = vmatpush2.msra.mxu0 0.0
    %1446 = vmatprep.subr.mxu0 0.0
    %1447 = vmatpush2.msra.mxu0 0.0
    %1448 = vmatprep.subr.mxu0 0.0
    %1449 = vmatpush2.msra.mxu0 0.0
    %1450 = vmatprep.subr.mxu0 0.0
    %1451 = vmatpush2.msra.mxu0 0.0
    %1452 = vmatprep.subr.mxu0 0.0
    %1453 = vmatpush2.msra.mxu0 0.0
    %1454 = vmatprep.subr.mxu0 0.0
    %1455 = vmatpush2.msra.mxu0 0.0
    %1456 = vmatprep.subr.mxu0 0.0
    %1457 = vmatpush2.msra.mxu0 0.0
    %1458 = vmatprep.subr.mxu0 0.0
    %1459 = vmatpush2.msra.mxu0 0.0
    %1460 = vmatprep.subr.mxu0 0.0
    %1461 = vmatpush2.msra.mxu0 0.0
    %1462 = vmatprep.subr.mxu0 0.0
    %1463 = vmatpush2.msra.mxu0 0.0
    %1464 = vmatprep.subr.mxu0 0.0
    %1465 = vmatpush2.msra.mxu0 0.0
    %1466 = vmatprep.subr.mxu0 0.0
    %1467 = vmatpush2.msra.mxu0 0.0
    %1468 = vmatprep.mubr.f32.mxu0 0.0
    %1469 = vmatmul.mubr.f32.gmra.mxu0 %v1400
    %v1470 = vpop.f32.mrf.mxu0
    %v1471 = vadd.f32 0.0, %v1470
    %v1472 = vpop.f32.mrf.mxu0
    %1473 = vdwg.mxu0
    %1474 = vrot.lane.b32.xlu0 %v867, 96
    %v1475 = vpop.permute.xlu0 %1474
    %v1477 = vsel %vm743, %v1396, 0
    %v1479 = vsel %vm747, %v1475, 0
    %1481 = vmatprep.subr.mxu0 0.0
    %1482 = vmatpush1.msra.mxu0 0.0
    %1483 = vmatprep.subr.mxu0 0.0
    %1484 = vmatpush1.msra.mxu0 0.0
    %1485 = vmatprep.subr.mxu0 0.0
    %1486 = vmatpush1.msra.mxu0 0.0
    %1487 = vmatprep.subr.mxu0 0.0
    %1488 = vmatpush1.msra.mxu0 0.0
    %1489 = vmatprep.subr.mxu0 0.0
    %1490 = vmatpush1.msra.mxu0 0.0
    %1491 = vmatprep.subr.mxu0 0.0
    %1492 = vmatpush1.msra.mxu0 0.0
    %1493 = vmatprep.subr.mxu0 0.0
    %1494 = vmatpush1.msra.mxu0 0.0
    %1495 = vmatprep.subr.mxu0 0.0
    %1496 = vmatpush1.msra.mxu0 0.0
    %1497 = vmatprep.subr.mxu0 0.0
    %1498 = vmatpush1.msra.mxu0 0.0
    %1499 = vmatprep.subr.mxu0 0.0
    %1500 = vmatpush1.msra.mxu0 0.0
    %1501 = vmatprep.subr.mxu0 0.0
    %1502 = vmatpush1.msra.mxu0 0.0
    %1503 = vmatprep.subr.mxu0 0.0
    %1504 = vmatpush1.msra.mxu0 0.0
    %1505 = vmatprep.subr.mxu0 0.0
    %1506 = vmatpush1.msra.mxu0 0.0
    %1507 = vmatprep.subr.mxu0 0.0
    %1508 = vmatpush1.msra.mxu0 0.0
    %1509 = vmatprep.subr.mxu0 0.0
    %1510 = vmatpush1.msra.mxu0 0.0
    %1511 = vmatprep.subr.mxu0 0.0
    %1512 = vmatpush1.msra.mxu0 %v1479
    %1513 = vmatprep.subr.mxu0 0.0
    %1514 = vmatpush2.msra.mxu0 0.0
    %1515 = vmatprep.subr.mxu0 0.0
    %1516 = vmatpush2.msra.mxu0 0.0
    %1517 = vmatprep.subr.mxu0 0.0
    %1518 = vmatpush2.msra.mxu0 0.0
    %1519 = vmatprep.subr.mxu0 0.0
    %1520 = vmatpush2.msra.mxu0 0.0
    %1521 = vmatprep.subr.mxu0 0.0
    %1522 = vmatpush2.msra.mxu0 0.0
    %1523 = vmatprep.subr.mxu0 0.0
    %1524 = vmatpush2.msra.mxu0 0.0
    %1525 = vmatprep.subr.mxu0 0.0
    %1526 = vmatpush2.msra.mxu0 0.0
    %1527 = vmatprep.subr.mxu0 0.0
    %1528 = vmatpush2.msra.mxu0 0.0
    %1529 = vmatprep.subr.mxu0 0.0
    %1530 = vmatpush2.msra.mxu0 0.0
    %1531 = vmatprep.subr.mxu0 0.0
    %1532 = vmatpush2.msra.mxu0 0.0
    %1533 = vmatprep.subr.mxu0 0.0
    %1534 = vmatpush2.msra.mxu0 0.0
    %1535 = vmatprep.subr.mxu0 0.0
    %1536 = vmatpush2.msra.mxu0 0.0
    %1537 = vmatprep.subr.mxu0 0.0
    %1538 = vmatpush2.msra.mxu0 0.0
    %1539 = vmatprep.subr.mxu0 0.0
    %1540 = vmatpush2.msra.mxu0 0.0
    %1541 = vmatprep.subr.mxu0 0.0
    %1542 = vmatpush2.msra.mxu0 0.0
    %1543 = vmatprep.subr.mxu0 0.0
    %1544 = vmatpush2.msra.mxu0 0.0
    %1545 = vmatprep.mubr.f32.mxu0 0.0
    %1546 = vmatmul.mubr.f32.gmra.mxu0 %v1477
    %v1547 = vpop.f32.mrf.mxu0
    %v1548 = vadd.f32 0.0, %v1547
    %v1549 = vpop.f32.mrf.mxu0
    %1550 = vdwg.mxu0
    %v1551 = vld [vmem:[%s3 + $0x20] sm:$0xff]
    %v1552 = vld [vmem:[%s3 + $0x28] sm:$0xff]
    %v1553 = vld [vmem:[%s3 + $0x30] sm:$0xff]
    %v1554 = vld [vmem:[%s3 + $0x38] sm:$0xff]
    %v1557 = vcombine.high %v1471, %v1471
    %v1559 = vunpack.c.l.s4 1966171168
    %v1560 = vunpack.c.0.s8 %v1559
    %v1561 = vlaneseq
    %v1562 = vshrl.u32 %v1561, 7
    %v1563 = vsub.s32 %v1560, %v1562
    %v1564 = vrot.slane %v1471, %v1563
    %v1566 = vunpack.c.l.s4 1966171168
    %v1567 = vunpack.c.0.s8 %v1566
    %v1568 = vlaneseq
    %v1569 = vshrl.u32 %v1568, 7
    %v1570 = vsub.s32 %v1567, %v1569
    %v1571 = vrot.slane %v1557, %v1570
    %v1572 = vcombine.high %v1564, %v1564
    %v1573 = vcombine.high %v1571, %v1571
    %v1575 = vunpack.c.l.s4 1966171168
    %v1576 = vunpack.c.0.s8 %v1575
    %v1577 = vlaneseq
    %v1578 = vshrl.u32 %v1577, 7
    %v1579 = vsub.s32 %v1576, %v1578
    %v1580 = vrot.slane %v1564, %v1579
    %v1582 = vunpack.c.l.s4 1966171168
    %v1583 = vunpack.c.0.s8 %v1582
    %v1584 = vlaneseq
    %v1585 = vshrl.u32 %v1584, 7
    %v1586 = vsub.s32 %v1583, %v1585
    %v1587 = vrot.slane %v1571, %v1586
    %v1589 = vunpack.c.l.s4 1966171168
    %v1590 = vunpack.c.0.s8 %v1589
    %v1591 = vlaneseq
    %v1592 = vshrl.u32 %v1591, 7
    %v1593 = vsub.s32 %v1590, %v1592
    %v1594 = vrot.slane %v1572, %v1593
    %v1596 = vunpack.c.l.s4 1966171168
    %v1597 = vunpack.c.0.s8 %v1596
    %v1598 = vlaneseq
    %v1599 = vshrl.u32 %v1598, 7
    %v1600 = vsub.s32 %v1597, %v1599
    %v1601 = vrot.slane %v1573, %v1600
    %v1602 = vcombine.high %v1580, %v1580
    %v1603 = vcombine.high %v1587, %v1587
    %v1604 = vcombine.high %v1594, %v1594
    %v1605 = vcombine.high %v1548, %v1548
    %v1607 = vunpack.c.l.s4 1966171168
    %v1608 = vunpack.c.0.s8 %v1607
    %v1609 = vlaneseq
    %v1610 = vshrl.u32 %v1609, 7
    %v1611 = vsub.s32 %v1608, %v1610
    %v1612 = vrot.slane %v1548, %v1611
    %v1614 = vunpack.c.l.s4 1966171168
    %v1615 = vunpack.c.0.s8 %v1614
    %v1616 = vlaneseq
    %v1617 = vshrl.u32 %v1616, 7
    %v1618 = vsub.s32 %v1615, %v1617
    %v1619 = vrot.slane %v1605, %v1618
    %v1620 = vcombine.high %v1612, %v1612
    %v1621 = vcombine.high %v1619, %v1619
    %v1623 = vunpack.c.l.s4 1966171168
    %v1624 = vunpack.c.0.s8 %v1623
    %v1625 = vlaneseq
    %v1626 = vshrl.u32 %v1625, 7
    %v1627 = vsub.s32 %v1624, %v1626
    %v1628 = vrot.slane %v1612, %v1627
    %v1630 = vunpack.c.l.s4 1966171168
    %v1631 = vunpack.c.0.s8 %v1630
    %v1632 = vlaneseq
    %v1633 = vshrl.u32 %v1632, 7
    %v1634 = vsub.s32 %v1631, %v1633
    %v1635 = vrot.slane %v1619, %v1634
    %v1637 = vunpack.c.l.s4 1966171168
    %v1638 = vunpack.c.0.s8 %v1637
    %v1639 = vlaneseq
    %v1640 = vshrl.u32 %v1639, 7
    %v1641 = vsub.s32 %v1638, %v1640
    %v1642 = vrot.slane %v1620, %v1641
    %v1644 = vunpack.c.l.s4 1966171168
    %v1645 = vunpack.c.0.s8 %v1644
    %v1646 = vlaneseq
    %v1647 = vshrl.u32 %v1646, 7
    %v1648 = vsub.s32 %v1645, %v1647
    %v1649 = vrot.slane %v1621, %v1648
    %v1650 = vcombine.high %v1628, %v1628
    %v1651 = vcombine.high %v1635, %v1635
    %v1652 = vcombine.high %v1642, %v1642
    %v1653 = vcombine.low %v1580, %v1594
    %v1654 = vcombine.low %v1602, %v1604
    %v1655 = vcombine.low %v1587, %v1601
    %v1656 = vcombine.low %v1603, %v1628
    %v1658 = vunpack.c.l.s4 1966171168
    %v1659 = vunpack.c.0.s8 %v1658
    %v1660 = vlaneseq
    %v1661 = vshrl.u32 %v1660, 7
    %v1662 = vsub.s32 %v1659, %v1661
    %v1663 = vrot.slane %v1653, %v1662
    %v1665 = vunpack.c.l.s4 1966171168
    %v1666 = vunpack.c.0.s8 %v1665
    %v1667 = vlaneseq
    %v1668 = vshrl.u32 %v1667, 7
    %v1669 = vsub.s32 %v1666, %v1668
    %v1670 = vrot.slane %v1654, %v1669
    %v1672 = vunpack.c.l.s4 1966171168
    %v1673 = vunpack.c.0.s8 %v1672
    %v1674 = vlaneseq
    %v1675 = vshrl.u32 %v1674, 7
    %v1676 = vsub.s32 %v1673, %v1675
    %v1677 = vrot.slane %v1655, %v1676
    %v1679 = vunpack.c.l.s4 1966171168
    %v1680 = vunpack.c.0.s8 %v1679
    %v1681 = vlaneseq
    %v1682 = vshrl.u32 %v1681, 7
    %v1683 = vsub.s32 %v1680, %v1682
    %v1684 = vrot.slane %v1656, %v1683
    %v1685 = vcombine.low %v1663, %v1670
    %v1686 = vcombine.low %v1677, %v1684
    %v1688 = vunpack.c.l.s4 1966171168
    %v1689 = vunpack.c.0.s8 %v1688
    %v1690 = vlaneseq
    %v1691 = vshrl.u32 %v1690, 7
    %v1692 = vsub.s32 %v1689, %v1691
    %v1693 = vrot.slane %v1685, %v1692
    %v1695 = vunpack.c.l.s4 1966171168
    %v1696 = vunpack.c.0.s8 %v1695
    %v1697 = vlaneseq
    %v1698 = vshrl.u32 %v1697, 7
    %v1699 = vsub.s32 %v1696, %v1698
    %v1700 = vrot.slane %v1686, %v1699
    %v1701 = vcombine.low %v1693, %v1700
    %v1702 = vcombine.low %v1642, %v1650
    %v1703 = vcombine.low %v1652, %v1635
    %v1704 = vcombine.low %v1649, %v1651
    %v1706 = vunpack.c.l.s4 1966171168
    %v1707 = vunpack.c.0.s8 %v1706
    %v1708 = vlaneseq
    %v1709 = vshrl.u32 %v1708, 7
    %v1710 = vsub.s32 %v1707, %v1709
    %v1711 = vrot.slane %v1702, %v1710
    %v1713 = vunpack.c.l.s4 1966171168
    %v1714 = vunpack.c.0.s8 %v1713
    %v1715 = vlaneseq
    %v1716 = vshrl.u32 %v1715, 7
    %v1717 = vsub.s32 %v1714, %v1716
    %v1718 = vrot.slane %v1703, %v1717
    %v1720 = vunpack.c.l.s4 1966171168
    %v1721 = vunpack.c.0.s8 %v1720
    %v1722 = vlaneseq
    %v1723 = vshrl.u32 %v1722, 7
    %v1724 = vsub.s32 %v1721, %v1723
    %v1725 = vrot.slane %v1704, %v1724
    %v1726 = vcombine.low %v1711, %v1718
    %v1728 = vunpack.c.l.s4 1966171168
    %v1729 = vunpack.c.0.s8 %v1728
    %v1730 = vlaneseq
    %v1731 = vshrl.u32 %v1730, 7
    %v1732 = vsub.s32 %v1729, %v1731
    %v1733 = vrot.slane %v1726, %v1732
    %v1735 = vunpack.c.l.s4 1966171168
    %v1736 = vunpack.c.0.s8 %v1735
    %v1737 = vlaneseq
    %v1738 = vshrl.u32 %v1737, 7
    %v1739 = vsub.s32 %v1736, %v1738
    %v1740 = vrot.slane %v1725, %v1739
    %v1741 = vcombine.low %v1733, %v1740
    %v1742 = vsel %vm144, %v1701, 0
    %v1744 = vsel %vm144, %v1741, 0
    %1746 = vmatprep.subr.mxu0 0.0
    %1747 = vmatpush1.msra.mxu0 0.0
    %1748 = vmatprep.subr.mxu0 0.0
    %1749 = vmatpush1.msra.mxu0 0.0
    %1750 = vmatprep.subr.mxu0 0.0
    %1751 = vmatpush1.msra.mxu0 0.0
    %1752 = vmatprep.subr.mxu0 0.0
    %1753 = vmatpush1.msra.mxu0 0.0
    %1754 = vmatprep.subr.mxu0 0.0
    %1755 = vmatpush1.msra.mxu0 0.0
    %1756 = vmatprep.subr.mxu0 0.0
    %1757 = vmatpush1.msra.mxu0 0.0
    %1758 = vmatprep.subr.mxu0 0.0
    %1759 = vmatpush1.msra.mxu0 0.0
    %1760 = vmatprep.subr.mxu0 0.0
    %1761 = vmatpush1.msra.mxu0 0.0
    %1762 = vmatprep.subr.mxu0 0.0
    %1763 = vmatpush1.msra.mxu0 0.0
    %1764 = vmatprep.subr.mxu0 0.0
    %1765 = vmatpush1.msra.mxu0 0.0
    %1766 = vmatprep.subr.mxu0 0.0
    %1767 = vmatpush1.msra.mxu0 0.0
    %1768 = vmatprep.subr.mxu0 0.0
    %1769 = vmatpush1.msra.mxu0 0.0
    %1770 = vmatprep.subr.mxu0 0.0
    %1771 = vmatpush1.msra.mxu0 %v1554
    %1772 = vmatprep.subr.mxu0 0.0
    %1773 = vmatpush1.msra.mxu0 %v1553
    %1774 = vmatprep.subr.mxu0 0.0
    %1775 = vmatpush1.msra.mxu0 %v1552
    %1776 = vmatprep.subr.mxu0 0.0
    %1777 = vmatpush1.msra.mxu0 %v1551
    %1778 = vmatprep.subr.mxu0 0.0
    %1779 = vmatpush2.msra.mxu0 0.0
    %1780 = vmatprep.subr.mxu0 0.0
    %1781 = vmatpush2.msra.mxu0 0.0
    %1782 = vmatprep.subr.mxu0 0.0
    %1783 = vmatpush2.msra.mxu0 0.0
    %1784 = vmatprep.subr.mxu0 0.0
    %1785 = vmatpush2.msra.mxu0 0.0
    %1786 = vmatprep.subr.mxu0 0.0
    %1787 = vmatpush2.msra.mxu0 0.0
    %1788 = vmatprep.subr.mxu0 0.0
    %1789 = vmatpush2.msra.mxu0 0.0
    %1790 = vmatprep.subr.mxu0 0.0
    %1791 = vmatpush2.msra.mxu0 0.0
    %1792 = vmatprep.subr.mxu0 0.0
    %1793 = vmatpush2.msra.mxu0 0.0
    %1794 = vmatprep.subr.mxu0 0.0
    %1795 = vmatpush2.msra.mxu0 0.0
    %1796 = vmatprep.subr.mxu0 0.0
    %1797 = vmatpush2.msra.mxu0 0.0
    %1798 = vmatprep.subr.mxu0 0.0
    %1799 = vmatpush2.msra.mxu0 0.0
    %1800 = vmatprep.subr.mxu0 0.0
    %1801 = vmatpush2.msra.mxu0 0.0
    %1802 = vmatprep.subr.mxu0 0.0
    %1803 = vmatpush2.msra.mxu0 0.0
    %1804 = vmatprep.subr.mxu0 0.0
    %1805 = vmatpush2.msra.mxu0 0.0
    %1806 = vmatprep.subr.mxu0 0.0
    %1807 = vmatpush2.msra.mxu0 0.0
    %1808 = vmatprep.subr.mxu0 0.0
    %1809 = vmatpush2.msra.mxu0 0.0
    %1810 = vmatprep.mubr.f32.mxu0 0.0
    %1811 = vmatmul.mubr.f32.gmra.mxu0 %v1742
    %v1812 = vpop.f32.mrf.mxu0
    %v1813 = vadd.f32 0.0, %v1812
    %v1814 = vpop.f32.mrf.mxu0
    %1815 = vmatprep.mubr.f32.mxu0 0.0
    %1816 = vmatmul.mubr.f32.gmra.mxu0 %v1744
    %v1817 = vpop.f32.mrf.mxu0
    %v1818 = vadd.f32 0.0, %v1817
    %v1819 = vpop.f32.mrf.mxu0
    %1820 = vdwg.mxu0
    %v1821 = vadd.f32 %v1217, %v1813
    %v1822 = vadd.f32 %v1218, %v1818
    %v1823 = vadd.f32 %v1821, %v106
    %v1824 = vadd.f32 %v1822, %v111
    %v1825 = vsel %vm144, %v1823, 0.0
    %1826 = vadd.xlane.f32.xlu0 %v1825
    %v1827 = vpop.xlane.xlu0 %1826
    %vm1828 = vcmask 259072
    %v1829 = vsel %vm1828, %v1824, 0.0
    %1830 = vadd.xlane.f32.xlu0 %v1829
    %v1831 = vpop.xlane.xlu0 %1830
    %v1832 = vrcp.pop 32.0
    %v1833 = vmul.f32 %v1827, %v1832
    %v1834 = vmul.f32 %v1831, %v1832
    %v1835 = vsub.f32 %v1823, %v1833
    %v1836 = vsub.f32 %v1824, %v1834
    %v1837 = vmul.f32 %v1835, %v1835
    %v1838 = vmul.f32 %v1836, %v1836
    %v1839 = vsel %vm144, %v1837, 0.0
    %1840 = vadd.xlane.f32.xlu0 %v1839
    %v1841 = vpop.xlane.xlu0 %1840
    %v1842 = vsel %vm1828, %v1838, 0.0
    %1843 = vadd.xlane.f32.xlu0 %v1842
    %v1844 = vpop.xlane.xlu0 %1843
    %v1845 = vmul.f32 %v1841, %v1832
    %v1846 = vmul.f32 %v1844, %v1832
    %v1847 = vadd.f32 %v1845, 1e-05
    %v1848 = vadd.f32 %v1846, 1e-05
    %v1849 = vrsqrt.pop %v1847
    %v1850 = vrsqrt.pop %v1848
    %v1851 = vmul.f32 %v1835, %v1849
    %v1852 = vmul.f32 %v1836, %v1850
    %v1853 = vlaneseq
    %v1854 = vshrl.u32 %v1853, 7
    %v1855 = vsub.s32 1, %v1854
    %v1856 = vrot.slane %v143, %v1855
    %v1857 = vmul.f32 %v1851, %v1856
    %v1858 = vmul.f32 %v1852, %v1856
    %v1859 = vlaneseq
    %v1860 = vshrl.u32 %v1859, 7
    %v1861 = vsub.s32 2, %v1860
    %v1862 = vrot.slane %v143, %v1861
    %v1863 = vadd.f32 %v1857, %v1862
    %v1864 = vadd.f32 %v1858, %v1862
    %v1865 = vlaneseq
    %v1866 = vshrl.u32 %v1865, 7
    %v1867 = vsub.s32 0, %v1866
    %v1868 = vrot.slane %v126, %v1867
    %v1870 = vsel %vm144, %v1863, 0
    %v1873 = vsel %vm144, %v1864, 0
    %1875 = vmatprep.subr.mxu0 0.0
    %1876 = vmatpush1.msra.mxu0 0.0
    %1877 = vmatprep.subr.mxu0 0.0
    %1878 = vmatpush1.msra.mxu0 0.0
    %1879 = vmatprep.subr.mxu0 0.0
    %1880 = vmatpush1.msra.mxu0 0.0
    %1881 = vmatprep.subr.mxu0 0.0
    %1882 = vmatpush1.msra.mxu0 0.0
    %1883 = vmatprep.subr.mxu0 0.0
    %1884 = vmatpush1.msra.mxu0 0.0
    %1885 = vmatprep.subr.mxu0 0.0
    %1886 = vmatpush1.msra.mxu0 0.0
    %1887 = vmatprep.subr.mxu0 0.0
    %1888 = vmatpush1.msra.mxu0 0.0
    %1889 = vmatprep.subr.mxu0 0.0
    %1890 = vmatpush1.msra.mxu0 0.0
    %1891 = vmatprep.subr.mxu0 0.0
    %1892 = vmatpush1.msra.mxu0 0.0
    %1893 = vmatprep.subr.mxu0 0.0
    %1894 = vmatpush1.msra.mxu0 0.0
    %1895 = vmatprep.subr.mxu0 0.0
    %1896 = vmatpush1.msra.mxu0 0.0
    %1897 = vmatprep.subr.mxu0 0.0
    %1898 = vmatpush1.msra.mxu0 0.0
    %1899 = vmatprep.subr.mxu0 0.0
    %1900 = vmatpush1.msra.mxu0 %v125
    %1901 = vmatprep.subr.mxu0 0.0
    %1902 = vmatpush1.msra.mxu0 %v124
    %1903 = vmatprep.subr.mxu0 0.0
    %1904 = vmatpush1.msra.mxu0 %v123
    %1905 = vmatprep.subr.mxu0 0.0
    %1906 = vmatpush1.msra.mxu0 %v122
    %1907 = vmatprep.subr.mxu0 0.0
    %1908 = vmatpush2.msra.mxu0 0.0
    %1909 = vmatprep.subr.mxu0 0.0
    %1910 = vmatpush2.msra.mxu0 0.0
    %1911 = vmatprep.subr.mxu0 0.0
    %1912 = vmatpush2.msra.mxu0 0.0
    %1913 = vmatprep.subr.mxu0 0.0
    %1914 = vmatpush2.msra.mxu0 0.0
    %1915 = vmatprep.subr.mxu0 0.0
    %1916 = vmatpush2.msra.mxu0 0.0
    %1917 = vmatprep.subr.mxu0 0.0
    %1918 = vmatpush2.msra.mxu0 0.0
    %1919 = vmatprep.subr.mxu0 0.0
    %1920 = vmatpush2.msra.mxu0 0.0
    %1921 = vmatprep.subr.mxu0 0.0
    %1922 = vmatpush2.msra.mxu0 0.0
    %1923 = vmatprep.subr.mxu0 0.0
    %1924 = vmatpush2.msra.mxu0 0.0
    %1925 = vmatprep.subr.mxu0 0.0
    %1926 = vmatpush2.msra.mxu0 0.0
    %1927 = vmatprep.subr.mxu0 0.0
    %1928 = vmatpush2.msra.mxu0 0.0
    %1929 = vmatprep.subr.mxu0 0.0
    %1930 = vmatpush2.msra.mxu0 0.0
    %1931 = vmatprep.subr.mxu0 0.0
    %1932 = vmatpush2.msra.mxu0 0.0
    %1933 = vmatprep.subr.mxu0 0.0
    %1934 = vmatpush2.msra.mxu0 0.0
    %1935 = vmatprep.subr.mxu0 0.0
    %1936 = vmatpush2.msra.mxu0 0.0
    %1937 = vmatprep.subr.mxu0 0.0
    %1938 = vmatpush2.msra.mxu0 0.0
    %1939 = vmatprep.mubr.f32.mxu0 0.0
    %1940 = vmatmul.mubr.f32.gmra.mxu0 %v1870
    %v1941 = vpop.f32.mrf.mxu0
    %v1942 = vadd.f32 %v1868, %v1941
    %v1943 = vpop.f32.mrf.mxu0
    %1944 = vmatprep.mubr.f32.mxu0 0.0
    %1945 = vmatmul.mubr.f32.gmra.mxu0 %v1873
    %v1946 = vpop.f32.mrf.mxu0
    %v1947 = vadd.f32 %v1868, %v1946
    %v1948 = vpop.f32.mrf.mxu0
    %1949 = vdwg.mxu0
    %v1950 = vmax.f32 %v1942, 0.0
    %v1951 = vmax.f32 %v1947, 0.0
    %v1952 = vlaneseq
    %v1953 = vshrl.u32 %v1952, 7
    %v1954 = vsub.s32 3, %v1953
    %v1955 = vrot.slane %v143, %v1954
    %1956 = vmatprep.subr.mxu0 0.0
    %1957 = vmatpush1.msra.mxu0 %v142
    %1958 = vmatprep.subr.mxu0 0.0
    %1959 = vmatpush1.msra.mxu0 %v141
    %1960 = vmatprep.subr.mxu0 0.0
    %1961 = vmatpush1.msra.mxu0 %v140
    %1962 = vmatprep.subr.mxu0 0.0
    %1963 = vmatpush1.msra.mxu0 %v139
    %1964 = vmatprep.subr.mxu0 0.0
    %1965 = vmatpush1.msra.mxu0 %v138
    %1966 = vmatprep.subr.mxu0 0.0
    %1967 = vmatpush1.msra.mxu0 %v137
    %1968 = vmatprep.subr.mxu0 0.0
    %1969 = vmatpush1.msra.mxu0 %v136
    %1970 = vmatprep.subr.mxu0 0.0
    %1971 = vmatpush1.msra.mxu0 %v135
    %1972 = vmatprep.subr.mxu0 0.0
    %1973 = vmatpush1.msra.mxu0 %v134
    %1974 = vmatprep.subr.mxu0 0.0
    %1975 = vmatpush1.msra.mxu0 %v133
    %1976 = vmatprep.subr.mxu0 0.0
    %1977 = vmatpush1.msra.mxu0 %v132
    %1978 = vmatprep.subr.mxu0 0.0
    %1979 = vmatpush1.msra.mxu0 %v131
    %1980 = vmatprep.subr.mxu0 0.0
    %1981 = vmatpush1.msra.mxu0 %v130
    %1982 = vmatprep.subr.mxu0 0.0
    %1983 = vmatpush1.msra.mxu0 %v129
    %1984 = vmatprep.subr.mxu0 0.0
    %1985 = vmatpush1.msra.mxu0 %v128
    %1986 = vmatprep.subr.mxu0 0.0
    %1987 = vmatpush1.msra.mxu0 %v127
    %1988 = vmatprep.subr.mxu0 0.0
    %1989 = vmatpush2.msra.mxu0 0.0
    %1990 = vmatprep.subr.mxu0 0.0
    %1991 = vmatpush2.msra.mxu0 0.0
    %1992 = vmatprep.subr.mxu0 0.0
    %1993 = vmatpush2.msra.mxu0 0.0
    %1994 = vmatprep.subr.mxu0 0.0
    %1995 = vmatpush2.msra.mxu0 0.0
    %1996 = vmatprep.subr.mxu0 0.0
    %1997 = vmatpush2.msra.mxu0 0.0
    %1998 = vmatprep.subr.mxu0 0.0
    %1999 = vmatpush2.msra.mxu0 0.0
    %2000 = vmatprep.subr.mxu0 0.0
    %2001 = vmatpush2.msra.mxu0 0.0
    %2002 = vmatprep.subr.mxu0 0.0
    %2003 = vmatpush2.msra.mxu0 0.0
    %2004 = vmatprep.subr.mxu0 0.0
    %2005 = vmatpush2.msra.mxu0 0.0
    %2006 = vmatprep.subr.mxu0 0.0
    %2007 = vmatpush2.msra.mxu0 0.0
    %2008 = vmatprep.subr.mxu0 0.0
    %2009 = vmatpush2.msra.mxu0 0.0
    %2010 = vmatprep.subr.mxu0 0.0
    %2011 = vmatpush2.msra.mxu0 0.0
    %2012 = vmatprep.subr.mxu0 0.0
    %2013 = vmatpush2.msra.mxu0 0.0
    %2014 = vmatprep.subr.mxu0 0.0
    %2015 = vmatpush2.msra.mxu0 0.0
    %2016 = vmatprep.subr.mxu0 0.0
    %2017 = vmatpush2.msra.mxu0 0.0
    %2018 = vmatprep.subr.mxu0 0.0
    %2019 = vmatpush2.msra.mxu0 0.0
    %2020 = vmatprep.mubr.f32.mxu0 0.0
    %2021 = vmatmul.mubr.f32.gmra.mxu0 %v1950
    %v2022 = vpop.f32.mrf.mxu0
    %v2023 = vadd.f32 %v1955, %v2022
    %v2024 = vpop.f32.mrf.mxu0
    %2025 = vmatprep.mubr.f32.mxu0 0.0
    %2026 = vmatmul.mubr.f32.gmra.mxu0 %v1951
    %v2027 = vpop.f32.mrf.mxu0
    %v2028 = vadd.f32 %v1955, %v2027
    %v2029 = vpop.f32.mrf.mxu0
    %2030 = vdwg.mxu0
    %v2031 = vadd.f32 %v2023, %v1863
    %v2032 = vadd.f32 %v2028, %v1864
    %v2033 = vsel %vm144, %v2031, 0.0
    %2034 = vadd.xlane.f32.xlu0 %v2033
    %v2035 = vpop.xlane.xlu0 %2034
    %v2036 = vsel %vm1828, %v2032, 0.0
    %2037 = vadd.xlane.f32.xlu0 %v2036
    %v2038 = vpop.xlane.xlu0 %2037
    %v2039 = vmul.f32 %v2035, %v1832
    %v2040 = vmul.f32 %v2038, %v1832
    %v2041 = vsub.f32 %v2031, %v2039
    %v2042 = vsub.f32 %v2032, %v2040
    %v2043 = vmul.f32 %v2041, %v2041
    %v2044 = vmul.f32 %v2042, %v2042
    %v2045 = vsel %vm144, %v2043, 0.0
    %2046 = vadd.xlane.f32.xlu0 %v2045
    %v2047 = vpop.xlane.xlu0 %2046
    %v2048 = vsel %vm1828, %v2044, 0.0
    %2049 = vadd.xlane.f32.xlu0 %v2048
    %v2050 = vpop.xlane.xlu0 %2049
    %v2051 = vmul.f32 %v2047, %v1832
    %v2052 = vmul.f32 %v2050, %v1832
    %v2053 = vadd.f32 %v2051, 1e-05
    %v2054 = vadd.f32 %v2052, 1e-05
    %v2055 = vrsqrt.pop %v2053
    %v2056 = vrsqrt.pop %v2054
    %v2057 = vmul.f32 %v2041, %v2055
    %v2058 = vmul.f32 %v2042, %v2056
    %v2059 = vlaneseq
    %v2060 = vshrl.u32 %v2059, 7
    %v2061 = vsub.s32 4, %v2060
    %v2062 = vrot.slane %v143, %v2061
    %v2063 = vmul.f32 %v2057, %v2062
    %v2064 = vmul.f32 %v2058, %v2062
    %v2065 = vlaneseq
    %v2066 = vshrl.u32 %v2065, 7
    %v2067 = vsub.s32 5, %v2066
    %v2068 = vrot.slane %v143, %v2067
    %v2069 = vadd.f32 %v2063, %v2068
    %v2070 = vadd.f32 %v2064, %v2068
    %v2071 = vld [vmem:[%s2 + $0x40] sm:$0xff]
    %v2072 = vld [vmem:[%s2 + $0x48] sm:$0xff]
    %v2073 = vld [vmem:[%s2 + $0x50] sm:$0xff]
    %v2074 = vld [vmem:[%s2 + $0x58] sm:$0xff]
    %v2075 = vld [vmem:[%s2 + $0x60] sm:$0xff]
    %v2076 = vld [vmem:[%s2 + $0x68] sm:$0xff]
    %v2077 = vld [vmem:[%s2 + $0x70] sm:$0xff]
    %v2078 = vld [vmem:[%s2 + $0x78] sm:$0xff]
    %v2079 = vld [vmem:[%s2 + $0xd0] sm:$0xff]
    %v2080 = vld [vmem:[%s2 + $0xe0] sm:$0xff]
    %v2081 = vld [vmem:[%s2 + $0xf0] sm:$0xff]
    %v2082 = vld [vmem:[%s2 + $0x100] sm:$0xff]
    %v2083 = vld [vmem:[%s2 + $0x110] sm:$0x1]
    %v2084 = vld [vmem:[%s3 + $0x108] sm:$0xff]
    %v2085 = vld [vmem:[%s3 + $0x110] sm:$0xff]
    %v2086 = vld [vmem:[%s3 + $0x118] sm:$0xff]
    %v2087 = vld [vmem:[%s3 + $0x120] sm:$0xff]
    %v2088 = vld [vmem:[%s3 + $0x128] sm:$0xff]
    %v2089 = vld [vmem:[%s3 + $0x130] sm:$0xff]
    %v2090 = vld [vmem:[%s3 + $0x138] sm:$0xff]
    %v2091 = vld [vmem:[%s3 + $0x140] sm:$0xff]
    %v2092 = vld [vmem:[%s3 + $0x148] sm:$0xff]
    %v2093 = vld [vmem:[%s3 + $0x150] sm:$0xff]
    %v2094 = vld [vmem:[%s3 + $0x158] sm:$0xff]
    %v2095 = vld [vmem:[%s3 + $0x160] sm:$0xff]
    %v2096 = vld [vmem:[%s3 + $0x168] sm:$0xff]
    %v2097 = vld [vmem:[%s3 + $0x170] sm:$0xff]
    %v2098 = vld [vmem:[%s3 + $0x178] sm:$0xff]
    %v2099 = vld [vmem:[%s3 + $0x180] sm:$0xff]
    %v2100 = vld [vmem:[%s3 + $0x188] sm:$0x3f]
    %v2102 = vsel %vm144, %v2069, 0
    %v2105 = vsel %vm144, %v2070, 0
    %2107 = vmatprep.subr.mxu0 0.0
    %2108 = vmatpush1.msra.mxu0 0.0
    %2109 = vmatprep.subr.mxu0 0.0
    %2110 = vmatpush1.msra.mxu0 0.0
    %2111 = vmatprep.subr.mxu0 0.0
    %2112 = vmatpush1.msra.mxu0 0.0
    %2113 = vmatprep.subr.mxu0 0.0
    %2114 = vmatpush1.msra.mxu0 0.0
    %2115 = vmatprep.subr.mxu0 0.0
    %2116 = vmatpush1.msra.mxu0 0.0
    %2117 = vmatprep.subr.mxu0 0.0
    %2118 = vmatpush1.msra.mxu0 0.0
    %2119 = vmatprep.subr.mxu0 0.0
    %2120 = vmatpush1.msra.mxu0 0.0
    %2121 = vmatprep.subr.mxu0 0.0
    %2122 = vmatpush1.msra.mxu0 0.0
    %2123 = vmatprep.subr.mxu0 0.0
    %2124 = vmatpush1.msra.mxu0 0.0
    %2125 = vmatprep.subr.mxu0 0.0
    %2126 = vmatpush1.msra.mxu0 0.0
    %2127 = vmatprep.subr.mxu0 0.0
    %2128 = vmatpush1.msra.mxu0 0.0
    %2129 = vmatprep.subr.mxu0 0.0
    %2130 = vmatpush1.msra.mxu0 0.0
    %2131 = vmatprep.subr.mxu0 %v2078
    %2132 = vmatpush1.msra.mxu0 %v2077
    %2133 = vmatprep.subr.mxu0 %v2076
    %2134 = vmatpush1.msra.mxu0 %v2075
    %2135 = vmatprep.subr.mxu0 %v2074
    %2136 = vmatpush1.msra.mxu0 %v2073
    %2137 = vmatprep.subr.mxu0 %v2072
    %2138 = vmatpush1.msra.mxu0 %v2071
    %2139 = vmatprep.subr.mxu0 0.0
    %2140 = vmatpush2.msra.mxu0 0.0
    %2141 = vmatprep.subr.mxu0 0.0
    %2142 = vmatpush2.msra.mxu0 0.0
    %2143 = vmatprep.subr.mxu0 0.0
    %2144 = vmatpush2.msra.mxu0 0.0
    %2145 = vmatprep.subr.mxu0 0.0
    %2146 = vmatpush2.msra.mxu0 0.0
    %2147 = vmatprep.subr.mxu0 0.0
    %2148 = vmatpush2.msra.mxu0 0.0
    %2149 = vmatprep.subr.mxu0 0.0
    %2150 = vmatpush2.msra.mxu0 0.0
    %2151 = vmatprep.subr.mxu0 0.0
    %2152 = vmatpush2.msra.mxu0 0.0
    %2153 = vmatprep.subr.mxu0 0.0
    %2154 = vmatpush2.msra.mxu0 0.0
    %2155 = vmatprep.subr.mxu0 0.0
    %2156 = vmatpush2.msra.mxu0 0.0
    %2157 = vmatprep.subr.mxu0 0.0
    %2158 = vmatpush2.msra.mxu0 0.0
    %2159 = vmatprep.subr.mxu0 0.0
    %2160 = vmatpush2.msra.mxu0 0.0
    %2161 = vmatprep.subr.mxu0 0.0
    %2162 = vmatpush2.msra.mxu0 0.0
    %2163 = vmatprep.subr.mxu0 0.0
    %2164 = vmatpush2.msra.mxu0 0.0
    %2165 = vmatprep.subr.mxu0 0.0
    %2166 = vmatpush2.msra.mxu0 0.0
    %2167 = vmatprep.subr.mxu0 0.0
    %2168 = vmatpush2.msra.mxu0 0.0
    %2169 = vmatprep.subr.mxu0 0.0
    %2170 = vmatpush2.msra.mxu0 0.0
    %2171 = vmatprep.mubr.f32.mxu0 0.0
    %2172 = vmatmul.mubr.f32.gmra.mxu0 %v2102
    %v2173 = vpop.f32.mrf.mxu0
    %v2174 = vadd.f32 0.0, %v2173
    %v2175 = vpop.f32.mrf.mxu0
    %v2176 = vadd.f32 0.0, %v2175
    %2177 = vmatprep.mubr.f32.mxu0 0.0
    %2178 = vmatmul.mubr.f32.gmra.mxu0 %v2105
    %v2179 = vpop.f32.mrf.mxu0
    %v2180 = vadd.f32 0.0, %v2179
    %v2181 = vpop.f32.mrf.mxu0
    %v2182 = vadd.f32 0.0, %v2181
    %2183 = vdwg.mxu0
    %v2186 = vcombine.high %v2174, %v2174
    %v2188 = vunpack.c.l.s4 1966171168
    %v2189 = vunpack.c.0.s8 %v2188
    %v2190 = vlaneseq
    %v2191 = vshrl.u32 %v2190, 7
    %v2192 = vsub.s32 %v2189, %v2191
    %v2193 = vrot.slane %v2174, %v2192
    %v2195 = vunpack.c.l.s4 1966171168
    %v2196 = vunpack.c.0.s8 %v2195
    %v2197 = vlaneseq
    %v2198 = vshrl.u32 %v2197, 7
    %v2199 = vsub.s32 %v2196, %v2198
    %v2200 = vrot.slane %v2186, %v2199
    %v2201 = vcombine.high %v2193, %v2193
    %v2202 = vcombine.high %v2200, %v2200
    %v2204 = vunpack.c.l.s4 1966171168
    %v2205 = vunpack.c.0.s8 %v2204
    %v2206 = vlaneseq
    %v2207 = vshrl.u32 %v2206, 7
    %v2208 = vsub.s32 %v2205, %v2207
    %v2209 = vrot.slane %v2193, %v2208
    %v2211 = vunpack.c.l.s4 1966171168
    %v2212 = vunpack.c.0.s8 %v2211
    %v2213 = vlaneseq
    %v2214 = vshrl.u32 %v2213, 7
    %v2215 = vsub.s32 %v2212, %v2214
    %v2216 = vrot.slane %v2200, %v2215
    %v2218 = vunpack.c.l.s4 1966171168
    %v2219 = vunpack.c.0.s8 %v2218
    %v2220 = vlaneseq
    %v2221 = vshrl.u32 %v2220, 7
    %v2222 = vsub.s32 %v2219, %v2221
    %v2223 = vrot.slane %v2201, %v2222
    %v2225 = vunpack.c.l.s4 1966171168
    %v2226 = vunpack.c.0.s8 %v2225
    %v2227 = vlaneseq
    %v2228 = vshrl.u32 %v2227, 7
    %v2229 = vsub.s32 %v2226, %v2228
    %v2230 = vrot.slane %v2202, %v2229
    %v2231 = vcombine.high %v2209, %v2209
    %v2232 = vcombine.high %v2216, %v2216
    %v2233 = vcombine.high %v2223, %v2223
    %v2234 = vcombine.high %v2230, %v2230
    %v2235 = vcombine.high %v2180, %v2180
    %v2237 = vunpack.c.l.s4 1966171168
    %v2238 = vunpack.c.0.s8 %v2237
    %v2239 = vlaneseq
    %v2240 = vshrl.u32 %v2239, 7
    %v2241 = vsub.s32 %v2238, %v2240
    %v2242 = vrot.slane %v2180, %v2241
    %v2244 = vunpack.c.l.s4 1966171168
    %v2245 = vunpack.c.0.s8 %v2244
    %v2246 = vlaneseq
    %v2247 = vshrl.u32 %v2246, 7
    %v2248 = vsub.s32 %v2245, %v2247
    %v2249 = vrot.slane %v2235, %v2248
    %v2250 = vcombine.high %v2242, %v2242
    %v2251 = vcombine.high %v2249, %v2249
    %v2253 = vunpack.c.l.s4 1966171168
    %v2254 = vunpack.c.0.s8 %v2253
    %v2255 = vlaneseq
    %v2256 = vshrl.u32 %v2255, 7
    %v2257 = vsub.s32 %v2254, %v2256
    %v2258 = vrot.slane %v2242, %v2257
    %v2260 = vunpack.c.l.s4 1966171168
    %v2261 = vunpack.c.0.s8 %v2260
    %v2262 = vlaneseq
    %v2263 = vshrl.u32 %v2262, 7
    %v2264 = vsub.s32 %v2261, %v2263
    %v2265 = vrot.slane %v2249, %v2264
    %v2267 = vunpack.c.l.s4 1966171168
    %v2268 = vunpack.c.0.s8 %v2267
    %v2269 = vlaneseq
    %v2270 = vshrl.u32 %v2269, 7
    %v2271 = vsub.s32 %v2268, %v2270
    %v2272 = vrot.slane %v2250, %v2271
    %v2274 = vunpack.c.l.s4 1966171168
    %v2275 = vunpack.c.0.s8 %v2274
    %v2276 = vlaneseq
    %v2277 = vshrl.u32 %v2276, 7
    %v2278 = vsub.s32 %v2275, %v2277
    %v2279 = vrot.slane %v2251, %v2278
    %v2280 = vcombine.high %v2258, %v2258
    %v2281 = vcombine.high %v2272, %v2272
    %v2284 = vcombine.high %v2176, %v2176
    %v2286 = vunpack.c.l.s4 1966171168
    %v2287 = vunpack.c.0.s8 %v2286
    %v2288 = vlaneseq
    %v2289 = vshrl.u32 %v2288, 7
    %v2290 = vsub.s32 %v2287, %v2289
    %v2291 = vrot.slane %v2176, %v2290
    %v2293 = vunpack.c.l.s4 1966171168
    %v2294 = vunpack.c.0.s8 %v2293
    %v2295 = vlaneseq
    %v2296 = vshrl.u32 %v2295, 7
    %v2297 = vsub.s32 %v2294, %v2296
    %v2298 = vrot.slane %v2284, %v2297
    %v2299 = vcombine.high %v2291, %v2291
    %v2300 = vcombine.high %v2298, %v2298
    %v2302 = vunpack.c.l.s4 1966171168
    %v2303 = vunpack.c.0.s8 %v2302
    %v2304 = vlaneseq
    %v2305 = vshrl.u32 %v2304, 7
    %v2306 = vsub.s32 %v2303, %v2305
    %v2307 = vrot.slane %v2291, %v2306
    %v2309 = vunpack.c.l.s4 1966171168
    %v2310 = vunpack.c.0.s8 %v2309
    %v2311 = vlaneseq
    %v2312 = vshrl.u32 %v2311, 7
    %v2313 = vsub.s32 %v2310, %v2312
    %v2314 = vrot.slane %v2298, %v2313
    %v2316 = vunpack.c.l.s4 1966171168
    %v2317 = vunpack.c.0.s8 %v2316
    %v2318 = vlaneseq
    %v2319 = vshrl.u32 %v2318, 7
    %v2320 = vsub.s32 %v2317, %v2319
    %v2321 = vrot.slane %v2299, %v2320
    %v2323 = vunpack.c.l.s4 1966171168
    %v2324 = vunpack.c.0.s8 %v2323
    %v2325 = vlaneseq
    %v2326 = vshrl.u32 %v2325, 7
    %v2327 = vsub.s32 %v2324, %v2326
    %v2328 = vrot.slane %v2300, %v2327
    %v2329 = vcombine.high %v2307, %v2307
    %v2330 = vcombine.high %v2314, %v2314
    %v2331 = vcombine.high %v2321, %v2321
    %v2332 = vcombine.high %v2328, %v2328
    %v2333 = vcombine.high %v2182, %v2182
    %v2335 = vunpack.c.l.s4 1966171168
    %v2336 = vunpack.c.0.s8 %v2335
    %v2337 = vlaneseq
    %v2338 = vshrl.u32 %v2337, 7
    %v2339 = vsub.s32 %v2336, %v2338
    %v2340 = vrot.slane %v2182, %v2339
    %v2342 = vunpack.c.l.s4 1966171168
    %v2343 = vunpack.c.0.s8 %v2342
    %v2344 = vlaneseq
    %v2345 = vshrl.u32 %v2344, 7
    %v2346 = vsub.s32 %v2343, %v2345
    %v2347 = vrot.slane %v2333, %v2346
    %v2348 = vcombine.high %v2340, %v2340
    %v2349 = vcombine.high %v2347, %v2347
    %v2351 = vunpack.c.l.s4 1966171168
    %v2352 = vunpack.c.0.s8 %v2351
    %v2353 = vlaneseq
    %v2354 = vshrl.u32 %v2353, 7
    %v2355 = vsub.s32 %v2352, %v2354
    %v2356 = vrot.slane %v2340, %v2355
    %v2358 = vunpack.c.l.s4 1966171168
    %v2359 = vunpack.c.0.s8 %v2358
    %v2360 = vlaneseq
    %v2361 = vshrl.u32 %v2360, 7
    %v2362 = vsub.s32 %v2359, %v2361
    %v2363 = vrot.slane %v2347, %v2362
    %v2365 = vunpack.c.l.s4 1966171168
    %v2366 = vunpack.c.0.s8 %v2365
    %v2367 = vlaneseq
    %v2368 = vshrl.u32 %v2367, 7
    %v2369 = vsub.s32 %v2366, %v2368
    %v2370 = vrot.slane %v2348, %v2369
    %v2372 = vunpack.c.l.s4 1966171168
    %v2373 = vunpack.c.0.s8 %v2372
    %v2374 = vlaneseq
    %v2375 = vshrl.u32 %v2374, 7
    %v2376 = vsub.s32 %v2373, %v2375
    %v2377 = vrot.slane %v2349, %v2376
    %v2378 = vcombine.high %v2356, %v2356
    %v2379 = vcombine.high %v2370, %v2370
    %v2380 = vcombine.low %v2209, %v2223
    %v2381 = vcombine.low %v2231, %v2233
    %v2382 = vcombine.low %v2216, %v2230
    %v2384 = vunpack.c.l.s4 1966171168
    %v2385 = vunpack.c.0.s8 %v2384
    %v2386 = vlaneseq
    %v2387 = vshrl.u32 %v2386, 7
    %v2388 = vsub.s32 %v2385, %v2387
    %v2389 = vrot.slane %v2380, %v2388
    %v2391 = vunpack.c.l.s4 1966171168
    %v2392 = vunpack.c.0.s8 %v2391
    %v2393 = vlaneseq
    %v2394 = vshrl.u32 %v2393, 7
    %v2395 = vsub.s32 %v2392, %v2394
    %v2396 = vrot.slane %v2381, %v2395
    %v2398 = vunpack.c.l.s4 1966171168
    %v2399 = vunpack.c.0.s8 %v2398
    %v2400 = vlaneseq
    %v2401 = vshrl.u32 %v2400, 7
    %v2402 = vsub.s32 %v2399, %v2401
    %v2403 = vrot.slane %v2382, %v2402
    %v2405 = vunpack.c.l.s4 1966171168
    %v2406 = vunpack.c.0.s8 %v2405
    %v2407 = vlaneseq
    %v2408 = vshrl.u32 %v2407, 7
    %v2409 = vsub.s32 %v2406, %v2408
    %v2410 = vrot.slane %v2232, %v2409
    %v2411 = vcombine.low %v2389, %v2396
    %v2412 = vcombine.low %v2403, %v2410
    %v2414 = vunpack.c.l.s4 1966171168
    %v2415 = vunpack.c.0.s8 %v2414
    %v2416 = vlaneseq
    %v2417 = vshrl.u32 %v2416, 7
    %v2418 = vsub.s32 %v2415, %v2417
    %v2419 = vrot.slane %v2411, %v2418
    %v2421 = vunpack.c.l.s4 1966171168
    %v2422 = vunpack.c.0.s8 %v2421
    %v2423 = vlaneseq
    %v2424 = vshrl.u32 %v2423, 7
    %v2425 = vsub.s32 %v2422, %v2424
    %v2426 = vrot.slane %v2412, %v2425
    %v2427 = vcombine.low %v2419, %v2426
    %2428 = vrot.lane.b32.xlu0 %v2427, 64
    %v2429 = vpop.permute.xlu0 %2428
    %v2430 = vsel %vm144, %v2427, 0
    %v2432 = vsel %vm144, %v2429, 0
    %2434 = vmatprep.subr.mxu0 0.0
    %2435 = vmatpush1.xpose.msra.mxu0 0.0
    %2436 = vmatprep.subr.mxu0 0.0
    %2437 = vmatpush1.xpose.msra.mxu0 0.0
    %2438 = vmatprep.subr.mxu0 0.0
    %2439 = vmatpush1.xpose.msra.mxu0 0.0
    %2440 = vmatprep.subr.mxu0 0.0
    %2441 = vmatpush1.xpose.msra.mxu0 0.0
    %2442 = vmatprep.subr.mxu0 0.0
    %2443 = vmatpush1.xpose.msra.mxu0 0.0
    %2444 = vmatprep.subr.mxu0 0.0
    %2445 = vmatpush1.xpose.msra.mxu0 0.0
    %2446 = vmatprep.subr.mxu0 0.0
    %2447 = vmatpush1.xpose.msra.mxu0 0.0
    %2448 = vmatprep.subr.mxu0 0.0
    %2449 = vmatpush1.xpose.msra.mxu0 0.0
    %2450 = vmatprep.subr.mxu0 0.0
    %2451 = vmatpush1.xpose.msra.mxu0 0.0
    %2452 = vmatprep.subr.mxu0 0.0
    %2453 = vmatpush1.xpose.msra.mxu0 0.0
    %2454 = vmatprep.subr.mxu0 0.0
    %2455 = vmatpush1.xpose.msra.mxu0 0.0
    %2456 = vmatprep.subr.mxu0 0.0
    %2457 = vmatpush1.xpose.msra.mxu0 0.0
    %2458 = vmatprep.subr.mxu0 0.0
    %2459 = vmatpush1.xpose.msra.mxu0 0.0
    %2460 = vmatprep.subr.mxu0 0.0
    %2461 = vmatpush1.xpose.msra.mxu0 0.0
    %2462 = vmatprep.subr.mxu0 0.0
    %2463 = vmatpush1.xpose.msra.mxu0 0.0
    %2464 = vmatprep.subr.mxu0 0.0
    %2465 = vmatpush1.xpose.msra.mxu0 %v2432
    %2466 = vmatprep.subr.mxu0 0.0
    %2467 = vmatpush2.xpose.msra.mxu0 0.0
    %2468 = vmatprep.subr.mxu0 0.0
    %2469 = vmatpush2.xpose.msra.mxu0 0.0
    %2470 = vmatprep.subr.mxu0 0.0
    %2471 = vmatpush2.xpose.msra.mxu0 0.0
    %2472 = vmatprep.subr.mxu0 0.0
    %2473 = vmatpush2.xpose.msra.mxu0 0.0
    %2474 = vmatprep.subr.mxu0 0.0
    %2475 = vmatpush2.xpose.msra.mxu0 0.0
    %2476 = vmatprep.subr.mxu0 0.0
    %2477 = vmatpush2.xpose.msra.mxu0 0.0
    %2478 = vmatprep.subr.mxu0 0.0
    %2479 = vmatpush2.xpose.msra.mxu0 0.0
    %2480 = vmatprep.subr.mxu0 0.0
    %2481 = vmatpush2.xpose.msra.mxu0 0.0
    %2482 = vmatprep.subr.mxu0 0.0
    %2483 = vmatpush2.xpose.msra.mxu0 0.0
    %2484 = vmatprep.subr.mxu0 0.0
    %2485 = vmatpush2.xpose.msra.mxu0 0.0
    %2486 = vmatprep.subr.mxu0 0.0
    %2487 = vmatpush2.xpose.msra.mxu0 0.0
    %2488 = vmatprep.subr.mxu0 0.0
    %2489 = vmatpush2.xpose.msra.mxu0 0.0
    %2490 = vmatprep.subr.mxu0 0.0
    %2491 = vmatpush2.xpose.msra.mxu0 0.0
    %2492 = vmatprep.subr.mxu0 0.0
    %2493 = vmatpush2.xpose.msra.mxu0 0.0
    %2494 = vmatprep.subr.mxu0 0.0
    %2495 = vmatpush2.xpose.msra.mxu0 0.0
    %2496 = vmatprep.subr.mxu0 0.0
    %2497 = vmatpush2.xpose.msra.mxu0 0.0
    %2498 = vmatprep.mubr.f32.mxu0 0.0
    %2499 = vmatmul.mubr.f32.gmra.mxu0 %v2430
    %v2500 = vpop.f32.mrf.mxu0
    %v2501 = vadd.f32 0.0, %v2500
    %v2502 = vpop.f32.mrf.mxu0
    %2503 = vdwg.mxu0
    %v2504 = vcombine.low %v2234, %v2258
    %v2505 = vcombine.low %v2272, %v2280
    %v2506 = vcombine.low %v2281, %v2265
    %v2508 = vunpack.c.l.s4 1966171168
    %v2509 = vunpack.c.0.s8 %v2508
    %v2510 = vlaneseq
    %v2511 = vshrl.u32 %v2510, 7
    %v2512 = vsub.s32 %v2509, %v2511
    %v2513 = vrot.slane %v2504, %v2512
    %v2515 = vunpack.c.l.s4 1966171168
    %v2516 = vunpack.c.0.s8 %v2515
    %v2517 = vlaneseq
    %v2518 = vshrl.u32 %v2517, 7
    %v2519 = vsub.s32 %v2516, %v2518
    %v2520 = vrot.slane %v2505, %v2519
    %v2522 = vunpack.c.l.s4 1966171168
    %v2523 = vunpack.c.0.s8 %v2522
    %v2524 = vlaneseq
    %v2525 = vshrl.u32 %v2524, 7
    %v2526 = vsub.s32 %v2523, %v2525
    %v2527 = vrot.slane %v2506, %v2526
    %v2529 = vunpack.c.l.s4 1966171168
    %v2530 = vunpack.c.0.s8 %v2529
    %v2531 = vlaneseq
    %v2532 = vshrl.u32 %v2531, 7
    %v2533 = vsub.s32 %v2530, %v2532
    %v2534 = vrot.slane %v2279, %v2533
    %v2535 = vcombine.low %v2513, %v2520
    %v2536 = vcombine.low %v2527, %v2534
    %v2538 = vunpack.c.l.s4 1966171168
    %v2539 = vunpack.c.0.s8 %v2538
    %v2540 = vlaneseq
    %v2541 = vshrl.u32 %v2540, 7
    %v2542 = vsub.s32 %v2539, %v2541
    %v2543 = vrot.slane %v2535, %v2542
    %v2545 = vunpack.c.l.s4 1966171168
    %v2546 = vunpack.c.0.s8 %v2545
    %v2547 = vlaneseq
    %v2548 = vshrl.u32 %v2547, 7
    %v2549 = vsub.s32 %v2546, %v2548
    %v2550 = vrot.slane %v2536, %v2549
    %v2551 = vcombine.low %v2543, %v2550
    %2552 = vrot.lane.b32.xlu0 %v2551, 64
    %v2553 = vpop.permute.xlu0 %2552
    %v2554 = vsel %vm144, %v2551, 0
    %v2556 = vsel %vm144, %v2553, 0
    %2558 = vmatprep.subr.mxu0 0.0
    %2559 = vmatpush1.xpose.msra.mxu0 0.0
    %2560 = vmatprep.subr.mxu0 0.0
    %2561 = vmatpush1.xpose.msra.mxu0 0.0
    %2562 = vmatprep.subr.mxu0 0.0
    %2563 = vmatpush1.xpose.msra.mxu0 0.0
    %2564 = vmatprep.subr.mxu0 0.0
    %2565 = vmatpush1.xpose.msra.mxu0 0.0
    %2566 = vmatprep.subr.mxu0 0.0
    %2567 = vmatpush1.xpose.msra.mxu0 0.0
    %2568 = vmatprep.subr.mxu0 0.0
    %2569 = vmatpush1.xpose.msra.mxu0 0.0
    %2570 = vmatprep.subr.mxu0 0.0
    %2571 = vmatpush1.xpose.msra.mxu0 0.0
    %2572 = vmatprep.subr.mxu0 0.0
    %2573 = vmatpush1.xpose.msra.mxu0 0.0
    %2574 = vmatprep.subr.mxu0 0.0
    %2575 = vmatpush1.xpose.msra.mxu0 0.0
    %2576 = vmatprep.subr.mxu0 0.0
    %2577 = vmatpush1.xpose.msra.mxu0 0.0
    %2578 = vmatprep.subr.mxu0 0.0
    %2579 = vmatpush1.xpose.msra.mxu0 0.0
    %2580 = vmatprep.subr.mxu0 0.0
    %2581 = vmatpush1.xpose.msra.mxu0 0.0
    %2582 = vmatprep.subr.mxu0 0.0
    %2583 = vmatpush1.xpose.msra.mxu0 0.0
    %2584 = vmatprep.subr.mxu0 0.0
    %2585 = vmatpush1.xpose.msra.mxu0 0.0
    %2586 = vmatprep.subr.mxu0 0.0
    %2587 = vmatpush1.xpose.msra.mxu0 0.0
    %2588 = vmatprep.subr.mxu0 0.0
    %2589 = vmatpush1.xpose.msra.mxu0 %v2556
    %2590 = vmatprep.subr.mxu0 0.0
    %2591 = vmatpush2.xpose.msra.mxu0 0.0
    %2592 = vmatprep.subr.mxu0 0.0
    %2593 = vmatpush2.xpose.msra.mxu0 0.0
    %2594 = vmatprep.subr.mxu0 0.0
    %2595 = vmatpush2.xpose.msra.mxu0 0.0
    %2596 = vmatprep.subr.mxu0 0.0
    %2597 = vmatpush2.xpose.msra.mxu0 0.0
    %2598 = vmatprep.subr.mxu0 0.0
    %2599 = vmatpush2.xpose.msra.mxu0 0.0
    %2600 = vmatprep.subr.mxu0 0.0
    %2601 = vmatpush2.xpose.msra.mxu0 0.0
    %2602 = vmatprep.subr.mxu0 0.0
    %2603 = vmatpush2.xpose.msra.mxu0 0.0
    %2604 = vmatprep.subr.mxu0 0.0
    %2605 = vmatpush2.xpose.msra.mxu0 0.0
    %2606 = vmatprep.subr.mxu0 0.0
    %2607 = vmatpush2.xpose.msra.mxu0 0.0
    %2608 = vmatprep.subr.mxu0 0.0
    %2609 = vmatpush2.xpose.msra.mxu0 0.0
    %2610 = vmatprep.subr.mxu0 0.0
    %2611 = vmatpush2.xpose.msra.mxu0 0.0
    %2612 = vmatprep.subr.mxu0 0.0
    %2613 = vmatpush2.xpose.msra.mxu0 0.0
    %2614 = vmatprep.subr.mxu0 0.0
    %2615 = vmatpush2.xpose.msra.mxu0 0.0
    %2616 = vmatprep.subr.mxu0 0.0
    %2617 = vmatpush2.xpose.msra.mxu0 0.0
    %2618 = vmatprep.subr.mxu0 0.0
    %2619 = vmatpush2.xpose.msra.mxu0 0.0
    %2620 = vmatprep.subr.mxu0 0.0
    %2621 = vmatpush2.xpose.msra.mxu0 0.0
    %2622 = vmatprep.mubr.f32.mxu0 0.0
    %2623 = vmatmul.mubr.f32.gmra.mxu0 %v2554
    %v2624 = vpop.f32.mrf.mxu0
    %v2625 = vadd.f32 0.0, %v2624
    %v2626 = vpop.f32.mrf.mxu0
    %2627 = vdwg.mxu0
    %v2628 = vsel %vm672, %v2501, -inf
    %2629 = vmax.xlane.f32.xlu0 %v2628
    %v2630 = vpop.xlane.xlu0 %2629
    %v2631 = vsel %vm672, %v2625, -inf
    %2632 = vmax.xlane.f32.xlu0 %v2631
    %v2633 = vpop.xlane.xlu0 %2632
    %v2634 = vsub.f32 %v2501, %v2630
    %v2635 = vsub.f32 %v2625, %v2633
    %v2636 = vmul.f32 %v2634, 1.442695
    %v2637 = vpow.pop %v2636
    %v2638 = vmul.f32 %v2635, 1.442695
    %v2639 = vpow.pop %v2638
    %v2640 = vsel %vm672, %v2637, 0.0
    %2641 = vadd.xlane.f32.xlu0 %v2640
    %v2642 = vpop.xlane.xlu0 %2641
    %v2643 = vsel %vm672, %v2639, 0.0
    %2644 = vadd.xlane.f32.xlu0 %v2643
    %v2645 = vpop.xlane.xlu0 %2644
    %v2646 = vrcp.pop %v2642
    %v2647 = vrcp.pop %v2645
    %v2648 = vmul.f32 %v2637, %v2646
    %v2649 = vmul.f32 %v2639, %v2647
    %v2650 = vcombine.low %v2307, %v2321
    %v2651 = vcombine.low %v2329, %v2331
    %v2652 = vcombine.low %v2314, %v2328
    %v2654 = vunpack.c.l.s4 1966171168
    %v2655 = vunpack.c.0.s8 %v2654
    %v2656 = vlaneseq
    %v2657 = vshrl.u32 %v2656, 7
    %v2658 = vsub.s32 %v2655, %v2657
    %v2659 = vrot.slane %v2650, %v2658
    %v2661 = vunpack.c.l.s4 1966171168
    %v2662 = vunpack.c.0.s8 %v2661
    %v2663 = vlaneseq
    %v2664 = vshrl.u32 %v2663, 7
    %v2665 = vsub.s32 %v2662, %v2664
    %v2666 = vrot.slane %v2651, %v2665
    %v2668 = vunpack.c.l.s4 1966171168
    %v2669 = vunpack.c.0.s8 %v2668
    %v2670 = vlaneseq
    %v2671 = vshrl.u32 %v2670, 7
    %v2672 = vsub.s32 %v2669, %v2671
    %v2673 = vrot.slane %v2652, %v2672
    %v2675 = vunpack.c.l.s4 1966171168
    %v2676 = vunpack.c.0.s8 %v2675
    %v2677 = vlaneseq
    %v2678 = vshrl.u32 %v2677, 7
    %v2679 = vsub.s32 %v2676, %v2678
    %v2680 = vrot.slane %v2330, %v2679
    %v2681 = vcombine.low %v2659, %v2666
    %v2682 = vcombine.low %v2673, %v2680
    %v2684 = vunpack.c.l.s4 1966171168
    %v2685 = vunpack.c.0.s8 %v2684
    %v2686 = vlaneseq
    %v2687 = vshrl.u32 %v2686, 7
    %v2688 = vsub.s32 %v2685, %v2687
    %v2689 = vrot.slane %v2681, %v2688
    %v2691 = vunpack.c.l.s4 1966171168
    %v2692 = vunpack.c.0.s8 %v2691
    %v2693 = vlaneseq
    %v2694 = vshrl.u32 %v2693, 7
    %v2695 = vsub.s32 %v2692, %v2694
    %v2696 = vrot.slane %v2682, %v2695
    %v2697 = vcombine.low %v2689, %v2696
    %v2699 = vsel %vm743, %v2648, 0
    %v2701 = vsel %vm747, %v2697, 0
    %2703 = vmatprep.subr.mxu0 0.0
    %2704 = vmatpush1.msra.mxu0 0.0
    %2705 = vmatprep.subr.mxu0 0.0
    %2706 = vmatpush1.msra.mxu0 0.0
    %2707 = vmatprep.subr.mxu0 0.0
    %2708 = vmatpush1.msra.mxu0 0.0
    %2709 = vmatprep.subr.mxu0 0.0
    %2710 = vmatpush1.msra.mxu0 0.0
    %2711 = vmatprep.subr.mxu0 0.0
    %2712 = vmatpush1.msra.mxu0 0.0
    %2713 = vmatprep.subr.mxu0 0.0
    %2714 = vmatpush1.msra.mxu0 0.0
    %2715 = vmatprep.subr.mxu0 0.0
    %2716 = vmatpush1.msra.mxu0 0.0
    %2717 = vmatprep.subr.mxu0 0.0
    %2718 = vmatpush1.msra.mxu0 0.0
    %2719 = vmatprep.subr.mxu0 0.0
    %2720 = vmatpush1.msra.mxu0 0.0
    %2721 = vmatprep.subr.mxu0 0.0
    %2722 = vmatpush1.msra.mxu0 0.0
    %2723 = vmatprep.subr.mxu0 0.0
    %2724 = vmatpush1.msra.mxu0 0.0
    %2725 = vmatprep.subr.mxu0 0.0
    %2726 = vmatpush1.msra.mxu0 0.0
    %2727 = vmatprep.subr.mxu0 0.0
    %2728 = vmatpush1.msra.mxu0 0.0
    %2729 = vmatprep.subr.mxu0 0.0
    %2730 = vmatpush1.msra.mxu0 0.0
    %2731 = vmatprep.subr.mxu0 0.0
    %2732 = vmatpush1.msra.mxu0 0.0
    %2733 = vmatprep.subr.mxu0 0.0
    %2734 = vmatpush1.msra.mxu0 %v2701
    %2735 = vmatprep.subr.mxu0 0.0
    %2736 = vmatpush2.msra.mxu0 0.0
    %2737 = vmatprep.subr.mxu0 0.0
    %2738 = vmatpush2.msra.mxu0 0.0
    %2739 = vmatprep.subr.mxu0 0.0
    %2740 = vmatpush2.msra.mxu0 0.0
    %2741 = vmatprep.subr.mxu0 0.0
    %2742 = vmatpush2.msra.mxu0 0.0
    %2743 = vmatprep.subr.mxu0 0.0
    %2744 = vmatpush2.msra.mxu0 0.0
    %2745 = vmatprep.subr.mxu0 0.0
    %2746 = vmatpush2.msra.mxu0 0.0
    %2747 = vmatprep.subr.mxu0 0.0
    %2748 = vmatpush2.msra.mxu0 0.0
    %2749 = vmatprep.subr.mxu0 0.0
    %2750 = vmatpush2.msra.mxu0 0.0
    %2751 = vmatprep.subr.mxu0 0.0
    %2752 = vmatpush2.msra.mxu0 0.0
    %2753 = vmatprep.subr.mxu0 0.0
    %2754 = vmatpush2.msra.mxu0 0.0
    %2755 = vmatprep.subr.mxu0 0.0
    %2756 = vmatpush2.msra.mxu0 0.0
    %2757 = vmatprep.subr.mxu0 0.0
    %2758 = vmatpush2.msra.mxu0 0.0
    %2759 = vmatprep.subr.mxu0 0.0
    %2760 = vmatpush2.msra.mxu0 0.0
    %2761 = vmatprep.subr.mxu0 0.0
    %2762 = vmatpush2.msra.mxu0 0.0
    %2763 = vmatprep.subr.mxu0 0.0
    %2764 = vmatpush2.msra.mxu0 0.0
    %2765 = vmatprep.subr.mxu0 0.0
    %2766 = vmatpush2.msra.mxu0 0.0
    %2767 = vmatprep.mubr.f32.mxu0 0.0
    %2768 = vmatmul.mubr.f32.gmra.mxu0 %v2699
    %v2769 = vpop.f32.mrf.mxu0
    %v2770 = vadd.f32 0.0, %v2769
    %v2771 = vpop.f32.mrf.mxu0
    %2772 = vdwg.mxu0
    %v2773 = vcombine.low %v2332, %v2356
    %v2774 = vcombine.low %v2370, %v2378
    %v2775 = vcombine.low %v2379, %v2363
    %v2777 = vunpack.c.l.s4 1966171168
    %v2778 = vunpack.c.0.s8 %v2777
    %v2779 = vlaneseq
    %v2780 = vshrl.u32 %v2779, 7
    %v2781 = vsub.s32 %v2778, %v2780
    %v2782 = vrot.slane %v2773, %v2781
    %v2784 = vunpack.c.l.s4 1966171168
    %v2785 = vunpack.c.0.s8 %v2784
    %v2786 = vlaneseq
    %v2787 = vshrl.u32 %v2786, 7
    %v2788 = vsub.s32 %v2785, %v2787
    %v2789 = vrot.slane %v2774, %v2788
    %v2791 = vunpack.c.l.s4 1966171168
    %v2792 = vunpack.c.0.s8 %v2791
    %v2793 = vlaneseq
    %v2794 = vshrl.u32 %v2793, 7
    %v2795 = vsub.s32 %v2792, %v2794
    %v2796 = vrot.slane %v2775, %v2795
    %v2798 = vunpack.c.l.s4 1966171168
    %v2799 = vunpack.c.0.s8 %v2798
    %v2800 = vlaneseq
    %v2801 = vshrl.u32 %v2800, 7
    %v2802 = vsub.s32 %v2799, %v2801
    %v2803 = vrot.slane %v2377, %v2802
    %v2804 = vcombine.low %v2782, %v2789
    %v2805 = vcombine.low %v2796, %v2803
    %v2807 = vunpack.c.l.s4 1966171168
    %v2808 = vunpack.c.0.s8 %v2807
    %v2809 = vlaneseq
    %v2810 = vshrl.u32 %v2809, 7
    %v2811 = vsub.s32 %v2808, %v2810
    %v2812 = vrot.slane %v2804, %v2811
    %v2814 = vunpack.c.l.s4 1966171168
    %v2815 = vunpack.c.0.s8 %v2814
    %v2816 = vlaneseq
    %v2817 = vshrl.u32 %v2816, 7
    %v2818 = vsub.s32 %v2815, %v2817
    %v2819 = vrot.slane %v2805, %v2818
    %v2820 = vcombine.low %v2812, %v2819
    %v2822 = vsel %vm743, %v2649, 0
    %v2824 = vsel %vm747, %v2820, 0
    %2826 = vmatprep.subr.mxu0 0.0
    %2827 = vmatpush1.msra.mxu0 0.0
    %2828 = vmatprep.subr.mxu0 0.0
    %2829 = vmatpush1.msra.mxu0 0.0
    %2830 = vmatprep.subr.mxu0 0.0
    %2831 = vmatpush1.msra.mxu0 0.0
    %2832 = vmatprep.subr.mxu0 0.0
    %2833 = vmatpush1.msra.mxu0 0.0
    %2834 = vmatprep.subr.mxu0 0.0
    %2835 = vmatpush1.msra.mxu0 0.0
    %2836 = vmatprep.subr.mxu0 0.0
    %2837 = vmatpush1.msra.mxu0 0.0
    %2838 = vmatprep.subr.mxu0 0.0
    %2839 = vmatpush1.msra.mxu0 0.0
    %2840 = vmatprep.subr.mxu0 0.0
    %2841 = vmatpush1.msra.mxu0 0.0
    %2842 = vmatprep.subr.mxu0 0.0
    %2843 = vmatpush1.msra.mxu0 0.0
    %2844 = vmatprep.subr.mxu0 0.0
    %2845 = vmatpush1.msra.mxu0 0.0
    %2846 = vmatprep.subr.mxu0 0.0
    %2847 = vmatpush1.msra.mxu0 0.0
    %2848 = vmatprep.subr.mxu0 0.0
    %2849 = vmatpush1.msra.mxu0 0.0
    %2850 = vmatprep.subr.mxu0 0.0
    %2851 = vmatpush1.msra.mxu0 0.0
    %2852 = vmatprep.subr.mxu0 0.0
    %2853 = vmatpush1.msra.mxu0 0.0
    %2854 = vmatprep.subr.mxu0 0.0
    %2855 = vmatpush1.msra.mxu0 0.0
    %2856 = vmatprep.subr.mxu0 0.0
    %2857 = vmatpush1.msra.mxu0 %v2824
    %2858 = vmatprep.subr.mxu0 0.0
    %2859 = vmatpush2.msra.mxu0 0.0
    %2860 = vmatprep.subr.mxu0 0.0
    %2861 = vmatpush2.msra.mxu0 0.0
    %2862 = vmatprep.subr.mxu0 0.0
    %2863 = vmatpush2.msra.mxu0 0.0
    %2864 = vmatprep.subr.mxu0 0.0
    %2865 = vmatpush2.msra.mxu0 0.0
    %2866 = vmatprep.subr.mxu0 0.0
    %2867 = vmatpush2.msra.mxu0 0.0
    %2868 = vmatprep.subr.mxu0 0.0
    %2869 = vmatpush2.msra.mxu0 0.0
    %2870 = vmatprep.subr.mxu0 0.0
    %2871 = vmatpush2.msra.mxu0 0.0
    %2872 = vmatprep.subr.mxu0 0.0
    %2873 = vmatpush2.msra.mxu0 0.0
    %2874 = vmatprep.subr.mxu0 0.0
    %2875 = vmatpush2.msra.mxu0 0.0
    %2876 = vmatprep.subr.mxu0 0.0
    %2877 = vmatpush2.msra.mxu0 0.0
    %2878 = vmatprep.subr.mxu0 0.0
    %2879 = vmatpush2.msra.mxu0 0.0
    %2880 = vmatprep.subr.mxu0 0.0
    %2881 = vmatpush2.msra.mxu0 0.0
    %2882 = vmatprep.subr.mxu0 0.0
    %2883 = vmatpush2.msra.mxu0 0.0
    %2884 = vmatprep.subr.mxu0 0.0
    %2885 = vmatpush2.msra.mxu0 0.0
    %2886 = vmatprep.subr.mxu0 0.0
    %2887 = vmatpush2.msra.mxu0 0.0
    %2888 = vmatprep.subr.mxu0 0.0
    %2889 = vmatpush2.msra.mxu0 0.0
    %2890 = vmatprep.mubr.f32.mxu0 0.0
    %2891 = vmatmul.mubr.f32.gmra.mxu0 %v2822
    %v2892 = vpop.f32.mrf.mxu0
    %v2893 = vadd.f32 0.0, %v2892
    %v2894 = vpop.f32.mrf.mxu0
    %2895 = vdwg.mxu0
    %v2896 = vld [vmem:[%s3 + $0xc8] sm:$0xff]
    %v2897 = vld [vmem:[%s3 + $0xd0] sm:$0xff]
    %v2898 = vld [vmem:[%s3 + $0xd8] sm:$0xff]
    %v2899 = vld [vmem:[%s3 + $0xe0] sm:$0xff]
    %v2902 = vcombine.high %v2770, %v2770
    %v2904 = vunpack.c.l.s4 1966171168
    %v2905 = vunpack.c.0.s8 %v2904
    %v2906 = vlaneseq
    %v2907 = vshrl.u32 %v2906, 7
    %v2908 = vsub.s32 %v2905, %v2907
    %v2909 = vrot.slane %v2770, %v2908
    %v2911 = vunpack.c.l.s4 1966171168
    %v2912 = vunpack.c.0.s8 %v2911
    %v2913 = vlaneseq
    %v2914 = vshrl.u32 %v2913, 7
    %v2915 = vsub.s32 %v2912, %v2914
    %v2916 = vrot.slane %v2902, %v2915
    %v2917 = vcombine.high %v2909, %v2909
    %v2918 = vcombine.high %v2916, %v2916
    %v2920 = vunpack.c.l.s4 1966171168
    %v2921 = vunpack.c.0.s8 %v2920
    %v2922 = vlaneseq
    %v2923 = vshrl.u32 %v2922, 7
    %v2924 = vsub.s32 %v2921, %v2923
    %v2925 = vrot.slane %v2909, %v2924
    %v2927 = vunpack.c.l.s4 1966171168
    %v2928 = vunpack.c.0.s8 %v2927
    %v2929 = vlaneseq
    %v2930 = vshrl.u32 %v2929, 7
    %v2931 = vsub.s32 %v2928, %v2930
    %v2932 = vrot.slane %v2916, %v2931
    %v2934 = vunpack.c.l.s4 1966171168
    %v2935 = vunpack.c.0.s8 %v2934
    %v2936 = vlaneseq
    %v2937 = vshrl.u32 %v2936, 7
    %v2938 = vsub.s32 %v2935, %v2937
    %v2939 = vrot.slane %v2917, %v2938
    %v2941 = vunpack.c.l.s4 1966171168
    %v2942 = vunpack.c.0.s8 %v2941
    %v2943 = vlaneseq
    %v2944 = vshrl.u32 %v2943, 7
    %v2945 = vsub.s32 %v2942, %v2944
    %v2946 = vrot.slane %v2918, %v2945
    %v2947 = vcombine.high %v2925, %v2925
    %v2948 = vcombine.high %v2932, %v2932
    %v2949 = vcombine.high %v2939, %v2939
    %v2950 = vcombine.high %v2893, %v2893
    %v2952 = vunpack.c.l.s4 1966171168
    %v2953 = vunpack.c.0.s8 %v2952
    %v2954 = vlaneseq
    %v2955 = vshrl.u32 %v2954, 7
    %v2956 = vsub.s32 %v2953, %v2955
    %v2957 = vrot.slane %v2893, %v2956
    %v2959 = vunpack.c.l.s4 1966171168
    %v2960 = vunpack.c.0.s8 %v2959
    %v2961 = vlaneseq
    %v2962 = vshrl.u32 %v2961, 7
    %v2963 = vsub.s32 %v2960, %v2962
    %v2964 = vrot.slane %v2950, %v2963
    %v2965 = vcombine.high %v2957, %v2957
    %v2966 = vcombine.high %v2964, %v2964
    %v2968 = vunpack.c.l.s4 1966171168
    %v2969 = vunpack.c.0.s8 %v2968
    %v2970 = vlaneseq
    %v2971 = vshrl.u32 %v2970, 7
    %v2972 = vsub.s32 %v2969, %v2971
    %v2973 = vrot.slane %v2957, %v2972
    %v2975 = vunpack.c.l.s4 1966171168
    %v2976 = vunpack.c.0.s8 %v2975
    %v2977 = vlaneseq
    %v2978 = vshrl.u32 %v2977, 7
    %v2979 = vsub.s32 %v2976, %v2978
    %v2980 = vrot.slane %v2964, %v2979
    %v2982 = vunpack.c.l.s4 1966171168
    %v2983 = vunpack.c.0.s8 %v2982
    %v2984 = vlaneseq
    %v2985 = vshrl.u32 %v2984, 7
    %v2986 = vsub.s32 %v2983, %v2985
    %v2987 = vrot.slane %v2965, %v2986
    %v2989 = vunpack.c.l.s4 1966171168
    %v2990 = vunpack.c.0.s8 %v2989
    %v2991 = vlaneseq
    %v2992 = vshrl.u32 %v2991, 7
    %v2993 = vsub.s32 %v2990, %v2992
    %v2994 = vrot.slane %v2966, %v2993
    %v2995 = vcombine.high %v2973, %v2973
    %v2996 = vcombine.high %v2980, %v2980
    %v2997 = vcombine.high %v2987, %v2987
    %v2998 = vcombine.low %v2925, %v2939
    %v2999 = vcombine.low %v2947, %v2949
    %v3000 = vcombine.low %v2932, %v2946
    %v3001 = vcombine.low %v2948, %v2973
    %v3003 = vunpack.c.l.s4 1966171168
    %v3004 = vunpack.c.0.s8 %v3003
    %v3005 = vlaneseq
    %v3006 = vshrl.u32 %v3005, 7
    %v3007 = vsub.s32 %v3004, %v3006
    %v3008 = vrot.slane %v2998, %v3007
    %v3010 = vunpack.c.l.s4 1966171168
    %v3011 = vunpack.c.0.s8 %v3010
    %v3012 = vlaneseq
    %v3013 = vshrl.u32 %v3012, 7
    %v3014 = vsub.s32 %v3011, %v3013
    %v3015 = vrot.slane %v2999, %v3014
    %v3017 = vunpack.c.l.s4 1966171168
    %v3018 = vunpack.c.0.s8 %v3017
    %v3019 = vlaneseq
    %v3020 = vshrl.u32 %v3019, 7
    %v3021 = vsub.s32 %v3018, %v3020
    %v3022 = vrot.slane %v3000, %v3021
    %v3024 = vunpack.c.l.s4 1966171168
    %v3025 = vunpack.c.0.s8 %v3024
    %v3026 = vlaneseq
    %v3027 = vshrl.u32 %v3026, 7
    %v3028 = vsub.s32 %v3025, %v3027
    %v3029 = vrot.slane %v3001, %v3028
    %v3030 = vcombine.low %v3008, %v3015
    %v3031 = vcombine.low %v3022, %v3029
    %v3033 = vunpack.c.l.s4 1966171168
    %v3034 = vunpack.c.0.s8 %v3033
    %v3035 = vlaneseq
    %v3036 = vshrl.u32 %v3035, 7
    %v3037 = vsub.s32 %v3034, %v3036
    %v3038 = vrot.slane %v3030, %v3037
    %v3040 = vunpack.c.l.s4 1966171168
    %v3041 = vunpack.c.0.s8 %v3040
    %v3042 = vlaneseq
    %v3043 = vshrl.u32 %v3042, 7
    %v3044 = vsub.s32 %v3041, %v3043
    %v3045 = vrot.slane %v3031, %v3044
    %v3046 = vcombine.low %v3038, %v3045
    %v3047 = vcombine.low %v2987, %v2995
    %v3048 = vcombine.low %v2997, %v2980
    %v3049 = vcombine.low %v2994, %v2996
    %v3051 = vunpack.c.l.s4 1966171168
    %v3052 = vunpack.c.0.s8 %v3051
    %v3053 = vlaneseq
    %v3054 = vshrl.u32 %v3053, 7
    %v3055 = vsub.s32 %v3052, %v3054
    %v3056 = vrot.slane %v3047, %v3055
    %v3058 = vunpack.c.l.s4 1966171168
    %v3059 = vunpack.c.0.s8 %v3058
    %v3060 = vlaneseq
    %v3061 = vshrl.u32 %v3060, 7
    %v3062 = vsub.s32 %v3059, %v3061
    %v3063 = vrot.slane %v3048, %v3062
    %v3065 = vunpack.c.l.s4 1966171168
    %v3066 = vunpack.c.0.s8 %v3065
    %v3067 = vlaneseq
    %v3068 = vshrl.u32 %v3067, 7
    %v3069 = vsub.s32 %v3066, %v3068
    %v3070 = vrot.slane %v3049, %v3069
    %v3071 = vcombine.low %v3056, %v3063
    %v3073 = vunpack.c.l.s4 1966171168
    %v3074 = vunpack.c.0.s8 %v3073
    %v3075 = vlaneseq
    %v3076 = vshrl.u32 %v3075, 7
    %v3077 = vsub.s32 %v3074, %v3076
    %v3078 = vrot.slane %v3071, %v3077
    %v3080 = vunpack.c.l.s4 1966171168
    %v3081 = vunpack.c.0.s8 %v3080
    %v3082 = vlaneseq
    %v3083 = vshrl.u32 %v3082, 7
    %v3084 = vsub.s32 %v3081, %v3083
    %v3085 = vrot.slane %v3070, %v3084
    %v3086 = vcombine.low %v3078, %v3085
    %v3087 = vsel %vm144, %v3046, 0
    %v3089 = vsel %vm144, %v3086, 0
    %3091 = vmatprep.subr.mxu0 0.0
    %3092 = vmatpush1.msra.mxu0 0.0
    %3093 = vmatprep.subr.mxu0 0.0
    %3094 = vmatpush1.msra.mxu0 0.0
    %3095 = vmatprep.subr.mxu0 0.0
    %3096 = vmatpush1.msra.mxu0 0.0
    %3097 = vmatprep.subr.mxu0 0.0
    %3098 = vmatpush1.msra.mxu0 0.0
    %3099 = vmatprep.subr.mxu0 0.0
    %3100 = vmatpush1.msra.mxu0 0.0
    %3101 = vmatprep.subr.mxu0 0.0
    %3102 = vmatpush1.msra.mxu0 0.0
    %3103 = vmatprep.subr.mxu0 0.0
    %3104 = vmatpush1.msra.mxu0 0.0
    %3105 = vmatprep.subr.mxu0 0.0
    %3106 = vmatpush1.msra.mxu0 0.0
    %3107 = vmatprep.subr.mxu0 0.0
    %3108 = vmatpush1.msra.mxu0 0.0
    %3109 = vmatprep.subr.mxu0 0.0
    %3110 = vmatpush1.msra.mxu0 0.0
    %3111 = vmatprep.subr.mxu0 0.0
    %3112 = vmatpush1.msra.mxu0 0.0
    %3113 = vmatprep.subr.mxu0 0.0
    %3114 = vmatpush1.msra.mxu0 0.0
    %3115 = vmatprep.subr.mxu0 0.0
    %3116 = vmatpush1.msra.mxu0 %v2899
    %3117 = vmatprep.subr.mxu0 0.0
    %3118 = vmatpush1.msra.mxu0 %v2898
    %3119 = vmatprep.subr.mxu0 0.0
    %3120 = vmatpush1.msra.mxu0 %v2897
    %3121 = vmatprep.subr.mxu0 0.0
    %3122 = vmatpush1.msra.mxu0 %v2896
    %3123 = vmatprep.subr.mxu0 0.0
    %3124 = vmatpush2.msra.mxu0 0.0
    %3125 = vmatprep.subr.mxu0 0.0
    %3126 = vmatpush2.msra.mxu0 0.0
    %3127 = vmatprep.subr.mxu0 0.0
    %3128 = vmatpush2.msra.mxu0 0.0
    %3129 = vmatprep.subr.mxu0 0.0
    %3130 = vmatpush2.msra.mxu0 0.0
    %3131 = vmatprep.subr.mxu0 0.0
    %3132 = vmatpush2.msra.mxu0 0.0
    %3133 = vmatprep.subr.mxu0 0.0
    %3134 = vmatpush2.msra.mxu0 0.0
    %3135 = vmatprep.subr.mxu0 0.0
    %3136 = vmatpush2.msra.mxu0 0.0
    %3137 = vmatprep.subr.mxu0 0.0
    %3138 = vmatpush2.msra.mxu0 0.0
    %3139 = vmatprep.subr.mxu0 0.0
    %3140 = vmatpush2.msra.mxu0 0.0
    %3141 = vmatprep.subr.mxu0 0.0
    %3142 = vmatpush2.msra.mxu0 0.0
    %3143 = vmatprep.subr.mxu0 0.0
    %3144 = vmatpush2.msra.mxu0 0.0
    %3145 = vmatprep.subr.mxu0 0.0
    %3146 = vmatpush2.msra.mxu0 0.0
    %3147 = vmatprep.subr.mxu0 0.0
    %3148 = vmatpush2.msra.mxu0 0.0
    %3149 = vmatprep.subr.mxu0 0.0
    %3150 = vmatpush2.msra.mxu0 0.0
    %3151 = vmatprep.subr.mxu0 0.0
    %3152 = vmatpush2.msra.mxu0 0.0
    %3153 = vmatprep.subr.mxu0 0.0
    %3154 = vmatpush2.msra.mxu0 0.0
    %3155 = vmatprep.mubr.f32.mxu0 0.0
    %3156 = vmatmul.mubr.f32.gmra.mxu0 %v3087
    %v3157 = vpop.f32.mrf.mxu0
    %v3158 = vadd.f32 0.0, %v3157
    %v3159 = vpop.f32.mrf.mxu0
    %3160 = vmatprep.mubr.f32.mxu0 0.0
    %3161 = vmatmul.mubr.f32.gmra.mxu0 %v3089
    %v3162 = vpop.f32.mrf.mxu0
    %v3163 = vadd.f32 0.0, %v3162
    %v3164 = vpop.f32.mrf.mxu0
    %3165 = vdwg.mxu0
    %v3166 = vlaneseq
    %v3167 = vshrl.u32 %v3166, 7
    %v3168 = vsub.s32 0, %v3167
    %v3169 = vrot.slane %v2100, %v3168
    %v3170 = vadd.f32 %v3169, %v3158
    %v3171 = vadd.f32 %v3169, %v3163
    %3172 = vrot.lane.b32.xlu0 %v2427, 96
    %v3173 = vpop.permute.xlu0 %3172
    %3174 = vrot.lane.b32.xlu0 %v2427, 32
    %v3175 = vpop.permute.xlu0 %3174
    %v3176 = vsel %vm144, %v3173, 0
    %v3178 = vsel %vm144, %v3175, 0
    %3180 = vmatprep.subr.mxu0 0.0
    %3181 = vmatpush1.xpose.msra.mxu0 0.0
    %3182 = vmatprep.subr.mxu0 0.0
    %3183 = vmatpush1.xpose.msra.mxu0 0.0
    %3184 = vmatprep.subr.mxu0 0.0
    %3185 = vmatpush1.xpose.msra.mxu0 0.0
    %3186 = vmatprep.subr.mxu0 0.0
    %3187 = vmatpush1.xpose.msra.mxu0 0.0
    %3188 = vmatprep.subr.mxu0 0.0
    %3189 = vmatpush1.xpose.msra.mxu0 0.0
    %3190 = vmatprep.subr.mxu0 0.0
    %3191 = vmatpush1.xpose.msra.mxu0 0.0
    %3192 = vmatprep.subr.mxu0 0.0
    %3193 = vmatpush1.xpose.msra.mxu0 0.0
    %3194 = vmatprep.subr.mxu0 0.0
    %3195 = vmatpush1.xpose.msra.mxu0 0.0
    %3196 = vmatprep.subr.mxu0 0.0
    %3197 = vmatpush1.xpose.msra.mxu0 0.0
    %3198 = vmatprep.subr.mxu0 0.0
    %3199 = vmatpush1.xpose.msra.mxu0 0.0
    %3200 = vmatprep.subr.mxu0 0.0
    %3201 = vmatpush1.xpose.msra.mxu0 0.0
    %3202 = vmatprep.subr.mxu0 0.0
    %3203 = vmatpush1.xpose.msra.mxu0 0.0
    %3204 = vmatprep.subr.mxu0 0.0
    %3205 = vmatpush1.xpose.msra.mxu0 0.0
    %3206 = vmatprep.subr.mxu0 0.0
    %3207 = vmatpush1.xpose.msra.mxu0 0.0
    %3208 = vmatprep.subr.mxu0 0.0
    %3209 = vmatpush1.xpose.msra.mxu0 0.0
    %3210 = vmatprep.subr.mxu0 0.0
    %3211 = vmatpush1.xpose.msra.mxu0 %v3178
    %3212 = vmatprep.subr.mxu0 0.0
    %3213 = vmatpush2.xpose.msra.mxu0 0.0
    %3214 = vmatprep.subr.mxu0 0.0
    %3215 = vmatpush2.xpose.msra.mxu0 0.0
    %3216 = vmatprep.subr.mxu0 0.0
    %3217 = vmatpush2.xpose.msra.mxu0 0.0
    %3218 = vmatprep.subr.mxu0 0.0
    %3219 = vmatpush2.xpose.msra.mxu0 0.0
    %3220 = vmatprep.subr.mxu0 0.0
    %3221 = vmatpush2.xpose.msra.mxu0 0.0
    %3222 = vmatprep.subr.mxu0 0.0
    %3223 = vmatpush2.xpose.msra.mxu0 0.0
    %3224 = vmatprep.subr.mxu0 0.0
    %3225 = vmatpush2.xpose.msra.mxu0 0.0
    %3226 = vmatprep.subr.mxu0 0.0
    %3227 = vmatpush2.xpose.msra.mxu0 0.0
    %3228 = vmatprep.subr.mxu0 0.0
    %3229 = vmatpush2.xpose.msra.mxu0 0.0
    %3230 = vmatprep.subr.mxu0 0.0
    %3231 = vmatpush2.xpose.msra.mxu0 0.0
    %3232 = vmatprep.subr.mxu0 0.0
    %3233 = vmatpush2.xpose.msra.mxu0 0.0
    %3234 = vmatprep.subr.mxu0 0.0
    %3235 = vmatpush2.xpose.msra.mxu0 0.0
    %3236 = vmatprep.subr.mxu0 0.0
    %3237 = vmatpush2.xpose.msra.mxu0 0.0
    %3238 = vmatprep.subr.mxu0 0.0
    %3239 = vmatpush2.xpose.msra.mxu0 0.0
    %3240 = vmatprep.subr.mxu0 0.0
    %3241 = vmatpush2.xpose.msra.mxu0 0.0
    %3242 = vmatprep.subr.mxu0 0.0
    %3243 = vmatpush2.xpose.msra.mxu0 0.0
    %3244 = vmatprep.mubr.f32.mxu0 0.0
    %3245 = vmatmul.mubr.f32.gmra.mxu0 %v3176
    %v3246 = vpop.f32.mrf.mxu0
    %v3247 = vadd.f32 0.0, %v3246
    %v3248 = vpop.f32.mrf.mxu0
    %3249 = vdwg.mxu0
    %3250 = vrot.lane.b32.xlu0 %v2551, 96
    %v3251 = vpop.permute.xlu0 %3250
    %3252 = vrot.lane.b32.xlu0 %v2551, 32
    %v3253 = vpop.permute.xlu0 %3252
    %v3254 = vsel %vm144, %v3251, 0
    %v3256 = vsel %vm144, %v3253, 0
    %3258 = vmatprep.subr.mxu0 0.0
    %3259 = vmatpush1.xpose.msra.mxu0 0.0
    %3260 = vmatprep.subr.mxu0 0.0
    %3261 = vmatpush1.xpose.msra.mxu0 0.0
    %3262 = vmatprep.subr.mxu0 0.0
    %3263 = vmatpush1.xpose.msra.mxu0 0.0
    %3264 = vmatprep.subr.mxu0 0.0
    %3265 = vmatpush1.xpose.msra.mxu0 0.0
    %3266 = vmatprep.subr.mxu0 0.0
    %3267 = vmatpush1.xpose.msra.mxu0 0.0
    %3268 = vmatprep.subr.mxu0 0.0
    %3269 = vmatpush1.xpose.msra.mxu0 0.0
    %3270 = vmatprep.subr.mxu0 0.0
    %3271 = vmatpush1.xpose.msra.mxu0 0.0
    %3272 = vmatprep.subr.mxu0 0.0
    %3273 = vmatpush1.xpose.msra.mxu0 0.0
    %3274 = vmatprep.subr.mxu0 0.0
    %3275 = vmatpush1.xpose.msra.mxu0 0.0
    %3276 = vmatprep.subr.mxu0 0.0
    %3277 = vmatpush1.xpose.msra.mxu0 0.0
    %3278 = vmatprep.subr.mxu0 0.0
    %3279 = vmatpush1.xpose.msra.mxu0 0.0
    %3280 = vmatprep.subr.mxu0 0.0
    %3281 = vmatpush1.xpose.msra.mxu0 0.0
    %3282 = vmatprep.subr.mxu0 0.0
    %3283 = vmatpush1.xpose.msra.mxu0 0.0
    %3284 = vmatprep.subr.mxu0 0.0
    %3285 = vmatpush1.xpose.msra.mxu0 0.0
    %3286 = vmatprep.subr.mxu0 0.0
    %3287 = vmatpush1.xpose.msra.mxu0 0.0
    %3288 = vmatprep.subr.mxu0 0.0
    %3289 = vmatpush1.xpose.msra.mxu0 %v3256
    %3290 = vmatprep.subr.mxu0 0.0
    %3291 = vmatpush2.xpose.msra.mxu0 0.0
    %3292 = vmatprep.subr.mxu0 0.0
    %3293 = vmatpush2.xpose.msra.mxu0 0.0
    %3294 = vmatprep.subr.mxu0 0.0
    %3295 = vmatpush2.xpose.msra.mxu0 0.0
    %3296 = vmatprep.subr.mxu0 0.0
    %3297 = vmatpush2.xpose.msra.mxu0 0.0
    %3298 = vmatprep.subr.mxu0 0.0
    %3299 = vmatpush2.xpose.msra.mxu0 0.0
    %3300 = vmatprep.subr.mxu0 0.0
    %3301 = vmatpush2.xpose.msra.mxu0 0.0
    %3302 = vmatprep.subr.mxu0 0.0
    %3303 = vmatpush2.xpose.msra.mxu0 0.0
    %3304 = vmatprep.subr.mxu0 0.0
    %3305 = vmatpush2.xpose.msra.mxu0 0.0
    %3306 = vmatprep.subr.mxu0 0.0
    %3307 = vmatpush2.xpose.msra.mxu0 0.0
    %3308 = vmatprep.subr.mxu0 0.0
    %3309 = vmatpush2.xpose.msra.mxu0 0.0
    %3310 = vmatprep.subr.mxu0 0.0
    %3311 = vmatpush2.xpose.msra.mxu0 0.0
    %3312 = vmatprep.subr.mxu0 0.0
    %3313 = vmatpush2.xpose.msra.mxu0 0.0
    %3314 = vmatprep.subr.mxu0 0.0
    %3315 = vmatpush2.xpose.msra.mxu0 0.0
    %3316 = vmatprep.subr.mxu0 0.0
    %3317 = vmatpush2.xpose.msra.mxu0 0.0
    %3318 = vmatprep.subr.mxu0 0.0
    %3319 = vmatpush2.xpose.msra.mxu0 0.0
    %3320 = vmatprep.subr.mxu0 0.0
    %3321 = vmatpush2.xpose.msra.mxu0 0.0
    %3322 = vmatprep.mubr.f32.mxu0 0.0
    %3323 = vmatmul.mubr.f32.gmra.mxu0 %v3254
    %v3324 = vpop.f32.mrf.mxu0
    %v3325 = vadd.f32 0.0, %v3324
    %v3326 = vpop.f32.mrf.mxu0
    %3327 = vdwg.mxu0
    %v3328 = vsel %vm672, %v3247, -inf
    %3329 = vmax.xlane.f32.xlu0 %v3328
    %v3330 = vpop.xlane.xlu0 %3329
    %v3331 = vsel %vm672, %v3325, -inf
    %3332 = vmax.xlane.f32.xlu0 %v3331
    %v3333 = vpop.xlane.xlu0 %3332
    %v3334 = vsub.f32 %v3247, %v3330
    %v3335 = vsub.f32 %v3325, %v3333
    %v3336 = vmul.f32 %v3334, 1.442695
    %v3337 = vpow.pop %v3336
    %v3338 = vmul.f32 %v3335, 1.442695
    %v3339 = vpow.pop %v3338
    %v3340 = vsel %vm672, %v3337, 0.0
    %3341 = vadd.xlane.f32.xlu0 %v3340
    %v3342 = vpop.xlane.xlu0 %3341
    %v3343 = vsel %vm672, %v3339, 0.0
    %3344 = vadd.xlane.f32.xlu0 %v3343
    %v3345 = vpop.xlane.xlu0 %3344
    %v3346 = vrcp.pop %v3342
    %v3347 = vrcp.pop %v3345
    %v3348 = vmul.f32 %v3337, %v3346
    %v3349 = vmul.f32 %v3339, %v3347
    %3350 = vrot.lane.b32.xlu0 %v2697, 96
    %v3351 = vpop.permute.xlu0 %3350
    %v3353 = vsel %vm743, %v3348, 0
    %v3355 = vsel %vm747, %v3351, 0
    %3357 = vmatprep.subr.mxu0 0.0
    %3358 = vmatpush1.msra.mxu0 0.0
    %3359 = vmatprep.subr.mxu0 0.0
    %3360 = vmatpush1.msra.mxu0 0.0
    %3361 = vmatprep.subr.mxu0 0.0
    %3362 = vmatpush1.msra.mxu0 0.0
    %3363 = vmatprep.subr.mxu0 0.0
    %3364 = vmatpush1.msra.mxu0 0.0
    %3365 = vmatprep.subr.mxu0 0.0
    %3366 = vmatpush1.msra.mxu0 0.0
    %3367 = vmatprep.subr.mxu0 0.0
    %3368 = vmatpush1.msra.mxu0 0.0
    %3369 = vmatprep.subr.mxu0 0.0
    %3370 = vmatpush1.msra.mxu0 0.0
    %3371 = vmatprep.subr.mxu0 0.0
    %3372 = vmatpush1.msra.mxu0 0.0
    %3373 = vmatprep.subr.mxu0 0.0
    %3374 = vmatpush1.msra.mxu0 0.0
    %3375 = vmatprep.subr.mxu0 0.0
    %3376 = vmatpush1.msra.mxu0 0.0
    %3377 = vmatprep.subr.mxu0 0.0
    %3378 = vmatpush1.msra.mxu0 0.0
    %3379 = vmatprep.subr.mxu0 0.0
    %3380 = vmatpush1.msra.mxu0 0.0
    %3381 = vmatprep.subr.mxu0 0.0
    %3382 = vmatpush1.msra.mxu0 0.0
    %3383 = vmatprep.subr.mxu0 0.0
    %3384 = vmatpush1.msra.mxu0 0.0
    %3385 = vmatprep.subr.mxu0 0.0
    %3386 = vmatpush1.msra.mxu0 0.0
    %3387 = vmatprep.subr.mxu0 0.0
    %3388 = vmatpush1.msra.mxu0 %v3355
    %3389 = vmatprep.subr.mxu0 0.0
    %3390 = vmatpush2.msra.mxu0 0.0
    %3391 = vmatprep.subr.mxu0 0.0
    %3392 = vmatpush2.msra.mxu0 0.0
    %3393 = vmatprep.subr.mxu0 0.0
    %3394 = vmatpush2.msra.mxu0 0.0
    %3395 = vmatprep.subr.mxu0 0.0
    %3396 = vmatpush2.msra.mxu0 0.0
    %3397 = vmatprep.subr.mxu0 0.0
    %3398 = vmatpush2.msra.mxu0 0.0
    %3399 = vmatprep.subr.mxu0 0.0
    %3400 = vmatpush2.msra.mxu0 0.0
    %3401 = vmatprep.subr.mxu0 0.0
    %3402 = vmatpush2.msra.mxu0 0.0
    %3403 = vmatprep.subr.mxu0 0.0
    %3404 = vmatpush2.msra.mxu0 0.0
    %3405 = vmatprep.subr.mxu0 0.0
    %3406 = vmatpush2.msra.mxu0 0.0
    %3407 = vmatprep.subr.mxu0 0.0
    %3408 = vmatpush2.msra.mxu0 0.0
    %3409 = vmatprep.subr.mxu0 0.0
    %3410 = vmatpush2.msra.mxu0 0.0
    %3411 = vmatprep.subr.mxu0 0.0
    %3412 = vmatpush2.msra.mxu0 0.0
    %3413 = vmatprep.subr.mxu0 0.0
    %3414 = vmatpush2.msra.mxu0 0.0
    %3415 = vmatprep.subr.mxu0 0.0
    %3416 = vmatpush2.msra.mxu0 0.0
    %3417 = vmatprep.subr.mxu0 0.0
    %3418 = vmatpush2.msra.mxu0 0.0
    %3419 = vmatprep.subr.mxu0 0.0
    %3420 = vmatpush2.msra.mxu0 0.0
    %3421 = vmatprep.mubr.f32.mxu0 0.0
    %3422 = vmatmul.mubr.f32.gmra.mxu0 %v3353
    %v3423 = vpop.f32.mrf.mxu0
    %v3424 = vadd.f32 0.0, %v3423
    %v3425 = vpop.f32.mrf.mxu0
    %3426 = vdwg.mxu0
    %3427 = vrot.lane.b32.xlu0 %v2820, 96
    %v3428 = vpop.permute.xlu0 %3427
    %v3430 = vsel %vm743, %v3349, 0
    %v3432 = vsel %vm747, %v3428, 0
    %3434 = vmatprep.subr.mxu0 0.0
    %3435 = vmatpush1.msra.mxu0 0.0
    %3436 = vmatprep.subr.mxu0 0.0
    %3437 = vmatpush1.msra.mxu0 0.0
    %3438 = vmatprep.subr.mxu0 0.0
    %3439 = vmatpush1.msra.mxu0 0.0
    %3440 = vmatprep.subr.mxu0 0.0
    %3441 = vmatpush1.msra.mxu0 0.0
    %3442 = vmatprep.subr.mxu0 0.0
    %3443 = vmatpush1.msra.mxu0 0.0
    %3444 = vmatprep.subr.mxu0 0.0
    %3445 = vmatpush1.msra.mxu0 0.0
    %3446 = vmatprep.subr.mxu0 0.0
    %3447 = vmatpush1.msra.mxu0 0.0
    %3448 = vmatprep.subr.mxu0 0.0
    %3449 = vmatpush1.msra.mxu0 0.0
    %3450 = vmatprep.subr.mxu0 0.0
    %3451 = vmatpush1.msra.mxu0 0.0
    %3452 = vmatprep.subr.mxu0 0.0
    %3453 = vmatpush1.msra.mxu0 0.0
    %3454 = vmatprep.subr.mxu0 0.0
    %3455 = vmatpush1.msra.mxu0 0.0
    %3456 = vmatprep.subr.mxu0 0.0
    %3457 = vmatpush1.msra.mxu0 0.0
    %3458 = vmatprep.subr.mxu0 0.0
    %3459 = vmatpush1.msra.mxu0 0.0
    %3460 = vmatprep.subr.mxu0 0.0
    %3461 = vmatpush1.msra.mxu0 0.0
    %3462 = vmatprep.subr.mxu0 0.0
    %3463 = vmatpush1.msra.mxu0 0.0
    %3464 = vmatprep.subr.mxu0 0.0
    %3465 = vmatpush1.msra.mxu0 %v3432
    %3466 = vmatprep.subr.mxu0 0.0
    %3467 = vmatpush2.msra.mxu0 0.0
    %3468 = vmatprep.subr.mxu0 0.0
    %3469 = vmatpush2.msra.mxu0 0.0
    %3470 = vmatprep.subr.mxu0 0.0
    %3471 = vmatpush2.msra.mxu0 0.0
    %3472 = vmatprep.subr.mxu0 0.0
    %3473 = vmatpush2.msra.mxu0 0.0
    %3474 = vmatprep.subr.mxu0 0.0
    %3475 = vmatpush2.msra.mxu0 0.0
    %3476 = vmatprep.subr.mxu0 0.0
    %3477 = vmatpush2.msra.mxu0 0.0
    %3478 = vmatprep.subr.mxu0 0.0
    %3479 = vmatpush2.msra.mxu0 0.0
    %3480 = vmatprep.subr.mxu0 0.0
    %3481 = vmatpush2.msra.mxu0 0.0
    %3482 = vmatprep.subr.mxu0 0.0
    %3483 = vmatpush2.msra.mxu0 0.0
    %3484 = vmatprep.subr.mxu0 0.0
    %3485 = vmatpush2.msra.mxu0 0.0
    %3486 = vmatprep.subr.mxu0 0.0
    %3487 = vmatpush2.msra.mxu0 0.0
    %3488 = vmatprep.subr.mxu0 0.0
    %3489 = vmatpush2.msra.mxu0 0.0
    %3490 = vmatprep.subr.mxu0 0.0
    %3491 = vmatpush2.msra.mxu0 0.0
    %3492 = vmatprep.subr.mxu0 0.0
    %3493 = vmatpush2.msra.mxu0 0.0
    %3494 = vmatprep.subr.mxu0 0.0
    %3495 = vmatpush2.msra.mxu0 0.0
    %3496 = vmatprep.subr.mxu0 0.0
    %3497 = vmatpush2.msra.mxu0 0.0
    %3498 = vmatprep.mubr.f32.mxu0 0.0
    %3499 = vmatmul.mubr.f32.gmra.mxu0 %v3430
    %v3500 = vpop.f32.mrf.mxu0
    %v3501 = vadd.f32 0.0, %v3500
    %v3502 = vpop.f32.mrf.mxu0
    %3503 = vdwg.mxu0
    %v3504 = vld [vmem:[%s3 + $0xe8] sm:$0xff]
    %v3505 = vld [vmem:[%s3 + $0xf0] sm:$0xff]
    %v3506 = vld [vmem:[%s3 + $0xf8] sm:$0xff]
    %v3507 = vld [vmem:[%s3 + $0x100] sm:$0xff]
    %v3510 = vcombine.high %v3424, %v3424
    %v3512 = vunpack.c.l.s4 1966171168
    %v3513 = vunpack.c.0.s8 %v3512
    %v3514 = vlaneseq
    %v3515 = vshrl.u32 %v3514, 7
    %v3516 = vsub.s32 %v3513, %v3515
    %v3517 = vrot.slane %v3424, %v3516
    %v3519 = vunpack.c.l.s4 1966171168
    %v3520 = vunpack.c.0.s8 %v3519
    %v3521 = vlaneseq
    %v3522 = vshrl.u32 %v3521, 7
    %v3523 = vsub.s32 %v3520, %v3522
    %v3524 = vrot.slane %v3510, %v3523
    %v3525 = vcombine.high %v3517, %v3517
    %v3526 = vcombine.high %v3524, %v3524
    %v3528 = vunpack.c.l.s4 1966171168
    %v3529 = vunpack.c.0.s8 %v3528
    %v3530 = vlaneseq
    %v3531 = vshrl.u32 %v3530, 7
    %v3532 = vsub.s32 %v3529, %v3531
    %v3533 = vrot.slane %v3517, %v3532
    %v3535 = vunpack.c.l.s4 1966171168
    %v3536 = vunpack.c.0.s8 %v3535
    %v3537 = vlaneseq
    %v3538 = vshrl.u32 %v3537, 7
    %v3539 = vsub.s32 %v3536, %v3538
    %v3540 = vrot.slane %v3524, %v3539
    %v3542 = vunpack.c.l.s4 1966171168
    %v3543 = vunpack.c.0.s8 %v3542
    %v3544 = vlaneseq
    %v3545 = vshrl.u32 %v3544, 7
    %v3546 = vsub.s32 %v3543, %v3545
    %v3547 = vrot.slane %v3525, %v3546
    %v3549 = vunpack.c.l.s4 1966171168
    %v3550 = vunpack.c.0.s8 %v3549
    %v3551 = vlaneseq
    %v3552 = vshrl.u32 %v3551, 7
    %v3553 = vsub.s32 %v3550, %v3552
    %v3554 = vrot.slane %v3526, %v3553
    %v3555 = vcombine.high %v3533, %v3533
    %v3556 = vcombine.high %v3540, %v3540
    %v3557 = vcombine.high %v3547, %v3547
    %v3558 = vcombine.high %v3501, %v3501
    %v3560 = vunpack.c.l.s4 1966171168
    %v3561 = vunpack.c.0.s8 %v3560
    %v3562 = vlaneseq
    %v3563 = vshrl.u32 %v3562, 7
    %v3564 = vsub.s32 %v3561, %v3563
    %v3565 = vrot.slane %v3501, %v3564
    %v3567 = vunpack.c.l.s4 1966171168
    %v3568 = vunpack.c.0.s8 %v3567
    %v3569 = vlaneseq
    %v3570 = vshrl.u32 %v3569, 7
    %v3571 = vsub.s32 %v3568, %v3570
    %v3572 = vrot.slane %v3558, %v3571
    %v3573 = vcombine.high %v3565, %v3565
    %v3574 = vcombine.high %v3572, %v3572
    %v3576 = vunpack.c.l.s4 1966171168
    %v3577 = vunpack.c.0.s8 %v3576
    %v3578 = vlaneseq
    %v3579 = vshrl.u32 %v3578, 7
    %v3580 = vsub.s32 %v3577, %v3579
    %v3581 = vrot.slane %v3565, %v3580
    %v3583 = vunpack.c.l.s4 1966171168
    %v3584 = vunpack.c.0.s8 %v3583
    %v3585 = vlaneseq
    %v3586 = vshrl.u32 %v3585, 7
    %v3587 = vsub.s32 %v3584, %v3586
    %v3588 = vrot.slane %v3572, %v3587
    %v3590 = vunpack.c.l.s4 1966171168
    %v3591 = vunpack.c.0.s8 %v3590
    %v3592 = vlaneseq
    %v3593 = vshrl.u32 %v3592, 7
    %v3594 = vsub.s32 %v3591, %v3593
    %v3595 = vrot.slane %v3573, %v3594
    %v3597 = vunpack.c.l.s4 1966171168
    %v3598 = vunpack.c.0.s8 %v3597
    %v3599 = vlaneseq
    %v3600 = vshrl.u32 %v3599, 7
    %v3601 = vsub.s32 %v3598, %v3600
    %v3602 = vrot.slane %v3574, %v3601
    %v3603 = vcombine.high %v3581, %v3581
    %v3604 = vcombine.high %v3588, %v3588
    %v3605 = vcombine.high %v3595, %v3595
    %v3606 = vcombine.low %v3533, %v3547
    %v3607 = vcombine.low %v3555, %v3557
    %v3608 = vcombine.low %v3540, %v3554
    %v3609 = vcombine.low %v3556, %v3581
    %v3611 = vunpack.c.l.s4 1966171168
    %v3612 = vunpack.c.0.s8 %v3611
    %v3613 = vlaneseq
    %v3614 = vshrl.u32 %v3613, 7
    %v3615 = vsub.s32 %v3612, %v3614
    %v3616 = vrot.slane %v3606, %v3615
    %v3618 = vunpack.c.l.s4 1966171168
    %v3619 = vunpack.c.0.s8 %v3618
    %v3620 = vlaneseq
    %v3621 = vshrl.u32 %v3620, 7
    %v3622 = vsub.s32 %v3619, %v3621
    %v3623 = vrot.slane %v3607, %v3622
    %v3625 = vunpack.c.l.s4 1966171168
    %v3626 = vunpack.c.0.s8 %v3625
    %v3627 = vlaneseq
    %v3628 = vshrl.u32 %v3627, 7
    %v3629 = vsub.s32 %v3626, %v3628
    %v3630 = vrot.slane %v3608, %v3629
    %v3632 = vunpack.c.l.s4 1966171168
    %v3633 = vunpack.c.0.s8 %v3632
    %v3634 = vlaneseq
    %v3635 = vshrl.u32 %v3634, 7
    %v3636 = vsub.s32 %v3633, %v3635
    %v3637 = vrot.slane %v3609, %v3636
    %v3638 = vcombine.low %v3616, %v3623
    %v3639 = vcombine.low %v3630, %v3637
    %v3641 = vunpack.c.l.s4 1966171168
    %v3642 = vunpack.c.0.s8 %v3641
    %v3643 = vlaneseq
    %v3644 = vshrl.u32 %v3643, 7
    %v3645 = vsub.s32 %v3642, %v3644
    %v3646 = vrot.slane %v3638, %v3645
    %v3648 = vunpack.c.l.s4 1966171168
    %v3649 = vunpack.c.0.s8 %v3648
    %v3650 = vlaneseq
    %v3651 = vshrl.u32 %v3650, 7
    %v3652 = vsub.s32 %v3649, %v3651
    %v3653 = vrot.slane %v3639, %v3652
    %v3654 = vcombine.low %v3646, %v3653
    %v3655 = vcombine.low %v3595, %v3603
    %v3656 = vcombine.low %v3605, %v3588
    %v3657 = vcombine.low %v3602, %v3604
    %v3659 = vunpack.c.l.s4 1966171168
    %v3660 = vunpack.c.0.s8 %v3659
    %v3661 = vlaneseq
    %v3662 = vshrl.u32 %v3661, 7
    %v3663 = vsub.s32 %v3660, %v3662
    %v3664 = vrot.slane %v3655, %v3663
    %v3666 = vunpack.c.l.s4 1966171168
    %v3667 = vunpack.c.0.s8 %v3666
    %v3668 = vlaneseq
    %v3669 = vshrl.u32 %v3668, 7
    %v3670 = vsub.s32 %v3667, %v3669
    %v3671 = vrot.slane %v3656, %v3670
    %v3673 = vunpack.c.l.s4 1966171168
    %v3674 = vunpack.c.0.s8 %v3673
    %v3675 = vlaneseq
    %v3676 = vshrl.u32 %v3675, 7
    %v3677 = vsub.s32 %v3674, %v3676
    %v3678 = vrot.slane %v3657, %v3677
    %v3679 = vcombine.low %v3664, %v3671
    %v3681 = vunpack.c.l.s4 1966171168
    %v3682 = vunpack.c.0.s8 %v3681
    %v3683 = vlaneseq
    %v3684 = vshrl.u32 %v3683, 7
    %v3685 = vsub.s32 %v3682, %v3684
    %v3686 = vrot.slane %v3679, %v3685
    %v3688 = vunpack.c.l.s4 1966171168
    %v3689 = vunpack.c.0.s8 %v3688
    %v3690 = vlaneseq
    %v3691 = vshrl.u32 %v3690, 7
    %v3692 = vsub.s32 %v3689, %v3691
    %v3693 = vrot.slane %v3678, %v3692
    %v3694 = vcombine.low %v3686, %v3693
    %v3695 = vsel %vm144, %v3654, 0
    %v3697 = vsel %vm144, %v3694, 0
    %3699 = vmatprep.subr.mxu0 0.0
    %3700 = vmatpush1.msra.mxu0 0.0
    %3701 = vmatprep.subr.mxu0 0.0
    %3702 = vmatpush1.msra.mxu0 0.0
    %3703 = vmatprep.subr.mxu0 0.0
    %3704 = vmatpush1.msra.mxu0 0.0
    %3705 = vmatprep.subr.mxu0 0.0
    %3706 = vmatpush1.msra.mxu0 0.0
    %3707 = vmatprep.subr.mxu0 0.0
    %3708 = vmatpush1.msra.mxu0 0.0
    %3709 = vmatprep.subr.mxu0 0.0
    %3710 = vmatpush1.msra.mxu0 0.0
    %3711 = vmatprep.subr.mxu0 0.0
    %3712 = vmatpush1.msra.mxu0 0.0
    %3713 = vmatprep.subr.mxu0 0.0
    %3714 = vmatpush1.msra.mxu0 0.0
    %3715 = vmatprep.subr.mxu0 0.0
    %3716 = vmatpush1.msra.mxu0 0.0
    %3717 = vmatprep.subr.mxu0 0.0
    %3718 = vmatpush1.msra.mxu0 0.0
    %3719 = vmatprep.subr.mxu0 0.0
    %3720 = vmatpush1.msra.mxu0 0.0
    %3721 = vmatprep.subr.mxu0 0.0
    %3722 = vmatpush1.msra.mxu0 0.0
    %3723 = vmatprep.subr.mxu0 0.0
    %3724 = vmatpush1.msra.mxu0 %v3507
    %3725 = vmatprep.subr.mxu0 0.0
    %3726 = vmatpush1.msra.mxu0 %v3506
    %3727 = vmatprep.subr.mxu0 0.0
    %3728 = vmatpush1.msra.mxu0 %v3505
    %3729 = vmatprep.subr.mxu0 0.0
    %3730 = vmatpush1.msra.mxu0 %v3504
    %3731 = vmatprep.subr.mxu0 0.0
    %3732 = vmatpush2.msra.mxu0 0.0
    %3733 = vmatprep.subr.mxu0 0.0
    %3734 = vmatpush2.msra.mxu0 0.0
    %3735 = vmatprep.subr.mxu0 0.0
    %3736 = vmatpush2.msra.mxu0 0.0
    %3737 = vmatprep.subr.mxu0 0.0
    %3738 = vmatpush2.msra.mxu0 0.0
    %3739 = vmatprep.subr.mxu0 0.0
    %3740 = vmatpush2.msra.mxu0 0.0
    %3741 = vmatprep.subr.mxu0 0.0
    %3742 = vmatpush2.msra.mxu0 0.0
    %3743 = vmatprep.subr.mxu0 0.0
    %3744 = vmatpush2.msra.mxu0 0.0
    %3745 = vmatprep.subr.mxu0 0.0
    %3746 = vmatpush2.msra.mxu0 0.0
    %3747 = vmatprep.subr.mxu0 0.0
    %3748 = vmatpush2.msra.mxu0 0.0
    %3749 = vmatprep.subr.mxu0 0.0
    %3750 = vmatpush2.msra.mxu0 0.0
    %3751 = vmatprep.subr.mxu0 0.0
    %3752 = vmatpush2.msra.mxu0 0.0
    %3753 = vmatprep.subr.mxu0 0.0
    %3754 = vmatpush2.msra.mxu0 0.0
    %3755 = vmatprep.subr.mxu0 0.0
    %3756 = vmatpush2.msra.mxu0 0.0
    %3757 = vmatprep.subr.mxu0 0.0
    %3758 = vmatpush2.msra.mxu0 0.0
    %3759 = vmatprep.subr.mxu0 0.0
    %3760 = vmatpush2.msra.mxu0 0.0
    %3761 = vmatprep.subr.mxu0 0.0
    %3762 = vmatpush2.msra.mxu0 0.0
    %3763 = vmatprep.mubr.f32.mxu0 0.0
    %3764 = vmatmul.mubr.f32.gmra.mxu0 %v3695
    %v3765 = vpop.f32.mrf.mxu0
    %v3766 = vadd.f32 0.0, %v3765
    %v3767 = vpop.f32.mrf.mxu0
    %3768 = vmatprep.mubr.f32.mxu0 0.0
    %3769 = vmatmul.mubr.f32.gmra.mxu0 %v3697
    %v3770 = vpop.f32.mrf.mxu0
    %v3771 = vadd.f32 0.0, %v3770
    %v3772 = vpop.f32.mrf.mxu0
    %3773 = vdwg.mxu0
    %v3774 = vadd.f32 %v3170, %v3766
    %v3775 = vadd.f32 %v3171, %v3771
    %v3776 = vadd.f32 %v3774, %v2069
    %v3777 = vadd.f32 %v3775, %v2070
    %v3778 = vsel %vm144, %v3776, 0.0
    %3779 = vadd.xlane.f32.xlu0 %v3778
    %v3780 = vpop.xlane.xlu0 %3779
    %v3781 = vsel %vm1828, %v3777, 0.0
    %3782 = vadd.xlane.f32.xlu0 %v3781
    %v3783 = vpop.xlane.xlu0 %3782
    %v3784 = vmul.f32 %v3780, %v1832
    %v3785 = vmul.f32 %v3783, %v1832
    %v3786 = vsub.f32 %v3776, %v3784
    %v3787 = vsub.f32 %v3777, %v3785
    %v3788 = vmul.f32 %v3786, %v3786
    %v3789 = vmul.f32 %v3787, %v3787
    %v3790 = vsel %vm144, %v3788, 0.0
    %3791 = vadd.xlane.f32.xlu0 %v3790
    %v3792 = vpop.xlane.xlu0 %3791
    %v3793 = vsel %vm1828, %v3789, 0.0
    %3794 = vadd.xlane.f32.xlu0 %v3793
    %v3795 = vpop.xlane.xlu0 %3794
    %v3796 = vmul.f32 %v3792, %v1832
    %v3797 = vmul.f32 %v3795, %v1832
    %v3798 = vadd.f32 %v3796, 1e-05
    %v3799 = vadd.f32 %v3797, 1e-05
    %v3800 = vrsqrt.pop %v3798
    %v3801 = vrsqrt.pop %v3799
    %v3802 = vmul.f32 %v3786, %v3800
    %v3803 = vmul.f32 %v3787, %v3801
    %v3804 = vlaneseq
    %v3805 = vshrl.u32 %v3804, 7
    %v3806 = vsub.s32 1, %v3805
    %v3807 = vrot.slane %v2100, %v3806
    %v3808 = vmul.f32 %v3802, %v3807
    %v3809 = vmul.f32 %v3803, %v3807
    %v3810 = vlaneseq
    %v3811 = vshrl.u32 %v3810, 7
    %v3812 = vsub.s32 2, %v3811
    %v3813 = vrot.slane %v2100, %v3812
    %v3814 = vadd.f32 %v3808, %v3813
    %v3815 = vadd.f32 %v3809, %v3813
    %v3816 = vlaneseq
    %v3817 = vshrl.u32 %v3816, 7
    %v3818 = vsub.s32 0, %v3817
    %v3819 = vrot.slane %v2083, %v3818
    %v3821 = vsel %vm144, %v3814, 0
    %v3824 = vsel %vm144, %v3815, 0
    %3826 = vmatprep.subr.mxu0 0.0
    %3827 = vmatpush1.msra.mxu0 0.0
    %3828 = vmatprep.subr.mxu0 0.0
    %3829 = vmatpush1.msra.mxu0 0.0
    %3830 = vmatprep.subr.mxu0 0.0
    %3831 = vmatpush1.msra.mxu0 0.0
    %3832 = vmatprep.subr.mxu0 0.0
    %3833 = vmatpush1.msra.mxu0 0.0
    %3834 = vmatprep.subr.mxu0 0.0
    %3835 = vmatpush1.msra.mxu0 0.0
    %3836 = vmatprep.subr.mxu0 0.0
    %3837 = vmatpush1.msra.mxu0 0.0
    %3838 = vmatprep.subr.mxu0 0.0
    %3839 = vmatpush1.msra.mxu0 0.0
    %3840 = vmatprep.subr.mxu0 0.0
    %3841 = vmatpush1.msra.mxu0 0.0
    %3842 = vmatprep.subr.mxu0 0.0
    %3843 = vmatpush1.msra.mxu0 0.0
    %3844 = vmatprep.subr.mxu0 0.0
    %3845 = vmatpush1.msra.mxu0 0.0
    %3846 = vmatprep.subr.mxu0 0.0
    %3847 = vmatpush1.msra.mxu0 0.0
    %3848 = vmatprep.subr.mxu0 0.0
    %3849 = vmatpush1.msra.mxu0 0.0
    %3850 = vmatprep.subr.mxu0 0.0
    %3851 = vmatpush1.msra.mxu0 %v2082
    %3852 = vmatprep.subr.mxu0 0.0
    %3853 = vmatpush1.msra.mxu0 %v2081
    %3854 = vmatprep.subr.mxu0 0.0
    %3855 = vmatpush1.msra.mxu0 %v2080
    %3856 = vmatprep.subr.mxu0 0.0
    %3857 = vmatpush1.msra.mxu0 %v2079
    %3858 = vmatprep.subr.mxu0 0.0
    %3859 = vmatpush2.msra.mxu0 0.0
    %3860 = vmatprep.subr.mxu0 0.0
    %3861 = vmatpush2.msra.mxu0 0.0
    %3862 = vmatprep.subr.mxu0 0.0
    %3863 = vmatpush2.msra.mxu0 0.0
    %3864 = vmatprep.subr.mxu0 0.0
    %3865 = vmatpush2.msra.mxu0 0.0
    %3866 = vmatprep.subr.mxu0 0.0
    %3867 = vmatpush2.msra.mxu0 0.0
    %3868 = vmatprep.subr.mxu0 0.0
    %3869 = vmatpush2.msra.mxu0 0.0
    %3870 = vmatprep.subr.mxu0 0.0
    %3871 = vmatpush2.msra.mxu0 0.0
    %3872 = vmatprep.subr.mxu0 0.0
    %3873 = vmatpush2.msra.mxu0 0.0
    %3874 = vmatprep.subr.mxu0 0.0
    %3875 = vmatpush2.msra.mxu0 0.0
    %3876 = vmatprep.subr.mxu0 0.0
    %3877 = vmatpush2.msra.mxu0 0.0
    %3878 = vmatprep.subr.mxu0 0.0
    %3879 = vmatpush2.msra.mxu0 0.0
    %3880 = vmatprep.subr.mxu0 0.0
    %3881 = vmatpush2.msra.mxu0 0.0
    %3882 = vmatprep.subr.mxu0 0.0
    %3883 = vmatpush2.msra.mxu0 0.0
    %3884 = vmatprep.subr.mxu0 0.0
    %3885 = vmatpush2.msra.mxu0 0.0
    %3886 = vmatprep.subr.mxu0 0.0
    %3887 = vmatpush2.msra.mxu0 0.0
    %3888 = vmatprep.subr.mxu0 0.0
    %3889 = vmatpush2.msra.mxu0 0.0
    %3890 = vmatprep.mubr.f32.mxu0 0.0
    %3891 = vmatmul.mubr.f32.gmra.mxu0 %v3821
    %v3892 = vpop.f32.mrf.mxu0
    %v3893 = vadd.f32 %v3819, %v3892
    %v3894 = vpop.f32.mrf.mxu0
    %3895 = vmatprep.mubr.f32.mxu0 0.0
    %3896 = vmatmul.mubr.f32.gmra.mxu0 %v3824
    %v3897 = vpop.f32.mrf.mxu0
    %v3898 = vadd.f32 %v3819, %v3897
    %v3899 = vpop.f32.mrf.mxu0
    %3900 = vdwg.mxu0
    %v3901 = vmax.f32 %v3893, 0.0
    %v3902 = vmax.f32 %v3898, 0.0
    %v3903 = vlaneseq
    %v3904 = vshrl.u32 %v3903, 7
    %v3905 = vsub.s32 3, %v3904
    %v3906 = vrot.slane %v2100, %v3905
    %3907 = vmatprep.subr.mxu0 0.0
    %3908 = vmatpush1.msra.mxu0 %v2099
    %3909 = vmatprep.subr.mxu0 0.0
    %3910 = vmatpush1.msra.mxu0 %v2098
    %3911 = vmatprep.subr.mxu0 0.0
    %3912 = vmatpush1.msra.mxu0 %v2097
    %3913 = vmatprep.subr.mxu0 0.0
    %3914 = vmatpush1.msra.mxu0 %v2096
    %3915 = vmatprep.subr.mxu0 0.0
    %3916 = vmatpush1.msra.mxu0 %v2095
    %3917 = vmatprep.subr.mxu0 0.0
    %3918 = vmatpush1.msra.mxu0 %v2094
    %3919 = vmatprep.subr.mxu0 0.0
    %3920 = vmatpush1.msra.mxu0 %v2093
    %3921 = vmatprep.subr.mxu0 0.0
    %3922 = vmatpush1.msra.mxu0 %v2092
    %3923 = vmatprep.subr.mxu0 0.0
    %3924 = vmatpush1.msra.mxu0 %v2091
    %3925 = vmatprep.subr.mxu0 0.0
    %3926 = vmatpush1.msra.mxu0 %v2090
    %3927 = vmatprep.subr.mxu0 0.0
    %3928 = vmatpush1.msra.mxu0 %v2089
    %3929 = vmatprep.subr.mxu0 0.0
    %3930 = vmatpush1.msra.mxu0 %v2088
    %3931 = vmatprep.subr.mxu0 0.0
    %3932 = vmatpush1.msra.mxu0 %v2087
    %3933 = vmatprep.subr.mxu0 0.0
    %3934 = vmatpush1.msra.mxu0 %v2086
    %3935 = vmatprep.subr.mxu0 0.0
    %3936 = vmatpush1.msra.mxu0 %v2085
    %3937 = vmatprep.subr.mxu0 0.0
    %3938 = vmatpush1.msra.mxu0 %v2084
    %3939 = vmatprep.subr.mxu0 0.0
    %3940 = vmatpush2.msra.mxu0 0.0
    %3941 = vmatprep.subr.mxu0 0.0
    %3942 = vmatpush2.msra.mxu0 0.0
    %3943 = vmatprep.subr.mxu0 0.0
    %3944 = vmatpush2.msra.mxu0 0.0
    %3945 = vmatprep.subr.mxu0 0.0
    %3946 = vmatpush2.msra.mxu0 0.0
    %3947 = vmatprep.subr.mxu0 0.0
    %3948 = vmatpush2.msra.mxu0 0.0
    %3949 = vmatprep.subr.mxu0 0.0
    %3950 = vmatpush2.msra.mxu0 0.0
    %3951 = vmatprep.subr.mxu0 0.0
    %3952 = vmatpush2.msra.mxu0 0.0
    %3953 = vmatprep.subr.mxu0 0.0
    %3954 = vmatpush2.msra.mxu0 0.0
    %3955 = vmatprep.subr.mxu0 0.0
    %3956 = vmatpush2.msra.mxu0 0.0
    %3957 = vmatprep.subr.mxu0 0.0
    %3958 = vmatpush2.msra.mxu0 0.0
    %3959 = vmatprep.subr.mxu0 0.0
    %3960 = vmatpush2.msra.mxu0 0.0
    %3961 = vmatprep.subr.mxu0 0.0
    %3962 = vmatpush2.msra.mxu0 0.0
    %3963 = vmatprep.subr.mxu0 0.0
    %3964 = vmatpush2.msra.mxu0 0.0
    %3965 = vmatprep.subr.mxu0 0.0
    %3966 = vmatpush2.msra.mxu0 0.0
    %3967 = vmatprep.subr.mxu0 0.0
    %3968 = vmatpush2.msra.mxu0 0.0
    %3969 = vmatprep.subr.mxu0 0.0
    %3970 = vmatpush2.msra.mxu0 0.0
    %3971 = vmatprep.mubr.f32.mxu0 0.0
    %3972 = vmatmul.mubr.f32.gmra.mxu0 %v3901
    %v3973 = vpop.f32.mrf.mxu0
    %v3974 = vadd.f32 %v3906, %v3973
    %v3975 = vpop.f32.mrf.mxu0
    %3976 = vmatprep.mubr.f32.mxu0 0.0
    %3977 = vmatmul.mubr.f32.gmra.mxu0 %v3902
    %v3978 = vpop.f32.mrf.mxu0
    %v3979 = vadd.f32 %v3906, %v3978
    %v3980 = vpop.f32.mrf.mxu0
    %3981 = vdwg.mxu0
    %v3982 = vadd.f32 %v3974, %v3814
    %v3983 = vadd.f32 %v3979, %v3815
    %v3984 = vsel %vm144, %v3982, 0.0
    %3985 = vadd.xlane.f32.xlu0 %v3984
    %v3986 = vpop.xlane.xlu0 %3985
    %v3987 = vsel %vm1828, %v3983, 0.0
    %3988 = vadd.xlane.f32.xlu0 %v3987
    %v3989 = vpop.xlane.xlu0 %3988
    %v3990 = vmul.f32 %v3986, %v1832
    %v3991 = vmul.f32 %v3989, %v1832
    %v3992 = vsub.f32 %v3982, %v3990
    %v3993 = vsub.f32 %v3983, %v3991
    %v3994 = vmul.f32 %v3992, %v3992
    %v3995 = vmul.f32 %v3993, %v3993
    %v3996 = vsel %vm144, %v3994, 0.0
    %3997 = vadd.xlane.f32.xlu0 %v3996
    %v3998 = vpop.xlane.xlu0 %3997
    %v3999 = vsel %vm1828, %v3995, 0.0
    %4000 = vadd.xlane.f32.xlu0 %v3999
    %v4001 = vpop.xlane.xlu0 %4000
    %v4002 = vmul.f32 %v3998, %v1832
    %v4003 = vmul.f32 %v4001, %v1832
    %v4004 = vadd.f32 %v4002, 1e-05
    %v4005 = vadd.f32 %v4003, 1e-05
    %v4006 = vrsqrt.pop %v4004
    %v4007 = vrsqrt.pop %v4005
    %v4008 = vmul.f32 %v3992, %v4006
    %v4009 = vmul.f32 %v3993, %v4007
    %v4010 = vlaneseq
    %v4011 = vshrl.u32 %v4010, 7
    %v4012 = vsub.s32 4, %v4011
    %v4013 = vrot.slane %v2100, %v4012
    %v4014 = vmul.f32 %v4008, %v4013
    %v4015 = vmul.f32 %v4009, %v4013
    %v4016 = vlaneseq
    %v4017 = vshrl.u32 %v4016, 7
    %v4018 = vsub.s32 5, %v4017
    %v4019 = vrot.slane %v2100, %v4018
    %v4020 = vadd.f32 %v4014, %v4019
    %v4021 = vadd.f32 %v4015, %v4019
    %v4022 = vld [vmem:[%s3 + $0x1c8] sm:$0xff]
    %v4023 = vld [vmem:[%s3 + $0x1d0] sm:$0xff]
    %v4024 = vld [vmem:[%s3 + $0x1d8] sm:$0xff]
    %v4025 = vld [vmem:[%s3 + $0x1e0] sm:$0xff]
    %v4026 = vld [vmem:[%s3 + $0x1e8] sm:$0x1]
    %v4027 = vlaneseq
    %v4028 = vshrl.u32 %v4027, 7
    %v4029 = vsub.s32 0, %v4028
    %v4030 = vrot.slane %v4026, %v4029
    %v4032 = vsel %vm144, %v4020, 0
    %v4035 = vsel %vm144, %v4021, 0
    %4037 = vmatprep.subr.mxu0 0.0
    %4038 = vmatpush1.msra.mxu0 0.0
    %4039 = vmatprep.subr.mxu0 0.0
    %4040 = vmatpush1.msra.mxu0 0.0
    %4041 = vmatprep.subr.mxu0 0.0
    %4042 = vmatpush1.msra.mxu0 0.0
    %4043 = vmatprep.subr.mxu0 0.0
    %4044 = vmatpush1.msra.mxu0 0.0
    %4045 = vmatprep.subr.mxu0 0.0
    %4046 = vmatpush1.msra.mxu0 0.0
    %4047 = vmatprep.subr.mxu0 0.0
    %4048 = vmatpush1.msra.mxu0 0.0
    %4049 = vmatprep.subr.mxu0 0.0
    %4050 = vmatpush1.msra.mxu0 0.0
    %4051 = vmatprep.subr.mxu0 0.0
    %4052 = vmatpush1.msra.mxu0 0.0
    %4053 = vmatprep.subr.mxu0 0.0
    %4054 = vmatpush1.msra.mxu0 0.0
    %4055 = vmatprep.subr.mxu0 0.0
    %4056 = vmatpush1.msra.mxu0 0.0
    %4057 = vmatprep.subr.mxu0 0.0
    %4058 = vmatpush1.msra.mxu0 0.0
    %4059 = vmatprep.subr.mxu0 0.0
    %4060 = vmatpush1.msra.mxu0 0.0
    %4061 = vmatprep.subr.mxu0 0.0
    %4062 = vmatpush1.msra.mxu0 %v4025
    %4063 = vmatprep.subr.mxu0 0.0
    %4064 = vmatpush1.msra.mxu0 %v4024
    %4065 = vmatprep.subr.mxu0 0.0
    %4066 = vmatpush1.msra.mxu0 %v4023
    %4067 = vmatprep.subr.mxu0 0.0
    %4068 = vmatpush1.msra.mxu0 %v4022
    %4069 = vmatprep.subr.mxu0 0.0
    %4070 = vmatpush2.msra.mxu0 0.0
    %4071 = vmatprep.subr.mxu0 0.0
    %4072 = vmatpush2.msra.mxu0 0.0
    %4073 = vmatprep.subr.mxu0 0.0
    %4074 = vmatpush2.msra.mxu0 0.0
    %4075 = vmatprep.subr.mxu0 0.0
    %4076 = vmatpush2.msra.mxu0 0.0
    %4077 = vmatprep.subr.mxu0 0.0
    %4078 = vmatpush2.msra.mxu0 0.0
    %4079 = vmatprep.subr.mxu0 0.0
    %4080 = vmatpush2.msra.mxu0 0.0
    %4081 = vmatprep.subr.mxu0 0.0
    %4082 = vmatpush2.msra.mxu0 0.0
    %4083 = vmatprep.subr.mxu0 0.0
    %4084 = vmatpush2.msra.mxu0 0.0
    %4085 = vmatprep.subr.mxu0 0.0
    %4086 = vmatpush2.msra.mxu0 0.0
    %4087 = vmatprep.subr.mxu0 0.0
    %4088 = vmatpush2.msra.mxu0 0.0
    %4089 = vmatprep.subr.mxu0 0.0
    %4090 = vmatpush2.msra.mxu0 0.0
    %4091 = vmatprep.subr.mxu0 0.0
    %4092 = vmatpush2.msra.mxu0 0.0
    %4093 = vmatprep.subr.mxu0 0.0
    %4094 = vmatpush2.msra.mxu0 0.0
    %4095 = vmatprep.subr.mxu0 0.0
    %4096 = vmatpush2.msra.mxu0 0.0
    %4097 = vmatprep.subr.mxu0 0.0
    %4098 = vmatpush2.msra.mxu0 0.0
    %4099 = vmatprep.subr.mxu0 0.0
    %4100 = vmatpush2.msra.mxu0 0.0
    %4101 = vmatprep.mubr.f32.mxu0 0.0
    %4102 = vmatmul.mubr.f32.gmra.mxu0 %v4032
    %v4103 = vpop.f32.mrf.mxu0
    %v4104 = vadd.f32 %v4030, %v4103
    %v4105 = vpop.f32.mrf.mxu0
    %4106 = vmatprep.mubr.f32.mxu0 0.0
    %4107 = vmatmul.mubr.f32.gmra.mxu0 %v4035
    %v4108 = vpop.f32.mrf.mxu0
    %v4109 = vadd.f32 %v4030, %v4108
    %v4110 = vpop.f32.mrf.mxu0
    %4111 = vdwg.mxu0
    %v4114 = vcombine.high %v4104, %v4104
    %v4116 = vunpack.c.l.s4 1966171168
    %v4117 = vunpack.c.0.s8 %v4116
    %v4118 = vlaneseq
    %v4119 = vshrl.u32 %v4118, 7
    %v4120 = vsub.s32 %v4117, %v4119
    %v4121 = vrot.slane %v4104, %v4120
    %v4123 = vunpack.c.l.s4 1966171168
    %v4124 = vunpack.c.0.s8 %v4123
    %v4125 = vlaneseq
    %v4126 = vshrl.u32 %v4125, 7
    %v4127 = vsub.s32 %v4124, %v4126
    %v4128 = vrot.slane %v4114, %v4127
    %v4129 = vcombine.high %v4121, %v4121
    %v4130 = vcombine.high %v4128, %v4128
    %v4132 = vunpack.c.l.s4 1966171168
    %v4133 = vunpack.c.0.s8 %v4132
    %v4134 = vlaneseq
    %v4135 = vshrl.u32 %v4134, 7
    %v4136 = vsub.s32 %v4133, %v4135
    %v4137 = vrot.slane %v4121, %v4136
    %v4139 = vunpack.c.l.s4 1966171168
    %v4140 = vunpack.c.0.s8 %v4139
    %v4141 = vlaneseq
    %v4142 = vshrl.u32 %v4141, 7
    %v4143 = vsub.s32 %v4140, %v4142
    %v4144 = vrot.slane %v4128, %v4143
    %v4146 = vunpack.c.l.s4 1966171168
    %v4147 = vunpack.c.0.s8 %v4146
    %v4148 = vlaneseq
    %v4149 = vshrl.u32 %v4148, 7
    %v4150 = vsub.s32 %v4147, %v4149
    %v4151 = vrot.slane %v4129, %v4150
    %v4153 = vunpack.c.l.s4 1966171168
    %v4154 = vunpack.c.0.s8 %v4153
    %v4155 = vlaneseq
    %v4156 = vshrl.u32 %v4155, 7
    %v4157 = vsub.s32 %v4154, %v4156
    %v4158 = vrot.slane %v4130, %v4157
    %v4159 = vcombine.high %v4137, %v4137
    %v4160 = vcombine.high %v4144, %v4144
    %v4161 = vcombine.high %v4151, %v4151
    %v4162 = vcombine.high %v4158, %v4158
    %v4163 = vcombine.high %v4109, %v4109
    %v4165 = vunpack.c.l.s4 1966171168
    %v4166 = vunpack.c.0.s8 %v4165
    %v4167 = vlaneseq
    %v4168 = vshrl.u32 %v4167, 7
    %v4169 = vsub.s32 %v4166, %v4168
    %v4170 = vrot.slane %v4109, %v4169
    %v4172 = vunpack.c.l.s4 1966171168
    %v4173 = vunpack.c.0.s8 %v4172
    %v4174 = vlaneseq
    %v4175 = vshrl.u32 %v4174, 7
    %v4176 = vsub.s32 %v4173, %v4175
    %v4177 = vrot.slane %v4163, %v4176
    %v4178 = vcombine.high %v4170, %v4170
    %v4179 = vcombine.high %v4177, %v4177
    %v4181 = vunpack.c.l.s4 1966171168
    %v4182 = vunpack.c.0.s8 %v4181
    %v4183 = vlaneseq
    %v4184 = vshrl.u32 %v4183, 7
    %v4185 = vsub.s32 %v4182, %v4184
    %v4186 = vrot.slane %v4170, %v4185
    %v4188 = vunpack.c.l.s4 1966171168
    %v4189 = vunpack.c.0.s8 %v4188
    %v4190 = vlaneseq
    %v4191 = vshrl.u32 %v4190, 7
    %v4192 = vsub.s32 %v4189, %v4191
    %v4193 = vrot.slane %v4178, %v4192
    %v4195 = vunpack.c.l.s4 1966171168
    %v4196 = vunpack.c.0.s8 %v4195
    %v4197 = vlaneseq
    %v4198 = vshrl.u32 %v4197, 7
    %v4199 = vsub.s32 %v4196, %v4198
    %v4200 = vrot.slane %v4179, %v4199
    %v4201 = vcombine.high %v4186, %v4186
    %v4208 = vld [vmem:[%s3 + $0x218] sm:$0xff]
    %v4209 = vld [vmem:[%s3 + $0x220] sm:$0xff]
    %v4210 = vld [vmem:[%s3 + $0x228] sm:$0xff]
    %v4211 = vld [vmem:[%s3 + $0x230] sm:$0xff]
    %v4212 = vld [vmem:[%s3 + $0x238] sm:$0xf]
    %v4213 = vld [vmem:[%s3 + $0x23c] sm:$0x1]
    %v4214 = vld [vmem:[%s3 + $0x23d] sm:$0xff]
    %v4215 = vld [vmem:[%s3 + $0x245] sm:$0xff]
    %v4216 = vld [vmem:[%s3 + $0x24d] sm:$0x1]
    %vm4217 = vcmask 31744
    %v4219 = vsel %vm4217, %v18, 0
    %vm4221 = vcmask 1043456
    %v4223 = vsel %vm4221, %v4212, 0
    %4225 = vmatprep.subr.mxu0 0.0
    %4226 = vmatpush1.msra.mxu0 0.0
    %4227 = vmatprep.subr.mxu0 0.0
    %4228 = vmatpush1.msra.mxu0 0.0
    %4229 = vmatprep.subr.mxu0 0.0
    %4230 = vmatpush1.msra.mxu0 0.0
    %4231 = vmatprep.subr.mxu0 0.0
    %4232 = vmatpush1.msra.mxu0 0.0
    %4233 = vmatprep.subr.mxu0 0.0
    %4234 = vmatpush1.msra.mxu0 0.0
    %4235 = vmatprep.subr.mxu0 0.0
    %4236 = vmatpush1.msra.mxu0 0.0
    %4237 = vmatprep.subr.mxu0 0.0
    %4238 = vmatpush1.msra.mxu0 0.0
    %4239 = vmatprep.subr.mxu0 0.0
    %4240 = vmatpush1.msra.mxu0 0.0
    %4241 = vmatprep.subr.mxu0 0.0
    %4242 = vmatpush1.msra.mxu0 0.0
    %4243 = vmatprep.subr.mxu0 0.0
    %4244 = vmatpush1.msra.mxu0 0.0
    %4245 = vmatprep.subr.mxu0 0.0
    %4246 = vmatpush1.msra.mxu0 0.0
    %4247 = vmatprep.subr.mxu0 0.0
    %4248 = vmatpush1.msra.mxu0 0.0
    %4249 = vmatprep.subr.mxu0 0.0
    %4250 = vmatpush1.msra.mxu0 0.0
    %4251 = vmatprep.subr.mxu0 0.0
    %4252 = vmatpush1.msra.mxu0 0.0
    %4253 = vmatprep.subr.mxu0 0.0
    %4254 = vmatpush1.msra.mxu0 0.0
    %4255 = vmatprep.subr.mxu0 0.0
    %4256 = vmatpush1.msra.mxu0 %v4223
    %4257 = vmatprep.subr.mxu0 0.0
    %4258 = vmatpush2.msra.mxu0 0.0
    %4259 = vmatprep.subr.mxu0 0.0
    %4260 = vmatpush2.msra.mxu0 0.0
    %4261 = vmatprep.subr.mxu0 0.0
    %4262 = vmatpush2.msra.mxu0 0.0
    %4263 = vmatprep.subr.mxu0 0.0
    %4264 = vmatpush2.msra.mxu0 0.0
    %4265 = vmatprep.subr.mxu0 0.0
    %4266 = vmatpush2.msra.mxu0 0.0
    %4267 = vmatprep.subr.mxu0 0.0
    %4268 = vmatpush2.msra.mxu0 0.0
    %4269 = vmatprep.subr.mxu0 0.0
    %4270 = vmatpush2.msra.mxu0 0.0
    %4271 = vmatprep.subr.mxu0 0.0
    %4272 = vmatpush2.msra.mxu0 0.0
    %4273 = vmatprep.subr.mxu0 0.0
    %4274 = vmatpush2.msra.mxu0 0.0
    %4275 = vmatprep.subr.mxu0 0.0
    %4276 = vmatpush2.msra.mxu0 0.0
    %4277 = vmatprep.subr.mxu0 0.0
    %4278 = vmatpush2.msra.mxu0 0.0
    %4279 = vmatprep.subr.mxu0 0.0
    %4280 = vmatpush2.msra.mxu0 0.0
    %4281 = vmatprep.subr.mxu0 0.0
    %4282 = vmatpush2.msra.mxu0 0.0
    %4283 = vmatprep.subr.mxu0 0.0
    %4284 = vmatpush2.msra.mxu0 0.0
    %4285 = vmatprep.subr.mxu0 0.0
    %4286 = vmatpush2.msra.mxu0 0.0
    %4287 = vmatprep.subr.mxu0 0.0
    %4288 = vmatpush2.msra.mxu0 0.0
    %4289 = vmatprep.mubr.f32.mxu0 0.0
    %4290 = vmatmul.mubr.f32.gmra.mxu0 %v4219
    %v4291 = vpop.f32.mrf.mxu0
    %v4292 = vadd.f32 0.0, %v4291
    %v4293 = vpop.f32.mrf.mxu0
    %4294 = vdwg.mxu0
    %v4295 = vcombine.low %v4160, %v4200
    %v4297 = vunpack.c.l.s4 1966171168
    %v4298 = vunpack.c.0.s8 %v4297
    %v4299 = vlaneseq
    %v4300 = vshrl.u32 %v4299, 7
    %v4301 = vsub.s32 %v4298, %v4300
    %v4302 = vrot.slane %v4295, %v4301
    %v4304 = vunpack.c.l.s4 1966171168
    %v4305 = vunpack.c.0.s8 %v4304
    %v4306 = vlaneseq
    %v4307 = vshrl.u32 %v4306, 7
    %v4308 = vsub.s32 %v4305, %v4307
    %v4309 = vrot.slane %v4302, %v4308
    %v4310 = vsel %vm144, %v4309, 0
    %4312 = vmatprep.subr.mxu0 0.0
    %4313 = vmatpush1.msra.mxu0 0.0
    %4314 = vmatprep.subr.mxu0 0.0
    %4315 = vmatpush1.msra.mxu0 0.0
    %4316 = vmatprep.subr.mxu0 0.0
    %4317 = vmatpush1.msra.mxu0 0.0
    %4318 = vmatprep.subr.mxu0 0.0
    %4319 = vmatpush1.msra.mxu0 0.0
    %4320 = vmatprep.subr.mxu0 0.0
    %4321 = vmatpush1.msra.mxu0 0.0
    %4322 = vmatprep.subr.mxu0 0.0
    %4323 = vmatpush1.msra.mxu0 0.0
    %4324 = vmatprep.subr.mxu0 0.0
    %4325 = vmatpush1.msra.mxu0 0.0
    %4326 = vmatprep.subr.mxu0 0.0
    %4327 = vmatpush1.msra.mxu0 0.0
    %4328 = vmatprep.subr.mxu0 0.0
    %4329 = vmatpush1.msra.mxu0 0.0
    %4330 = vmatprep.subr.mxu0 0.0
    %4331 = vmatpush1.msra.mxu0 0.0
    %4332 = vmatprep.subr.mxu0 0.0
    %4333 = vmatpush1.msra.mxu0 0.0
    %4334 = vmatprep.subr.mxu0 0.0
    %4335 = vmatpush1.msra.mxu0 0.0
    %4336 = vmatprep.subr.mxu0 0.0
    %4337 = vmatpush1.msra.mxu0 %v4211
    %4338 = vmatprep.subr.mxu0 0.0
    %4339 = vmatpush1.msra.mxu0 %v4210
    %4340 = vmatprep.subr.mxu0 0.0
    %4341 = vmatpush1.msra.mxu0 %v4209
    %4342 = vmatprep.subr.mxu0 0.0
    %4343 = vmatpush1.msra.mxu0 %v4208
    %4344 = vmatprep.subr.mxu0 0.0
    %4345 = vmatpush2.msra.mxu0 0.0
    %4346 = vmatprep.subr.mxu0 0.0
    %4347 = vmatpush2.msra.mxu0 0.0
    %4348 = vmatprep.subr.mxu0 0.0
    %4349 = vmatpush2.msra.mxu0 0.0
    %4350 = vmatprep.subr.mxu0 0.0
    %4351 = vmatpush2.msra.mxu0 0.0
    %4352 = vmatprep.subr.mxu0 0.0
    %4353 = vmatpush2.msra.mxu0 0.0
    %4354 = vmatprep.subr.mxu0 0.0
    %4355 = vmatpush2.msra.mxu0 0.0
    %4356 = vmatprep.subr.mxu0 0.0
    %4357 = vmatpush2.msra.mxu0 0.0
    %4358 = vmatprep.subr.mxu0 0.0
    %4359 = vmatpush2.msra.mxu0 0.0
    %4360 = vmatprep.subr.mxu0 0.0
    %4361 = vmatpush2.msra.mxu0 0.0
    %4362 = vmatprep.subr.mxu0 0.0
    %4363 = vmatpush2.msra.mxu0 0.0
    %4364 = vmatprep.subr.mxu0 0.0
    %4365 = vmatpush2.msra.mxu0 0.0
    %4366 = vmatprep.subr.mxu0 0.0
    %4367 = vmatpush2.msra.mxu0 0.0
    %4368 = vmatprep.subr.mxu0 0.0
    %4369 = vmatpush2.msra.mxu0 0.0
    %4370 = vmatprep.subr.mxu0 0.0
    %4371 = vmatpush2.msra.mxu0 0.0
    %4372 = vmatprep.subr.mxu0 0.0
    %4373 = vmatpush2.msra.mxu0 0.0
    %4374 = vmatprep.subr.mxu0 0.0
    %4375 = vmatpush2.msra.mxu0 0.0
    %4376 = vmatprep.mubr.f32.mxu0 0.0
    %4377 = vmatmul.mubr.f32.gmra.mxu0 %v4310
    %v4378 = vpop.f32.mrf.mxu0
    %v4379 = vadd.f32 %v4292, %v4378
    %v4380 = vpop.f32.mrf.mxu0
    %4381 = vdwg.mxu0
    %v4382 = vlaneseq
    %v4383 = vshrl.u32 %v4382, 7
    %v4384 = vsub.s32 0, %v4383
    %v4385 = vrot.slane %v4213, %v4384
    %v4386 = vadd.f32 %v4379, %v4385
    %v4387 = vmax.f32 %v4386, 0.0
    %v4388 = vlaneseq
    %v4389 = vshrl.u32 %v4388, 7
    %v4390 = vsub.s32 0, %v4389
    %v4391 = vrot.slane %v4216, %v4390
    %vm4392 = vcmask 130048
    %v4394 = vsel %vm4392, %v4387, 0
    %4396 = vmatprep.subr.mxu0 0.0
    %4397 = vmatpush1.msra.mxu0 0.0
    %4398 = vmatprep.subr.mxu0 0.0
    %4399 = vmatpush1.msra.mxu0 0.0
    %4400 = vmatprep.subr.mxu0 0.0
    %4401 = vmatpush1.msra.mxu0 0.0
    %4402 = vmatprep.subr.mxu0 0.0
    %4403 = vmatpush1.msra.mxu0 0.0
    %4404 = vmatprep.subr.mxu0 0.0
    %4405 = vmatpush1.msra.mxu0 0.0
    %4406 = vmatprep.subr.mxu0 0.0
    %4407 = vmatpush1.msra.mxu0 0.0
    %4408 = vmatprep.subr.mxu0 0.0
    %4409 = vmatpush1.msra.mxu0 0.0
    %4410 = vmatprep.subr.mxu0 0.0
    %4411 = vmatpush1.msra.mxu0 0.0
    %4412 = vmatprep.subr.mxu0 0.0
    %4413 = vmatpush1.msra.mxu0 0.0
    %4414 = vmatprep.subr.mxu0 0.0
    %4415 = vmatpush1.msra.mxu0 0.0
    %4416 = vmatprep.subr.mxu0 0.0
    %4417 = vmatpush1.msra.mxu0 0.0
    %4418 = vmatprep.subr.mxu0 0.0
    %4419 = vmatpush1.msra.mxu0 0.0
    %4420 = vmatprep.subr.mxu0 0.0
    %4421 = vmatpush1.msra.mxu0 0.0
    %4422 = vmatprep.subr.mxu0 0.0
    %4423 = vmatpush1.msra.mxu0 0.0
    %4424 = vmatprep.subr.mxu0 0.0
    %4425 = vmatpush1.msra.mxu0 %v4215
    %4426 = vmatprep.subr.mxu0 0.0
    %4427 = vmatpush1.msra.mxu0 %v4214
    %4428 = vmatprep.subr.mxu0 0.0
    %4429 = vmatpush2.msra.mxu0 0.0
    %4430 = vmatprep.subr.mxu0 0.0
    %4431 = vmatpush2.msra.mxu0 0.0
    %4432 = vmatprep.subr.mxu0 0.0
    %4433 = vmatpush2.msra.mxu0 0.0
    %4434 = vmatprep.subr.mxu0 0.0
    %4435 = vmatpush2.msra.mxu0 0.0
    %4436 = vmatprep.subr.mxu0 0.0
    %4437 = vmatpush2.msra.mxu0 0.0
    %4438 = vmatprep.subr.mxu0 0.0
    %4439 = vmatpush2.msra.mxu0 0.0
    %4440 = vmatprep.subr.mxu0 0.0
    %4441 = vmatpush2.msra.mxu0 0.0
    %4442 = vmatprep.subr.mxu0 0.0
    %4443 = vmatpush2.msra.mxu0 0.0
    %4444 = vmatprep.subr.mxu0 0.0
    %4445 = vmatpush2.msra.mxu0 0.0
    %4446 = vmatprep.subr.mxu0 0.0
    %4447 = vmatpush2.msra.mxu0 0.0
    %4448 = vmatprep.subr.mxu0 0.0
    %4449 = vmatpush2.msra.mxu0 0.0
    %4450 = vmatprep.subr.mxu0 0.0
    %4451 = vmatpush2.msra.mxu0 0.0
    %4452 = vmatprep.subr.mxu0 0.0
    %4453 = vmatpush2.msra.mxu0 0.0
    %4454 = vmatprep.subr.mxu0 0.0
    %4455 = vmatpush2.msra.mxu0 0.0
    %4456 = vmatprep.subr.mxu0 0.0
    %4457 = vmatpush2.msra.mxu0 0.0
    %4458 = vmatprep.subr.mxu0 0.0
    %4459 = vmatpush2.msra.mxu0 0.0
    %4460 = vmatprep.mubr.f32.mxu0 0.0
    %4461 = vmatmul.mubr.f32.gmra.mxu0 %v4394
    %v4462 = vpop.f32.mrf.mxu0
    %v4463 = vadd.f32 %v4391, %v4462
    %v4464 = vpop.f32.mrf.mxu0
    %4465 = vdwg.mxu0
    %v4466 = vmax.f32 %v18, 1e-30
    %v4467 = vlog2.pop %v4466
    %v4468 = vmul.f32 %v4467, 0.6931472
    %v4469 = vsub.f32 0.0, %v4468
    %4471 = vrot.lane.b32.xlu0 %v4469, 124
    %v4472 = vpop.permute.xlu0 %4471
    %v4474 = vadd.f32 %v4463, %v4472
    %vm4475 = vcmask 25600
    %v4476 = vsel %vm4475, %v4474, -inf
    %4477 = vmax.xlane.f32.xlu0 %v4476
    %v4478 = vpop.xlane.xlu0 %4477
    %v4479 = vsub.f32 %v4474, %v4478
    %v4480 = vmul.f32 %v4479, 1.442695
    %v4481 = vpow.pop %v4480
    %v4482 = vsel %vm4475, %v4481, 0.0
    %4483 = vadd.xlane.f32.xlu0 %v4482
    %v4484 = vpop.xlane.xlu0 %4483
    %v4485 = vrcp.pop %v4484
    %v4486 = vmul.f32 %v4481, %v4485
    %v4487 = vlaneseq
    %v4488 = vand.u32 %v4487, 127
    %v4489 = vsel %vm4475, %v4486, -inf
    %4490 = vmax.xlane.f32.xlu0 %v4489
    %v4491 = vpop.xlane.xlu0 %4490
    %vm4492 = vcmp.ge.f32.partialorder %v4486, %v4491
    %v4493 = vsel %vm4492, %v4488, 4
    %v4494 = vsel %vm4475, %v4493, 2147483647
    %v4495 = vand.u32 %v4494, 65535
    %v4496 = vshra.s32 %v4494, 16
    %v4497 = vcvt.s32.f32 %v4495
    %v4498 = vcvt.s32.f32 %v4496
    %4499 = vmin.xlane.f32.xlu0 %v4498
    %v4500 = vpop.xlane.xlu0 %4499
    %vm4501 = vcmp.eq.f32.partialorder %v4498, %v4500
    %v4502 = vsel %vm4501, %v4497, inf
    %4503 = vmin.xlane.f32.xlu0 %v4502
    %v4504 = vpop.xlane.xlu0 %4503
    %v4505 = vcvt.f32.s32 %v4504
    %v4506 = vcvt.f32.s32 %v4500
    %v4507 = vshll.u32 %v4506, 16
    %v4508 = vadd.s32 %v4507, %v4505
    %vm4509 = vcmp.eq.s32.totalorder %v4488, %v4508
    %v4510 = vsel %vm4509, 1, 0
    %v4511 = vcvt.s32.f32 %v4510
    %v4512 = vld [vmem:[%s3 + $0x1f0] sm:$0xff]
    %v4513 = vld [vmem:[%s3 + $0x1f8] sm:$0xff]
    %v4514 = vld [vmem:[%s3 + $0x200] sm:$0xff]
    %v4515 = vld [vmem:[%s3 + $0x208] sm:$0xff]
    %v4516 = vld [vmem:[%s3 + $0x210] sm:$0xf]
    %v4517 = vld [vmem:[%s3 + $0x214] sm:$0x1]
    %v4519 = vsel %vm4217, %v4486, 0
    %v4522 = vsel %vm4221, %v4516, 0
    %4524 = vmatprep.subr.mxu0 0.0
    %4525 = vmatpush1.msra.mxu0 0.0
    %4526 = vmatprep.subr.mxu0 0.0
    %4527 = vmatpush1.msra.mxu0 0.0
    %4528 = vmatprep.subr.mxu0 0.0
    %4529 = vmatpush1.msra.mxu0 0.0
    %4530 = vmatprep.subr.mxu0 0.0
    %4531 = vmatpush1.msra.mxu0 0.0
    %4532 = vmatprep.subr.mxu0 0.0
    %4533 = vmatpush1.msra.mxu0 0.0
    %4534 = vmatprep.subr.mxu0 0.0
    %4535 = vmatpush1.msra.mxu0 0.0
    %4536 = vmatprep.subr.mxu0 0.0
    %4537 = vmatpush1.msra.mxu0 0.0
    %4538 = vmatprep.subr.mxu0 0.0
    %4539 = vmatpush1.msra.mxu0 0.0
    %4540 = vmatprep.subr.mxu0 0.0
    %4541 = vmatpush1.msra.mxu0 0.0
    %4542 = vmatprep.subr.mxu0 0.0
    %4543 = vmatpush1.msra.mxu0 0.0
    %4544 = vmatprep.subr.mxu0 0.0
    %4545 = vmatpush1.msra.mxu0 0.0
    %4546 = vmatprep.subr.mxu0 0.0
    %4547 = vmatpush1.msra.mxu0 0.0
    %4548 = vmatprep.subr.mxu0 0.0
    %4549 = vmatpush1.msra.mxu0 0.0
    %4550 = vmatprep.subr.mxu0 0.0
    %4551 = vmatpush1.msra.mxu0 0.0
    %4552 = vmatprep.subr.mxu0 0.0
    %4553 = vmatpush1.msra.mxu0 0.0
    %4554 = vmatprep.subr.mxu0 0.0
    %4555 = vmatpush1.msra.mxu0 %v4522
    %4556 = vmatprep.subr.mxu0 0.0
    %4557 = vmatpush2.msra.mxu0 0.0
    %4558 = vmatprep.subr.mxu0 0.0
    %4559 = vmatpush2.msra.mxu0 0.0
    %4560 = vmatprep.subr.mxu0 0.0
    %4561 = vmatpush2.msra.mxu0 0.0
    %4562 = vmatprep.subr.mxu0 0.0
    %4563 = vmatpush2.msra.mxu0 0.0
    %4564 = vmatprep.subr.mxu0 0.0
    %4565 = vmatpush2.msra.mxu0 0.0
    %4566 = vmatprep.subr.mxu0 0.0
    %4567 = vmatpush2.msra.mxu0 0.0
    %4568 = vmatprep.subr.mxu0 0.0
    %4569 = vmatpush2.msra.mxu0 0.0
    %4570 = vmatprep.subr.mxu0 0.0
    %4571 = vmatpush2.msra.mxu0 0.0
    %4572 = vmatprep.subr.mxu0 0.0
    %4573 = vmatpush2.msra.mxu0 0.0
    %4574 = vmatprep.subr.mxu0 0.0
    %4575 = vmatpush2.msra.mxu0 0.0
    %4576 = vmatprep.subr.mxu0 0.0
    %4577 = vmatpush2.msra.mxu0 0.0
    %4578 = vmatprep.subr.mxu0 0.0
    %4579 = vmatpush2.msra.mxu0 0.0
    %4580 = vmatprep.subr.mxu0 0.0
    %4581 = vmatpush2.msra.mxu0 0.0
    %4582 = vmatprep.subr.mxu0 0.0
    %4583 = vmatpush2.msra.mxu0 0.0
    %4584 = vmatprep.subr.mxu0 0.0
    %4585 = vmatpush2.msra.mxu0 0.0
    %4586 = vmatprep.subr.mxu0 0.0
    %4587 = vmatpush2.msra.mxu0 0.0
    %4588 = vmatprep.mubr.f32.mxu0 0.0
    %4589 = vmatmul.mubr.f32.gmra.mxu0 %v4519
    %v4590 = vpop.f32.mrf.mxu0
    %v4591 = vadd.f32 0.0, %v4590
    %v4592 = vpop.f32.mrf.mxu0
    %4593 = vdwg.mxu0
    %v4594 = vcombine.low %v4137, %v4162
    %v4596 = vunpack.c.l.s4 1966171168
    %v4597 = vunpack.c.0.s8 %v4596
    %v4598 = vlaneseq
    %v4599 = vshrl.u32 %v4598, 7
    %v4600 = vsub.s32 %v4597, %v4599
    %v4601 = vrot.slane %v4594, %v4600
    %v4603 = vunpack.c.l.s4 1966171168
    %v4604 = vunpack.c.0.s8 %v4603
    %v4605 = vlaneseq
    %v4606 = vshrl.u32 %v4605, 7
    %v4607 = vsub.s32 %v4604, %v4606
    %v4608 = vrot.slane %v4601, %v4607
    %v4609 = vsel %vm144, %v4608, 0
    %4611 = vmatprep.subr.mxu0 0.0
    %4612 = vmatpush1.msra.mxu0 0.0
    %4613 = vmatprep.subr.mxu0 0.0
    %4614 = vmatpush1.msra.mxu0 0.0
    %4615 = vmatprep.subr.mxu0 0.0
    %4616 = vmatpush1.msra.mxu0 0.0
    %4617 = vmatprep.subr.mxu0 0.0
    %4618 = vmatpush1.msra.mxu0 0.0
    %4619 = vmatprep.subr.mxu0 0.0
    %4620 = vmatpush1.msra.mxu0 0.0
    %4621 = vmatprep.subr.mxu0 0.0
    %4622 = vmatpush1.msra.mxu0 0.0
    %4623 = vmatprep.subr.mxu0 0.0
    %4624 = vmatpush1.msra.mxu0 0.0
    %4625 = vmatprep.subr.mxu0 0.0
    %4626 = vmatpush1.msra.mxu0 0.0
    %4627 = vmatprep.subr.mxu0 0.0
    %4628 = vmatpush1.msra.mxu0 0.0
    %4629 = vmatprep.subr.mxu0 0.0
    %4630 = vmatpush1.msra.mxu0 0.0
    %4631 = vmatprep.subr.mxu0 0.0
    %4632 = vmatpush1.msra.mxu0 0.0
    %4633 = vmatprep.subr.mxu0 0.0
    %4634 = vmatpush1.msra.mxu0 0.0
    %4635 = vmatprep.subr.mxu0 0.0
    %4636 = vmatpush1.msra.mxu0 %v4515
    %4637 = vmatprep.subr.mxu0 0.0
    %4638 = vmatpush1.msra.mxu0 %v4514
    %4639 = vmatprep.subr.mxu0 0.0
    %4640 = vmatpush1.msra.mxu0 %v4513
    %4641 = vmatprep.subr.mxu0 0.0
    %4642 = vmatpush1.msra.mxu0 %v4512
    %4643 = vmatprep.subr.mxu0 0.0
    %4644 = vmatpush2.msra.mxu0 0.0
    %4645 = vmatprep.subr.mxu0 0.0
    %4646 = vmatpush2.msra.mxu0 0.0
    %4647 = vmatprep.subr.mxu0 0.0
    %4648 = vmatpush2.msra.mxu0 0.0
    %4649 = vmatprep.subr.mxu0 0.0
    %4650 = vmatpush2.msra.mxu0 0.0
    %4651 = vmatprep.subr.mxu0 0.0
    %4652 = vmatpush2.msra.mxu0 0.0
    %4653 = vmatprep.subr.mxu0 0.0
    %4654 = vmatpush2.msra.mxu0 0.0
    %4655 = vmatprep.subr.mxu0 0.0
    %4656 = vmatpush2.msra.mxu0 0.0
    %4657 = vmatprep.subr.mxu0 0.0
    %4658 = vmatpush2.msra.mxu0 0.0
    %4659 = vmatprep.subr.mxu0 0.0
    %4660 = vmatpush2.msra.mxu0 0.0
    %4661 = vmatprep.subr.mxu0 0.0
    %4662 = vmatpush2.msra.mxu0 0.0
    %4663 = vmatprep.subr.mxu0 0.0
    %4664 = vmatpush2.msra.mxu0 0.0
    %4665 = vmatprep.subr.mxu0 0.0
    %4666 = vmatpush2.msra.mxu0 0.0
    %4667 = vmatprep.subr.mxu0 0.0
    %4668 = vmatpush2.msra.mxu0 0.0
    %4669 = vmatprep.subr.mxu0 0.0
    %4670 = vmatpush2.msra.mxu0 0.0
    %4671 = vmatprep.subr.mxu0 0.0
    %4672 = vmatpush2.msra.mxu0 0.0
    %4673 = vmatprep.subr.mxu0 0.0
    %4674 = vmatpush2.msra.mxu0 0.0
    %4675 = vmatprep.mubr.f32.mxu0 0.0
    %4676 = vmatmul.mubr.f32.gmra.mxu0 %v4609
    %v4677 = vpop.f32.mrf.mxu0
    %v4678 = vadd.f32 %v4591, %v4677
    %v4679 = vpop.f32.mrf.mxu0
    %4680 = vdwg.mxu0
    %v4681 = vlaneseq
    %v4682 = vshrl.u32 %v4681, 7
    %v4683 = vsub.s32 0, %v4682
    %v4684 = vrot.slane %v4517, %v4683
    %v4685 = vadd.f32 %v4678, %v4684
    %v4686 = vld [vmem:[%s3 + $0x215] sm:$0x1]
    %v4687 = vld [vmem:[%s3 + $0x216] sm:$0x1]
    %v4688 = vld [vmem:[%s3 + $0x217] sm:$0x1]
    %v4689 = vlaneseq
    %v4690 = vshrl.u32 %v4689, 7
    %v4691 = vsub.s32 0, %v4690
    %v4692 = vrot.slane %v4686, %v4691
    %v4695 = vunpack.c.l.s4 1966171168
    %v4696 = vunpack.c.0.s8 %v4695
    %v4697 = vlaneseq
    %v4698 = vshrl.u32 %v4697, 7
    %v4699 = vsub.s32 %v4696, %v4698
    %v4700 = vrot.slane %v4692, %v4699
    %v4701 = vcombine.high %v4700, %v4700
    %v4703 = vunpack.c.l.s4 1966171168
    %v4704 = vunpack.c.0.s8 %v4703
    %v4705 = vlaneseq
    %v4706 = vshrl.u32 %v4705, 7
    %v4707 = vsub.s32 %v4704, %v4706
    %v4708 = vrot.slane %v4700, %v4707
    %v4710 = vunpack.c.l.s4 1966171168
    %v4711 = vunpack.c.0.s8 %v4710
    %v4712 = vlaneseq
    %v4713 = vshrl.u32 %v4712, 7
    %v4714 = vsub.s32 %v4711, %v4713
    %v4715 = vrot.slane %v4701, %v4714
    %v4716 = vcombine.high %v4708, %v4708
    %v4720 = vmul.f32 %v4151, %v4708
    %v4721 = vmul.f32 %v4159, %v4715
    %v4722 = vmul.f32 %v4161, %v4716
    %v4723 = vmul.f32 %v4186, %v4708
    %v4724 = vmul.f32 %v4193, %v4715
    %v4725 = vmul.f32 %v4201, %v4716
    %v4732 = vcombine.low %v4720, %v4721
    %v4734 = vunpack.c.l.s4 1966171168
    %v4735 = vunpack.c.0.s8 %v4734
    %v4736 = vlaneseq
    %v4737 = vshrl.u32 %v4736, 7
    %v4738 = vsub.s32 %v4735, %v4737
    %v4739 = vrot.slane %v4732, %v4738
    %v4741 = vunpack.c.l.s4 1966171168
    %v4742 = vunpack.c.0.s8 %v4741
    %v4743 = vlaneseq
    %v4744 = vshrl.u32 %v4743, 7
    %v4745 = vsub.s32 %v4742, %v4744
    %v4746 = vrot.slane %v4722, %v4745
    %v4747 = vcombine.low %v4739, %v4746
    %v4749 = vunpack.c.l.s4 1966171168
    %v4750 = vunpack.c.0.s8 %v4749
    %v4751 = vlaneseq
    %v4752 = vshrl.u32 %v4751, 7
    %v4753 = vsub.s32 %v4750, %v4752
    %v4754 = vrot.slane %v4747, %v4753
    %v4755 = vcombine.low %v4723, %v4724
    %v4757 = vunpack.c.l.s4 1966171168
    %v4758 = vunpack.c.0.s8 %v4757
    %v4759 = vlaneseq
    %v4760 = vshrl.u32 %v4759, 7
    %v4761 = vsub.s32 %v4758, %v4760
    %v4762 = vrot.slane %v4755, %v4761
    %v4764 = vunpack.c.l.s4 1966171168
    %v4765 = vunpack.c.0.s8 %v4764
    %v4766 = vlaneseq
    %v4767 = vshrl.u32 %v4766, 7
    %v4768 = vsub.s32 %v4765, %v4767
    %v4769 = vrot.slane %v4725, %v4768
    %v4770 = vcombine.low %v4762, %v4769
    %v4772 = vunpack.c.l.s4 1966171168
    %v4773 = vunpack.c.0.s8 %v4772
    %v4774 = vlaneseq
    %v4775 = vshrl.u32 %v4774, 7
    %v4776 = vsub.s32 %v4773, %v4775
    %v4777 = vrot.slane %v4770, %v4776
    %vm4780 = vcmask 256000
    %v4781 = vsel %vm4780, %v4754, 0.0
    %4782 = vadd.xlane.f32.xlu0 %v4781
    %v4783 = vpop.xlane.xlu0 %4782
    %v4784 = vsel %vm4780, %v4777, 0.0
    %4785 = vadd.xlane.f32.xlu0 %v4784
    %v4786 = vpop.xlane.xlu0 %4785
    %v4787 = vlaneseq
    %v4788 = vshrl.u32 %v4787, 7
    %v4789 = vsub.s32 0, %v4788
    %v4790 = vrot.slane %v4687, %v4789
    %v4791 = vmul.f32 %v4486, %v4790
    %v4792 = vsel %vm4475, %v4791, 0.0
    %4793 = vadd.xlane.f32.xlu0 %v4792
    %v4794 = vpop.xlane.xlu0 %4793
    %v4796 = vlaneseq
    %v4797 = vshrl.u32 %v4796, 7
    %v4798 = vsub.s32 0, %v4797
    %v4799 = vrot.slane %v4794, %v4798
    %v4800 = vlaneseq
    %v4801 = vshrl.u32 %v4800, 7
    %v4802 = vsub.s32 1, %v4801
    %v4803 = vrot.slane %v4794, %v4802
    %v4806 = vadd.f32 %v4783, %v4799
    %v4807 = vadd.f32 %v4786, %v4803
    %s4809 = vtos %v4688
    %v4810 = vstv %s4809
    %v4812 = vadd.f32 %v4806, %v4810
    %v4813 = vadd.f32 %v4807, %v4810
    %4816 = vset.pattern.permute.xlu0 0
    %4817 = vperm.xlu0 %4816, %v4812
    %v4818 = vpop.permute.xlu0 %4817
    %4819 = vset.pattern.permute.xlu0 0
    %4820 = vperm.xlu0 %4819, %v4813
    %v4821 = vpop.permute.xlu0 %4820
    %v4822 = vadd.s32 %v4488, 4294967290
    %v4823 = vlaneseq
    %v4824 = vshrl.u32 %v4823, 7
    %v4825 = vsub.s32 %v4822, %v4824
    %v4826 = vrot.slane %v4818, %v4825
    %v4827 = vlaneseq
    %v4828 = vshrl.u32 %v4827, 7
    %v4829 = vsub.s32 %v4822, %v4828
    %v4830 = vrot.slane %v4821, %v4829
    %vm4831 = vcmask 1041409
    %v4832 = vsel %vm4831, %v4830, %v4826
    %vm4834 = vcmask 48128
    %v4835 = vsel %vm4834, %v4685, %v4832
    %4838 = vrot.lane.b32.xlu0 %v4835, 32
    %v4839 = vpop.permute.xlu0 %4838
    %4841 = vrot.lane.b32.xlu0 %v4486, 41
    %v4842 = vpop.permute.xlu0 %4841
    %4845 = vrot.lane.b32.xlu0 %v4511, 45
    %v4846 = vpop.permute.xlu0 %4845
    %v4848 = vsel %vm144, %v4309, %v4839
    %vm4849 = vcmask 334848
    %v4850 = vsel %vm4849, %v4848, %v4842
    %vm4851 = vcmask 367616
    %v4852 = vsel %vm4851, %v4850, %v4846
    %v4853 = vsel %vm28, %v4852, 0.0
    %4854 = vst [vmem:[#allocation2] sm:$0x3] %v4853
    // Predicated region
    $region18: #{tpu_custom_call.1} parent=1 // pred_check
      _
    $region19: #{tpu_custom_call.1} parent=1 // pred_check_branch
      %4856 = sbr.rel (0) target = $region21
    $region20: #{tpu_custom_call.1} parent=1 // pred_region
      %s4858 = ssub.s32 32, 32
      %4859 = vsyncadd [#allocation3], %s4858
      %s4861 = sshll.u32 [#allocation2], 4
      %s4862 = int_to_ptr.vmem [resolvable:$true] %s4861
      %4864 = dma.vmem_to_hbm [thread:$0]  %s4862, 32, %s4, [#allocation3]
    $region21: #{tpu_custom_call.1} parent=1 // pred_fallthru
      _
    // Predicated region
    $region22: #{tpu_custom_call.1} parent=1 // pred_check
      _
    $region23: #{tpu_custom_call.1} parent=1 // pred_check_branch
      %4866 = sbr.rel (0) target = $region25
    $region24: #{tpu_custom_call.1} parent=1 // pred_region
      %4867 = dma.done [#allocation3], 32
    $region25: #{tpu_custom_call.1} parent=1 // pred_fallthru
      _
    %4868 = vsyncpa [#allocation3], 1

</llo_original>
